<compile_context>
chip_gen: v7x
topology: tpu7x:2x2x1
jax: 0.10.0
libtpu: 0.0.40
codegen_flags: <defaults>
</compile_context>

<pallas_src>
import math

import jax
import jax.numpy as jnp
from jax.experimental import pallas as pl
from jax.experimental.pallas import tpu as pltpu


# ---------------------------------------------------------------------------
# DFT matrices for GlobalFilter (host-side glue; depends only on spatial size a, b)
# ---------------------------------------------------------------------------
def make_filter_matrices(a, b):
    """Real matrices implementing rfft2/irfft2 (norm='ortho') on flattened tokens.

    Forward:  Spec_flat = F2r @ x_flat + i * (F2i @ x_flat),  spectral row = p*wf + k
    Inverse:  y_flat    = Gr  @ Zr     +       Gi  @ Zi
    where x_flat, y_flat are (a*b, C) (token row = m*b + j), Z is the (a*wf, C) spectrum.
    """
    wf = b // 2 + 1
    two_pi = 2.0 * math.pi
    m = jnp.arange(a, dtype=jnp.float32)
    p = jnp.arange(a, dtype=jnp.float32)
    j = jnp.arange(b, dtype=jnp.float32)
    k = jnp.arange(wf, dtype=jnp.float32)

    # forward rfft2 (ortho): Spec[p,k] = 1/sqrt(ab) sum_{m,j} x[m,j] exp(-2pi i (mp/a + jk/b))
    pa = two_pi * jnp.outer(p, m) / a          # (a, a)
    kb = two_pi * jnp.outer(k, j) / b          # (wf, b)
    sf = 1.0 / math.sqrt(a * b)
    F2r = (jnp.kron(jnp.cos(pa), jnp.cos(kb)) - jnp.kron(jnp.sin(pa), jnp.sin(kb))) * sf
    F2i = -(jnp.kron(jnp.sin(pa), jnp.cos(kb)) + jnp.kron(jnp.cos(pa), jnp.sin(kb))) * sf

    # inverse irfft2 (ortho): c2c ifft along a, then c2r along b.
    # c2r ignores the imaginary part of bin 0 and (for even b) bin b/2.
    mp = two_pi * jnp.outer(m, p) / a          # (a, a), rows m', cols p
    theta = two_pi * jnp.outer(k, j) / b       # (wf, b)
    alpha = jnp.full((wf,), 2.0, jnp.float32).at[0].set(1.0)
    beta = jnp.full((wf,), 2.0, jnp.float32).at[0].set(0.0)
    if b % 2 == 0:
        alpha = alpha.at[-1].set(1.0)
        beta = beta.at[-1].set(0.0)
    Rr = alpha[:, None] * jnp.cos(theta)       # (wf, b)
    Ri = -beta[:, None] * jnp.sin(theta)       # (wf, b)
    Ca, Sa = jnp.cos(mp), jnp.sin(mp)
    si = 1.0 / math.sqrt(a * b)
    Gr = (jnp.kron(Ca, Rr.T) + jnp.kron(Sa, Ri.T)) * si   # (a*b, a*wf)
    Gi = (jnp.kron(Ca, Ri.T) - jnp.kron(Sa, Rr.T)) * si   # (a*b, a*wf)
    return F2r, F2i, Gr, Gi


def pack_params(a, b_sp, dim, hidden, tb, complex_weight,
                ln1g, ln1b, ln2g, ln2b, fc1w, fc1b, fc2w, fc2b):
    """Host-side packing: fuse DFT matrices, tile per-channel params across the batch tile,
    build block-diagonal mean/MLP matrices, cast matmul operands to bf16."""
    wf = b_sp // 2 + 1
    F2r, F2i, Gr, Gi = make_filter_matrices(a, b_sp)
    f2 = jnp.concatenate([F2r, F2i], axis=0).astype(jnp.bfloat16)     # (2F, N)
    g = jnp.concatenate([Gr, Gi], axis=1).astype(jnp.bfloat16)        # (N, 2F)

    # complex weight, tiled across the batch tile (lane index = t*dim + c)
    wr = jnp.tile(complex_weight[..., 0].reshape(a * wf, dim), (1, tb))   # (F, tb*C) f32
    wi = jnp.tile(complex_weight[..., 1].reshape(a * wf, dim), (1, tb))

    # block-diagonal "group mean" matrix: (v @ smean) gives per-(token, batch) channel mean
    smean = jnp.kron(jnp.eye(tb, dtype=jnp.float32),
                     jnp.full((dim, dim), 1.0 / dim, jnp.float32))        # (tb*C, tb*C)

    g1 = jnp.tile(ln1g.reshape(1, dim), (1, tb))
    b1 = jnp.tile(ln1b.reshape(1, dim), (1, tb))
    g2 = jnp.tile(ln2g.reshape(1, dim), (1, tb))
    b2 = jnp.tile(ln2b.reshape(1, dim), (1, tb))

    # block-diagonal MLP weights so fc1/fc2 stay lane-dense in the packed layout
    fc1w_bd = jnp.kron(jnp.eye(tb, dtype=jnp.float32), fc1w).astype(jnp.bfloat16)  # (tb*C, tb*H)
    fc2w_bd = jnp.kron(jnp.eye(tb, dtype=jnp.float32), fc2w).astype(jnp.bfloat16)  # (tb*H, tb*C)
    fc1b_t = jnp.tile(fc1b.reshape(1, hidden), (1, tb))
    fc2b_t = jnp.tile(fc2b.reshape(1, dim), (1, tb))

    return (f2, g, wr, wi, smean, g1, b1, g2, b2, fc1w_bd, fc1b_t, fc2w_bd, fc2b_t)


# ---------------------------------------------------------------------------
# Pallas kernel: one lane-packed batch tile per grid step (everything fits in VMEM)
# ---------------------------------------------------------------------------
def block_kernel(x_ref, f2_ref, g_ref, wr_ref, wi_ref, smean_ref,
                 ln1g_ref, ln1b_ref, ln2g_ref, ln2b_ref,
                 fc1w_ref, fc1b_ref, fc2w_ref, fc2b_ref, out_ref):
    x = x_ref[0]                       # (N, TB*C) float32, lane-dense
    smean = smean_ref[...]             # (TB*C, TB*C) block-diagonal group-mean matrix

    def grouped_layernorm(v, gamma, beta):
        # per-(token, batch) LayerNorm over each C-lane group, via block-diag matmuls (MXU)
        mu = jnp.dot(v, smean, preferred_element_type=jnp.float32)
        d = v - mu
        var = jnp.dot(d * d, smean, preferred_element_type=jnp.float32)
        return d * jax.lax.rsqrt(var + 1e-5) * gamma + beta

    # ---- norm1 ----
    h = grouped_layernorm(x, ln1g_ref[...], ln1b_ref[...])

    # ---- GlobalFilter: fused rfft2 -> complex weight multiply -> fused irfft2 ----
    nfreq = wr_ref.shape[0]            # a * (b//2 + 1)
    spec = jnp.dot(f2_ref[...], h.astype(jnp.bfloat16),
                   preferred_element_type=jnp.float32)      # (2F, TB*C) = [sr; si]
    sr = spec[:nfreq]
    si = spec[nfreq:]
    wr = wr_ref[...]
    wi = wi_ref[...]
    zr = sr * wr - si * wi
    zi = sr * wi + si * wr
    z = jnp.concatenate([zr, zi], axis=0).astype(jnp.bfloat16)           # (2F, TB*C)
    filt = jnp.dot(g_ref[...], z, preferred_element_type=jnp.float32)    # (N, TB*C)

    # ---- norm2 ----
    h2 = grouped_layernorm(filt, ln2g_ref[...], ln2b_ref[...])

    # ---- MLP (block-diag weights keep batch on lanes): fc1 -> exact GELU -> fc2 ----
    hh = jnp.dot(h2.astype(jnp.bfloat16), fc1w_ref[...],
                 preferred_element_type=jnp.float32) + fc1b_ref[...]     # (N, TB*H)
    hh = 0.5 * hh * (1.0 + jax.lax.erf(hh * (1.0 / math.sqrt(2.0))))     # erf GELU (parity)
    mlp = jnp.dot(hh.astype(jnp.bfloat16), fc2w_ref[...],
                  preferred_element_type=jnp.float32) + fc2b_ref[...]    # (N, TB*C)

    # ---- residual ----  (lane-dense store: last dim = TB*C = multiple of 128)
    out_ref[0] = x + mlp


def gfnet_block(x, packed, tb):
    """x: (B, N, C) float32; tb batch elements are lane-packed per grid step."""
    B, N, C = x.shape
    assert B % tb == 0, "batch must be divisible by the batch tile"
    nb = B // tb
    lanes = tb * C

    # (B, N, C) -> (nb, N, tb*C): lane index = (batch-within-tile)*C + channel
    xp = x.reshape(nb, tb, N, C).transpose(0, 2, 1, 3).reshape(nb, N, lanes)
    args = (xp,) + tuple(packed)

    x_spec = pl.BlockSpec((1, N, lanes), lambda i: (i, 0, 0))
    param_specs = [pl.BlockSpec(p.shape, lambda i: (0, 0)) for p in packed]

    out = pl.pallas_call(
        block_kernel,
        out_shape=jax.ShapeDtypeStruct((nb, N, lanes), jnp.float32),
        grid=(nb,),
        in_specs=[x_spec] + param_specs,
        out_specs=pl.BlockSpec((1, N, lanes), lambda i: (i, 0, 0)),
        input_output_aliases={0: 0},   # residual output reuses the packed-x HBM buffer
        compiler_params=pltpu.CompilerParams(dimension_semantics=("parallel",)),
    )(*args)

    # back to (B, N, C)
    return out.reshape(nb, N, tb, C).transpose(0, 2, 1, 3).reshape(B, N, C)


# ---------------------------------------------------------------------------
# Pure-JAX f32 reference (uses real FFTs -> also validates the DFT-matrix formulation)
# ---------------------------------------------------------------------------
def reference_block(x, complex_weight, ln1g, ln1b, ln2g, ln2b,
                    fc1w, fc1b, fc2w, fc2b, a, b_sp):
    B, N, C = x.shape

    def ln(v, gamma, beta):
        mu = jnp.mean(v, axis=-1, keepdims=True)
        var = jnp.mean(jnp.square(v - mu), axis=-1, keepdims=True)
        return (v - mu) * jax.lax.rsqrt(var + 1e-5) * gamma + beta

    h = ln(x, ln1g, ln1b)
    spec = jnp.fft.rfft2(h.reshape(B, a, b_sp, C), axes=(1, 2), norm="ortho")
    w = complex_weight[..., 0] + 1j * complex_weight[..., 1]
    spec = spec * w
    filt = jnp.fft.irfft2(spec, s=(a, b_sp), axes=(1, 2), norm="ortho").reshape(B, N, C)
    h2 = ln(filt, ln2g, ln2b)
    hh = h2 @ fc1w + fc1b
    hh = 0.5 * hh * (1.0 + jax.lax.erf(hh / math.sqrt(2.0)))
    return x + (hh @ fc2w + fc2b)


if __name__ == "__main__":
    # Small shapes consistent with the module: dim=32, 8x8 spatial -> N=64 tokens,
    # GlobalFilter h=8, w=8//2+1=5, mlp hidden = 4*dim = 128.
    # TB=8 batch elements are lane-packed per grid step -> 256 lanes; grid = B/TB = 2.
    B, a, b_sp, dim = 16, 8, 8, 32
    TB = 8
    N = a * b_sp
    wf = b_sp // 2 + 1
    hidden = int(dim * 4.0)

    key = jax.random.PRNGKey(0)
    kx, kw, k1, k2, k3, k4 = jax.random.split(key, 6)

    x = jax.random.normal(kx, (B, N, dim), dtype=jnp.float32)

    # GlobalFilter complex weight: (h, w, dim, 2) ~ N(0, 0.02^2)
    complex_weight = jax.random.normal(kw, (a, wf, dim, 2), dtype=jnp.float32) * 0.02

    # LayerNorm params (torch default init: weight=1, bias=0)
    ln1g = jnp.ones((dim,), jnp.float32)
    ln1b = jnp.zeros((dim,), jnp.float32)
    ln2g = jnp.ones((dim,), jnp.float32)
    ln2b = jnp.zeros((dim,), jnp.float32)

    # MLP params (deterministic small random init)
    fc1w = jax.random.normal(k1, (dim, hidden), jnp.float32) * 0.02
    fc1b = jax.random.normal(k2, (hidden,), jnp.float32) * 0.02
    fc2w = jax.random.normal(k3, (hidden, dim), jnp.float32) * 0.02
    fc2b = jax.random.normal(k4, (dim,), jnp.float32) * 0.02

    packed = pack_params(a, b_sp, dim, hidden, TB, complex_weight,
                         ln1g, ln1b, ln2g, ln2b, fc1w, fc1b, fc2w, fc2b)

    out = jax.block_until_ready(gfnet_block(x, packed, TB))
    ref = jax.block_until_ready(
        reference_block(x, complex_weight, ln1g, ln1b, ln2g, ln2b,
                        fc1w, fc1b, fc2w, fc2b, a, b_sp))

    # bf16 matmul operands inside the kernel -> compare at 1e-2 (residual path is exact f32)
    if not jnp.allclose(out, ref, atol=1e-2, rtol=1e-2):
        err = float(jnp.max(jnp.abs(out - ref)))
        raise AssertionError(f"Pallas kernel output does not match reference (max abs err {err})")
    print("KERNEL_OK")
</pallas_src>

<mosaic_0001>
module attributes {stable_mosaic.version = 11 : i64} {
  func.func @block_kernel(%arg0: i32, %arg1: memref<1x64x256xf32, #tpu.memory_space<vmem>>, %arg2: memref<80x64xbf16, #tpu.memory_space<vmem>>, %arg3: memref<64x80xbf16, #tpu.memory_space<vmem>>, %arg4: memref<40x256xf32, #tpu.memory_space<vmem>>, %arg5: memref<40x256xf32, #tpu.memory_space<vmem>>, %arg6: memref<256x256xf32, #tpu.memory_space<vmem>>, %arg7: memref<1x256xf32, #tpu.memory_space<vmem>>, %arg8: memref<1x256xf32, #tpu.memory_space<vmem>>, %arg9: memref<1x256xf32, #tpu.memory_space<vmem>>, %arg10: memref<1x256xf32, #tpu.memory_space<vmem>>, %arg11: memref<256x1024xbf16, #tpu.memory_space<vmem>>, %arg12: memref<1x1024xf32, #tpu.memory_space<vmem>>, %arg13: memref<1024x256xbf16, #tpu.memory_space<vmem>>, %arg14: memref<1x256xf32, #tpu.memory_space<vmem>>, %arg15: memref<1x64x256xf32, #tpu.memory_space<vmem>>) attributes {dimension_semantics = [#tpu.dimension_semantics<parallel>], iteration_bounds = array<i64: 2>, scalar_prefetch = 0 : i64, scratch_operands = 0 : i64, tpu.core_type = #tpu.core_type<tc>, window_params = [{transform_indices = @transform_0, window_bounds = array<i64: 1, 64, 256>}, {pipeline_mode = #tpu.pipeline_mode<synchronous>, transform_indices = @transform_1, window_bounds = array<i64: 80, 64>}, {pipeline_mode = #tpu.pipeline_mode<synchronous>, transform_indices = @transform_2, window_bounds = array<i64: 64, 80>}, {pipeline_mode = #tpu.pipeline_mode<synchronous>, transform_indices = @transform_3, window_bounds = array<i64: 40, 256>}, {pipeline_mode = #tpu.pipeline_mode<synchronous>, transform_indices = @transform_4, window_bounds = array<i64: 40, 256>}, {pipeline_mode = #tpu.pipeline_mode<synchronous>, transform_indices = @transform_5, window_bounds = array<i64: 256, 256>}, {pipeline_mode = #tpu.pipeline_mode<synchronous>, transform_indices = @transform_6, window_bounds = array<i64: 1, 256>}, {pipeline_mode = #tpu.pipeline_mode<synchronous>, transform_indices = @transform_7, window_bounds = array<i64: 1, 256>}, {pipeline_mode = #tpu.pipeline_mode<synchronous>, transform_indices = @transform_8, window_bounds = array<i64: 1, 256>}, {pipeline_mode = #tpu.pipeline_mode<synchronous>, transform_indices = @transform_9, window_bounds = array<i64: 1, 256>}, {pipeline_mode = #tpu.pipeline_mode<synchronous>, transform_indices = @transform_10, window_bounds = array<i64: 256, 1024>}, {pipeline_mode = #tpu.pipeline_mode<synchronous>, transform_indices = @transform_11, window_bounds = array<i64: 1, 1024>}, {pipeline_mode = #tpu.pipeline_mode<synchronous>, transform_indices = @transform_12, window_bounds = array<i64: 1024, 256>}, {pipeline_mode = #tpu.pipeline_mode<synchronous>, transform_indices = @transform_13, window_bounds = array<i64: 1, 256>}, {transform_indices = @transform_14, window_bounds = array<i64: 1, 64, 256>}]} {
    %c0 = arith.constant 0 : index
    %c0_0 = arith.constant 0 : index
    %c0_1 = arith.constant 0 : index
    %0 = vector.load %arg1[%c0, %c0_0, %c0_1] : memref<1x64x256xf32, #tpu.memory_space<vmem>>, vector<1x64x256xf32>
    %1 = vector.shape_cast %0 : vector<1x64x256xf32> to vector<64x256xf32>
    %c0_2 = arith.constant 0 : index
    %c0_3 = arith.constant 0 : index
    %2 = vector.load %arg6[%c0_2, %c0_3] : memref<256x256xf32, #tpu.memory_space<vmem>>, vector<256x256xf32>
    %c0_4 = arith.constant 0 : index
    %c0_5 = arith.constant 0 : index
    %3 = vector.load %arg7[%c0_4, %c0_5] : memref<1x256xf32, #tpu.memory_space<vmem>>, vector<1x256xf32>
    %c0_6 = arith.constant 0 : index
    %c0_7 = arith.constant 0 : index
    %4 = vector.load %arg8[%c0_6, %c0_7] : memref<1x256xf32, #tpu.memory_space<vmem>>, vector<1x256xf32>
    %cst = arith.constant dense<0.000000e+00> : vector<64x256xf32>
    %5 = tpu.matmul %1, %2, %cst {dimension_numbers = #tpu.dot_dimension_numbers<[1], [0], [0], [1], [0, 0, 1, 1], [], []>} : vector<64x256xf32>, vector<256x256xf32>, vector<64x256xf32> -> vector<64x256xf32>
    %6 = arith.subf %1, %5 : vector<64x256xf32>
    %7 = arith.mulf %6, %6 : vector<64x256xf32>
    %cst_8 = arith.constant dense<0.000000e+00> : vector<64x256xf32>
    %8 = tpu.matmul %7, %2, %cst_8 {dimension_numbers = #tpu.dot_dimension_numbers<[1], [0], [0], [1], [0, 0, 1, 1], [], []>} : vector<64x256xf32>, vector<256x256xf32>, vector<64x256xf32> -> vector<64x256xf32>
    %cst_9 = arith.constant 9.99999974E-6 : f32
    %9 = vector.broadcast %cst_9 : f32 to vector<64x256xf32>
    %10 = arith.addf %8, %9 : vector<64x256xf32>
    %11 = math.rsqrt %10 : vector<64x256xf32>
    %12 = arith.mulf %6, %11 : vector<64x256xf32>
    %13 = vector.broadcast %3 : vector<1x256xf32> to vector<64x256xf32>
    %14 = arith.mulf %12, %13 : vector<64x256xf32>
    %15 = vector.broadcast %4 : vector<1x256xf32> to vector<64x256xf32>
    %16 = arith.addf %14, %15 : vector<64x256xf32>
    %c0_10 = arith.constant 0 : index
    %c0_11 = arith.constant 0 : index
    %17 = vector.load %arg2[%c0_10, %c0_11] : memref<80x64xbf16, #tpu.memory_space<vmem>>, vector<80x64xbf16>
    %18 = arith.truncf %16 : vector<64x256xf32> to vector<64x256xbf16>
    %cst_12 = arith.constant dense<0.000000e+00> : vector<80x256xf32>
    %19 = tpu.matmul %17, %18, %cst_12 {dimension_numbers = #tpu.dot_dimension_numbers<[1], [0], [0], [1], [0, 0, 1, 1], [], []>} : vector<80x64xbf16>, vector<64x256xbf16>, vector<80x256xf32> -> vector<80x256xf32>
    %20 = vector.extract_strided_slice %19 {offsets = [0, 0], sizes = [40, 256], strides = [1, 1]} : vector<80x256xf32> to vector<40x256xf32>
    %21 = vector.extract_strided_slice %19 {offsets = [40, 0], sizes = [40, 256], strides = [1, 1]} : vector<80x256xf32> to vector<40x256xf32>
    %c0_13 = arith.constant 0 : index
    %c0_14 = arith.constant 0 : index
    %22 = vector.load %arg4[%c0_13, %c0_14] : memref<40x256xf32, #tpu.memory_space<vmem>>, vector<40x256xf32>
    %c0_15 = arith.constant 0 : index
    %c0_16 = arith.constant 0 : index
    %23 = vector.load %arg5[%c0_15, %c0_16] : memref<40x256xf32, #tpu.memory_space<vmem>>, vector<40x256xf32>
    %24 = arith.mulf %20, %22 : vector<40x256xf32>
    %25 = arith.mulf %21, %23 : vector<40x256xf32>
    %26 = arith.subf %24, %25 : vector<40x256xf32>
    %27 = arith.mulf %20, %23 : vector<40x256xf32>
    %28 = arith.mulf %21, %22 : vector<40x256xf32>
    %29 = arith.addf %27, %28 : vector<40x256xf32>
    %30 = tpu.concatenate %26, %29 in 0 : vector<40x256xf32>, vector<40x256xf32> -> vector<80x256xf32>
    %31 = arith.truncf %30 : vector<80x256xf32> to vector<80x256xbf16>
    %c0_17 = arith.constant 0 : index
    %c0_18 = arith.constant 0 : index
    %32 = vector.load %arg3[%c0_17, %c0_18] : memref<64x80xbf16, #tpu.memory_space<vmem>>, vector<64x80xbf16>
    %cst_19 = arith.constant dense<0.000000e+00> : vector<64x256xf32>
    %33 = tpu.matmul %32, %31, %cst_19 {dimension_numbers = #tpu.dot_dimension_numbers<[1], [0], [0], [1], [0, 0, 1, 1], [], []>} : vector<64x80xbf16>, vector<80x256xbf16>, vector<64x256xf32> -> vector<64x256xf32>
    %c0_20 = arith.constant 0 : index
    %c0_21 = arith.constant 0 : index
    %34 = vector.load %arg9[%c0_20, %c0_21] : memref<1x256xf32, #tpu.memory_space<vmem>>, vector<1x256xf32>
    %c0_22 = arith.constant 0 : index
    %c0_23 = arith.constant 0 : index
    %35 = vector.load %arg10[%c0_22, %c0_23] : memref<1x256xf32, #tpu.memory_space<vmem>>, vector<1x256xf32>
    %cst_24 = arith.constant dense<0.000000e+00> : vector<64x256xf32>
    %36 = tpu.matmul %33, %2, %cst_24 {dimension_numbers = #tpu.dot_dimension_numbers<[1], [0], [0], [1], [0, 0, 1, 1], [], []>} : vector<64x256xf32>, vector<256x256xf32>, vector<64x256xf32> -> vector<64x256xf32>
    %37 = arith.subf %33, %36 : vector<64x256xf32>
    %38 = arith.mulf %37, %37 : vector<64x256xf32>
    %cst_25 = arith.constant dense<0.000000e+00> : vector<64x256xf32>
    %39 = tpu.matmul %38, %2, %cst_25 {dimension_numbers = #tpu.dot_dimension_numbers<[1], [0], [0], [1], [0, 0, 1, 1], [], []>} : vector<64x256xf32>, vector<256x256xf32>, vector<64x256xf32> -> vector<64x256xf32>
    %cst_26 = arith.constant 9.99999974E-6 : f32
    %40 = vector.broadcast %cst_26 : f32 to vector<64x256xf32>
    %41 = arith.addf %39, %40 : vector<64x256xf32>
    %42 = math.rsqrt %41 : vector<64x256xf32>
    %43 = arith.mulf %37, %42 : vector<64x256xf32>
    %44 = vector.broadcast %34 : vector<1x256xf32> to vector<64x256xf32>
    %45 = arith.mulf %43, %44 : vector<64x256xf32>
    %46 = vector.broadcast %35 : vector<1x256xf32> to vector<64x256xf32>
    %47 = arith.addf %45, %46 : vector<64x256xf32>
    %48 = arith.truncf %47 : vector<64x256xf32> to vector<64x256xbf16>
    %c0_27 = arith.constant 0 : index
    %c0_28 = arith.constant 0 : index
    %49 = vector.load %arg11[%c0_27, %c0_28] : memref<256x1024xbf16, #tpu.memory_space<vmem>>, vector<256x1024xbf16>
    %cst_29 = arith.constant dense<0.000000e+00> : vector<64x1024xf32>
    %50 = tpu.matmul %48, %49, %cst_29 {dimension_numbers = #tpu.dot_dimension_numbers<[1], [0], [0], [1], [0, 0, 1, 1], [], []>} : vector<64x256xbf16>, vector<256x1024xbf16>, vector<64x1024xf32> -> vector<64x1024xf32>
    %c0_30 = arith.constant 0 : index
    %c0_31 = arith.constant 0 : index
    %51 = vector.load %arg12[%c0_30, %c0_31] : memref<1x1024xf32, #tpu.memory_space<vmem>>, vector<1x1024xf32>
    %52 = vector.broadcast %51 : vector<1x1024xf32> to vector<64x1024xf32>
    %53 = arith.addf %50, %52 : vector<64x1024xf32>
    %cst_32 = arith.constant 5.000000e-01 : f32
    %54 = vector.broadcast %cst_32 : f32 to vector<64x1024xf32>
    %55 = arith.mulf %54, %53 : vector<64x1024xf32>
    %cst_33 = arith.constant 0.707106769 : f32
    %56 = vector.broadcast %cst_33 : f32 to vector<64x1024xf32>
    %57 = arith.mulf %53, %56 : vector<64x1024xf32>
    %58 = math.erf %57 : vector<64x1024xf32>
    %cst_34 = arith.constant 1.000000e+00 : f32
    %59 = vector.broadcast %cst_34 : f32 to vector<64x1024xf32>
    %60 = arith.addf %59, %58 : vector<64x1024xf32>
    %61 = arith.mulf %55, %60 : vector<64x1024xf32>
    %62 = arith.truncf %61 : vector<64x1024xf32> to vector<64x1024xbf16>
    %c0_35 = arith.constant 0 : index
    %c0_36 = arith.constant 0 : index
    %63 = vector.load %arg13[%c0_35, %c0_36] : memref<1024x256xbf16, #tpu.memory_space<vmem>>, vector<1024x256xbf16>
    %cst_37 = arith.constant dense<0.000000e+00> : vector<64x256xf32>
    %64 = tpu.matmul %62, %63, %cst_37 {dimension_numbers = #tpu.dot_dimension_numbers<[1], [0], [0], [1], [0, 0, 1, 1], [], []>} : vector<64x1024xbf16>, vector<1024x256xbf16>, vector<64x256xf32> -> vector<64x256xf32>
    %c0_38 = arith.constant 0 : index
    %c0_39 = arith.constant 0 : index
    %65 = vector.load %arg14[%c0_38, %c0_39] : memref<1x256xf32, #tpu.memory_space<vmem>>, vector<1x256xf32>
    %66 = vector.broadcast %65 : vector<1x256xf32> to vector<64x256xf32>
    %67 = arith.addf %64, %66 : vector<64x256xf32>
    %68 = arith.addf %1, %67 : vector<64x256xf32>
    %c0_40 = arith.constant 0 : index
    %c0_41 = arith.constant 0 : index
    %c0_42 = arith.constant 0 : index
    %69 = vector.load %arg15[%c0_40, %c0_41, %c0_42] : memref<1x64x256xf32, #tpu.memory_space<vmem>>, vector<1x64x256xf32>
    %70 = vector.shape_cast %69 : vector<1x64x256xf32> to vector<64x256xf32>
    %71 = vector.shape_cast %68 : vector<64x256xf32> to vector<1x64x256xf32>
    tpu.vector_store %arg15[%c0_40, %c0_41, %c0_42], %71 {strides = array<i32>} : memref<1x64x256xf32, #tpu.memory_space<vmem>>, vector<1x64x256xf32>,
    return
  }
  func.func @transform_0(%arg0: i32) -> (i32, i32, i32) {
    %c0_i32 = arith.constant 0 : i32
    %c0_i32_0 = arith.constant 0 : i32
    %c0_i32_1 = arith.constant 0 : i32
    return %arg0, %c0_i32, %c0_i32_0 : i32, i32, i32
  }
  func.func @transform_1(%arg0: i32) -> (i32, i32) {
    %c0_i32 = arith.constant 0 : i32
    %c0_i32_0 = arith.constant 0 : i32
    %c0_i32_1 = arith.constant 0 : i32
    return %c0_i32, %c0_i32_0 : i32, i32
  }
  func.func @transform_2(%arg0: i32) -> (i32, i32) {
    %c0_i32 = arith.constant 0 : i32
    %c0_i32_0 = arith.constant 0 : i32
    %c0_i32_1 = arith.constant 0 : i32
    return %c0_i32, %c0_i32_0 : i32, i32
  }
  func.func @transform_3(%arg0: i32) -> (i32, i32) {
    %c0_i32 = arith.constant 0 : i32
    %c0_i32_0 = arith.constant 0 : i32
    %c0_i32_1 = arith.constant 0 : i32
    return %c0_i32, %c0_i32_0 : i32, i32
  }
  func.func @transform_4(%arg0: i32) -> (i32, i32) {
    %c0_i32 = arith.constant 0 : i32
    %c0_i32_0 = arith.constant 0 : i32
    %c0_i32_1 = arith.constant 0 : i32
    return %c0_i32, %c0_i32_0 : i32, i32
  }
  func.func @transform_5(%arg0: i32) -> (i32, i32) {
    %c0_i32 = arith.constant 0 : i32
    %c0_i32_0 = arith.constant 0 : i32
    %c0_i32_1 = arith.constant 0 : i32
    return %c0_i32, %c0_i32_0 : i32, i32
  }
  func.func @transform_6(%arg0: i32) -> (i32, i32) {
    %c0_i32 = arith.constant 0 : i32
    %c0_i32_0 = arith.constant 0 : i32
    %c0_i32_1 = arith.constant 0 : i32
    return %c0_i32, %c0_i32_0 : i32, i32
  }
  func.func @transform_7(%arg0: i32) -> (i32, i32) {
    %c0_i32 = arith.constant 0 : i32
    %c0_i32_0 = arith.constant 0 : i32
    %c0_i32_1 = arith.constant 0 : i32
    return %c0_i32, %c0_i32_0 : i32, i32
  }
  func.func @transform_8(%arg0: i32) -> (i32, i32) {
    %c0_i32 = arith.constant 0 : i32
    %c0_i32_0 = arith.constant 0 : i32
    %c0_i32_1 = arith.constant 0 : i32
    return %c0_i32, %c0_i32_0 : i32, i32
  }
  func.func @transform_9(%arg0: i32) -> (i32, i32) {
    %c0_i32 = arith.constant 0 : i32
    %c0_i32_0 = arith.constant 0 : i32
    %c0_i32_1 = arith.constant 0 : i32
    return %c0_i32, %c0_i32_0 : i32, i32
  }
  func.func @transform_10(%arg0: i32) -> (i32, i32) {
    %c0_i32 = arith.constant 0 : i32
    %c0_i32_0 = arith.constant 0 : i32
    %c0_i32_1 = arith.constant 0 : i32
    return %c0_i32, %c0_i32_0 : i32, i32
  }
  func.func @transform_11(%arg0: i32) -> (i32, i32) {
    %c0_i32 = arith.constant 0 : i32
    %c0_i32_0 = arith.constant 0 : i32
    %c0_i32_1 = arith.constant 0 : i32
    return %c0_i32, %c0_i32_0 : i32, i32
  }
  func.func @transform_12(%arg0: i32) -> (i32, i32) {
    %c0_i32 = arith.constant 0 : i32
    %c0_i32_0 = arith.constant 0 : i32
    %c0_i32_1 = arith.constant 0 : i32
    return %c0_i32, %c0_i32_0 : i32, i32
  }
  func.func @transform_13(%arg0: i32) -> (i32, i32) {
    %c0_i32 = arith.constant 0 : i32
    %c0_i32_0 = arith.constant 0 : i32
    %c0_i32_1 = arith.constant 0 : i32
    return %c0_i32, %c0_i32_0 : i32, i32
  }
  func.func @transform_14(%arg0: i32) -> (i32, i32, i32) {
    %c0_i32 = arith.constant 0 : i32
    %c0_i32_0 = arith.constant 0 : i32
    %c0_i32_1 = arith.constant 0 : i32
    return %arg0, %c0_i32, %c0_i32_0 : i32, i32, i32
  }
}

</mosaic_0001>

<llo_original>
// kernel: tpu_custom_call.1
$region0: #{tpu_custom_call.1}
  #allocation0 [shape = 'u32[]', space=smem, size = 0x4, offset = 0x4, fixed_abs, tag = 'smem constant byte address 0x4 - core index']
  #allocation1 [shape = 'u32[144,128]{1,0:T(1,128)}', space=vmem, size = 0x12000, scoped, tag = 'internal scratch']
  %s0 = inlined_call_operand.hbm [shape: f32[2,64,256], index: 0, kind: input, shape index: {}, may-alias: {0,14}]
  %s1 = inlined_call_operand.vmem [shape: bf16[80,64], index: 1, kind: input, shape index: {}]
  %s2 = inlined_call_operand.hbm [shape: bf16[64,80], index: 2, kind: input, shape index: {}]
  %s3 = inlined_call_operand.vmem [shape: f32[40,256], index: 3, kind: input, shape index: {}]
  %s4 = inlined_call_operand.hbm [shape: f32[40,256], index: 4, kind: input, shape index: {}]
  %s5 = inlined_call_operand.vmem [shape: f32[256,256], index: 5, kind: input, shape index: {}]
  %s6 = inlined_call_operand.vmem [shape: f32[1,256], index: 6, kind: input, shape index: {}]
  %s7 = inlined_call_operand.vmem [shape: f32[1,256], index: 7, kind: input, shape index: {}]
  %s8 = inlined_call_operand.vmem [shape: f32[1,256], index: 8, kind: input, shape index: {}]
  %s9 = inlined_call_operand.vmem [shape: f32[1,256], index: 9, kind: input, shape index: {}]
  %s10 = inlined_call_operand.hbm [shape: bf16[256,1024], index: 10, kind: input, shape index: {}]
  %s11 = inlined_call_operand.vmem [shape: f32[1,1024], index: 11, kind: input, shape index: {}]
  %s12 = inlined_call_operand.hbm [shape: bf16[1024,256], index: 12, kind: input, shape index: {}]
  %s13 = inlined_call_operand.vmem [shape: f32[1,256], index: 13, kind: input, shape index: {}]
  %s14 = inlined_call_operand.hbm [shape: f32[2,64,256], index: 14, kind: output, shape index: {}, may-alias: {0,14}]
  %s15 = sld [smem:[#allocation0]]
  $region109: #{tpu_custom_call.1} parent=0
    _
  %s17 = ssub.s32 1, %s15
  %s18 = scalar_select 0, %s17, %s15
  $region1: #{tpu_custom_call.1} parent=0
    #allocation2 [shape = 'u8[131072]{0}', space=vmem, size = 0x20000, scoped, tag = 'input window, operand 0']
    #allocation3 [shape = 's32[2]{0}', space=sflag, size = 0x8, scoped, tag = 'scoped memory for tpu_custom_call.1']
    #allocation4 [shape = 's32[2]{0}', space=sflag, size = 0x8, scoped, tag = 'scoped memory for tpu_custom_call.1']
    #allocation5 [shape = 'u8[16384]{0}', space=vmem, size = 0x4000, scoped, tag = 'input window, operand 2, single buffered']
    #allocation6 [shape = 's32[1]{0}', space=sflag, size = 0x4, scoped, tag = 'scoped memory for tpu_custom_call.1']
    #allocation7 [shape = 'u8[40960]{0}', space=vmem, size = 0xa000, scoped, tag = 'input window, operand 4, single buffered']
    #allocation8 [shape = 'u8[524288]{0}', space=vmem, size = 0x80000, scoped, tag = 'input window, operand 10, single buffered']
    #allocation9 [shape = 's32[1]{0}', space=sflag, size = 0x4, scoped, tag = 'scoped memory for tpu_custom_call.1']
    #allocation10 [shape = 'u8[524288]{0}', space=vmem, size = 0x80000, scoped, tag = 'input window, operand 12, single buffered']
    #allocation11 [shape = 'u8[131072]{0}', space=vmem, size = 0x20000, scoped, tag = 'output window, operand 0']
    %19 = vsyncpa [#allocation3], 0
    %s20 = scalar_lea.sflag [#allocation3], 1
    %21 = vsyncpa %s20, 0
    %22 = vsyncpa [#allocation6], 0
    %23 = vsyncpa [#allocation9], 0
    %24 = vsyncpa [#allocation4], 0
    %s25 = scalar_lea.sflag [#allocation4], 1
    %26 = vsyncpa %s25, 0
    loop: start=0, step=1, limit=4
    $region2: #{tpu_custom_call.1} parent=1 // loop_pre_header
      _
    $region3: #{tpu_custom_call.1} parent=1 // loop_header
      %s28 = sphi 0, %s32
      %p29 = scmp.ge.s32.totalorder %s28, 4
      %s38 = sphi 0, %s40
      %s41 = sphi 0, %s38
      %s42 = sphi 0, %s41
      %s58 = sphi 0, %s42
      %s62 = sphi 0, %s62
      %s64 = sphi 0, %s62
      %s65 = sphi 0, %s64
      %s79 = sphi 0, %s65
      %s83 = sphi 0, %s83
      %s85 = sphi 0, %s83
      %s86 = sphi 0, %s85
      %s100 = sphi 0, %s86
      %s104 = sphi 0, %s104
      %s106 = sphi 0, %s104
      %s107 = sphi 0, %s106
      %s121 = sphi 0, %s107
      %s125 = sphi 0, %s125
      %s127 = sphi 0, %s125
      %s128 = sphi 0, %s127
      %s142 = sphi 0, %s128
      %s146 = sphi 0, %s146
      %s148 = sphi 0, %s146
      %s149 = sphi 0, %s148
      %s163 = sphi 0, %s149
      %s167 = sphi 0, %s167
      %s169 = sphi 0, %s167
      %s170 = sphi 0, %s169
      %s184 = sphi 0, %s170
      %s188 = sphi 0, %s188
      %s190 = sphi 0, %s188
      %s191 = sphi 0, %s190
      %s205 = sphi 0, %s191
      %s209 = sphi 0, %s209
      %s211 = sphi 0, %s209
      %s212 = sphi 0, %s211
      %s226 = sphi 0, %s212
      %s230 = sphi 0, %s230
      %s232 = sphi 0, %s230
      %s233 = sphi 0, %s232
      %s247 = sphi 0, %s233
      %s251 = sphi 0, %s251
      %s253 = sphi 0, %s251
      %s254 = sphi 0, %s253
      %s268 = sphi 0, %s254
      %s272 = sphi 0, %s272
      %s274 = sphi 0, %s272
      %s275 = sphi 0, %s274
      %s289 = sphi 0, %s275
      %s293 = sphi 0, %s293
      %s295 = sphi 0, %s293
      %s296 = sphi 0, %s295
      %s310 = sphi 0, %s296
      %s314 = sphi 0, %s314
      %s316 = sphi 0, %s314
      %s317 = sphi 0, %s316
      %s331 = sphi 0, %s317
      %s337 = sphi 0, %s339
      %s340 = sphi 0, %s337
      %s341 = sphi 0, %s340
      %s357 = sphi 0, %s341
    $region4: #{tpu_custom_call.1} parent=1 // loop_header_branch
      %31 = sbr.rel (%p29) target = $region8
    $region5: #{tpu_custom_call.1} parent=1 // loop_body
      %s33 = ssub.s32 %s28, 1
      %s34 = ssub.s32 %s28, 2
      %s35 = sadd.s32 %s28, 1
      %s36 = ssub.s32 %s28, %s35
      %p37 = scmp.eq.s32.totalorder %s36, 0
      %s39 = sadd.s32 %s38, 1
      %s40 = scalar_select %p37, %s38, %s39
      %p43 = pneg %p37
      %p44 = scmp.eq.s32.totalorder %s28, 1
      %p45 = por %p43, %p44
      %p46 = scmp.ne.s32.totalorder %s38, %s41
      %p47 = scmp.eq.s32.totalorder %s28, 0
      %p48 = por %p46, %p47
      %p49 = scmp.ne.s32.totalorder %s38, %s41
      %p50 = scmp.eq.s32.totalorder %s33, 1
      %p51 = por %p49, %p50
      %p52 = scmp.ne.s32.totalorder %s41, %s42
      %p53 = scmp.eq.s32.totalorder %s33, 0
      %p54 = por %p52, %p53
      %p55 = scmp.ne.s32.totalorder %s41, %s42
      %p56 = scmp.eq.s32.totalorder %s34, 1
      %p57 = por %p55, %p56
      %p59 = scmp.ne.s32.totalorder %s42, %s58
      %p60 = scmp.eq.s32.totalorder %s34, 0
      %p61 = por %p59, %p60
      %s63 = sadd.s32 %s62, 1
      %p66 = scmp.eq.s32.totalorder %s28, 1
      %p67 = scmp.ne.s32.totalorder %s62, %s64
      %p68 = scmp.eq.s32.totalorder %s28, 0
      %p69 = por %p67, %p68
      %p70 = scmp.ne.s32.totalorder %s62, %s64
      %p71 = scmp.eq.s32.totalorder %s33, 1
      %p72 = por %p70, %p71
      %p73 = scmp.ne.s32.totalorder %s64, %s65
      %p74 = scmp.eq.s32.totalorder %s33, 0
      %p75 = por %p73, %p74
      %p76 = scmp.ne.s32.totalorder %s64, %s65
      %p77 = scmp.eq.s32.totalorder %s34, 1
      %p78 = por %p76, %p77
      %p80 = scmp.ne.s32.totalorder %s65, %s79
      %p81 = scmp.eq.s32.totalorder %s34, 0
      %p82 = por %p80, %p81
      %s84 = sadd.s32 %s83, 1
      %p87 = scmp.eq.s32.totalorder %s28, 1
      %p88 = scmp.ne.s32.totalorder %s83, %s85
      %p89 = scmp.eq.s32.totalorder %s28, 0
      %p90 = por %p88, %p89
      %p91 = scmp.ne.s32.totalorder %s83, %s85
      %p92 = scmp.eq.s32.totalorder %s33, 1
      %p93 = por %p91, %p92
      %p94 = scmp.ne.s32.totalorder %s85, %s86
      %p95 = scmp.eq.s32.totalorder %s33, 0
      %p96 = por %p94, %p95
      %p97 = scmp.ne.s32.totalorder %s85, %s86
      %p98 = scmp.eq.s32.totalorder %s34, 1
      %p99 = por %p97, %p98
      %p101 = scmp.ne.s32.totalorder %s86, %s100
      %p102 = scmp.eq.s32.totalorder %s34, 0
      %p103 = por %p101, %p102
      %s105 = sadd.s32 %s104, 1
      %p108 = scmp.eq.s32.totalorder %s28, 1
      %p109 = scmp.ne.s32.totalorder %s104, %s106
      %p110 = scmp.eq.s32.totalorder %s28, 0
      %p111 = por %p109, %p110
      %p112 = scmp.ne.s32.totalorder %s104, %s106
      %p113 = scmp.eq.s32.totalorder %s33, 1
      %p114 = por %p112, %p113
      %p115 = scmp.ne.s32.totalorder %s106, %s107
      %p116 = scmp.eq.s32.totalorder %s33, 0
      %p117 = por %p115, %p116
      %p118 = scmp.ne.s32.totalorder %s106, %s107
      %p119 = scmp.eq.s32.totalorder %s34, 1
      %p120 = por %p118, %p119
      %p122 = scmp.ne.s32.totalorder %s107, %s121
      %p123 = scmp.eq.s32.totalorder %s34, 0
      %p124 = por %p122, %p123
      %s126 = sadd.s32 %s125, 1
      %p129 = scmp.eq.s32.totalorder %s28, 1
      %p130 = scmp.ne.s32.totalorder %s125, %s127
      %p131 = scmp.eq.s32.totalorder %s28, 0
      %p132 = por %p130, %p131
      %p133 = scmp.ne.s32.totalorder %s125, %s127
      %p134 = scmp.eq.s32.totalorder %s33, 1
      %p135 = por %p133, %p134
      %p136 = scmp.ne.s32.totalorder %s127, %s128
      %p137 = scmp.eq.s32.totalorder %s33, 0
      %p138 = por %p136, %p137
      %p139 = scmp.ne.s32.totalorder %s127, %s128
      %p140 = scmp.eq.s32.totalorder %s34, 1
      %p141 = por %p139, %p140
      %p143 = scmp.ne.s32.totalorder %s128, %s142
      %p144 = scmp.eq.s32.totalorder %s34, 0
      %p145 = por %p143, %p144
      %s147 = sadd.s32 %s146, 1
      %p150 = scmp.eq.s32.totalorder %s28, 1
      %p151 = scmp.ne.s32.totalorder %s146, %s148
      %p152 = scmp.eq.s32.totalorder %s28, 0
      %p153 = por %p151, %p152
      %p154 = scmp.ne.s32.totalorder %s146, %s148
      %p155 = scmp.eq.s32.totalorder %s33, 1
      %p156 = por %p154, %p155
      %p157 = scmp.ne.s32.totalorder %s148, %s149
      %p158 = scmp.eq.s32.totalorder %s33, 0
      %p159 = por %p157, %p158
      %p160 = scmp.ne.s32.totalorder %s148, %s149
      %p161 = scmp.eq.s32.totalorder %s34, 1
      %p162 = por %p160, %p161
      %p164 = scmp.ne.s32.totalorder %s149, %s163
      %p165 = scmp.eq.s32.totalorder %s34, 0
      %p166 = por %p164, %p165
      %s168 = sadd.s32 %s167, 1
      %p171 = scmp.eq.s32.totalorder %s28, 1
      %p172 = scmp.ne.s32.totalorder %s167, %s169
      %p173 = scmp.eq.s32.totalorder %s28, 0
      %p174 = por %p172, %p173
      %p175 = scmp.ne.s32.totalorder %s167, %s169
      %p176 = scmp.eq.s32.totalorder %s33, 1
      %p177 = por %p175, %p176
      %p178 = scmp.ne.s32.totalorder %s169, %s170
      %p179 = scmp.eq.s32.totalorder %s33, 0
      %p180 = por %p178, %p179
      %p181 = scmp.ne.s32.totalorder %s169, %s170
      %p182 = scmp.eq.s32.totalorder %s34, 1
      %p183 = por %p181, %p182
      %p185 = scmp.ne.s32.totalorder %s170, %s184
      %p186 = scmp.eq.s32.totalorder %s34, 0
      %p187 = por %p185, %p186
      %s189 = sadd.s32 %s188, 1
      %p192 = scmp.eq.s32.totalorder %s28, 1
      %p193 = scmp.ne.s32.totalorder %s188, %s190
      %p194 = scmp.eq.s32.totalorder %s28, 0
      %p195 = por %p193, %p194
      %p196 = scmp.ne.s32.totalorder %s188, %s190
      %p197 = scmp.eq.s32.totalorder %s33, 1
      %p198 = por %p196, %p197
      %p199 = scmp.ne.s32.totalorder %s190, %s191
      %p200 = scmp.eq.s32.totalorder %s33, 0
      %p201 = por %p199, %p200
      %p202 = scmp.ne.s32.totalorder %s190, %s191
      %p203 = scmp.eq.s32.totalorder %s34, 1
      %p204 = por %p202, %p203
      %p206 = scmp.ne.s32.totalorder %s191, %s205
      %p207 = scmp.eq.s32.totalorder %s34, 0
      %p208 = por %p206, %p207
      %s210 = sadd.s32 %s209, 1
      %p213 = scmp.eq.s32.totalorder %s28, 1
      %p214 = scmp.ne.s32.totalorder %s209, %s211
      %p215 = scmp.eq.s32.totalorder %s28, 0
      %p216 = por %p214, %p215
      %p217 = scmp.ne.s32.totalorder %s209, %s211
      %p218 = scmp.eq.s32.totalorder %s33, 1
      %p219 = por %p217, %p218
      %p220 = scmp.ne.s32.totalorder %s211, %s212
      %p221 = scmp.eq.s32.totalorder %s33, 0
      %p222 = por %p220, %p221
      %p223 = scmp.ne.s32.totalorder %s211, %s212
      %p224 = scmp.eq.s32.totalorder %s34, 1
      %p225 = por %p223, %p224
      %p227 = scmp.ne.s32.totalorder %s212, %s226
      %p228 = scmp.eq.s32.totalorder %s34, 0
      %p229 = por %p227, %p228
      %s231 = sadd.s32 %s230, 1
      %p234 = scmp.eq.s32.totalorder %s28, 1
      %p235 = scmp.ne.s32.totalorder %s230, %s232
      %p236 = scmp.eq.s32.totalorder %s28, 0
      %p237 = por %p235, %p236
      %p238 = scmp.ne.s32.totalorder %s230, %s232
      %p239 = scmp.eq.s32.totalorder %s33, 1
      %p240 = por %p238, %p239
      %p241 = scmp.ne.s32.totalorder %s232, %s233
      %p242 = scmp.eq.s32.totalorder %s33, 0
      %p243 = por %p241, %p242
      %p244 = scmp.ne.s32.totalorder %s232, %s233
      %p245 = scmp.eq.s32.totalorder %s34, 1
      %p246 = por %p244, %p245
      %p248 = scmp.ne.s32.totalorder %s233, %s247
      %p249 = scmp.eq.s32.totalorder %s34, 0
      %p250 = por %p248, %p249
      %s252 = sadd.s32 %s251, 1
      %p255 = scmp.eq.s32.totalorder %s28, 1
      %p256 = scmp.ne.s32.totalorder %s251, %s253
      %p257 = scmp.eq.s32.totalorder %s28, 0
      %p258 = por %p256, %p257
      %p259 = scmp.ne.s32.totalorder %s251, %s253
      %p260 = scmp.eq.s32.totalorder %s33, 1
      %p261 = por %p259, %p260
      %p262 = scmp.ne.s32.totalorder %s253, %s254
      %p263 = scmp.eq.s32.totalorder %s33, 0
      %p264 = por %p262, %p263
      %p265 = scmp.ne.s32.totalorder %s253, %s254
      %p266 = scmp.eq.s32.totalorder %s34, 1
      %p267 = por %p265, %p266
      %p269 = scmp.ne.s32.totalorder %s254, %s268
      %p270 = scmp.eq.s32.totalorder %s34, 0
      %p271 = por %p269, %p270
      %s273 = sadd.s32 %s272, 1
      %p276 = scmp.eq.s32.totalorder %s28, 1
      %p277 = scmp.ne.s32.totalorder %s272, %s274
      %p278 = scmp.eq.s32.totalorder %s28, 0
      %p279 = por %p277, %p278
      %p280 = scmp.ne.s32.totalorder %s272, %s274
      %p281 = scmp.eq.s32.totalorder %s33, 1
      %p282 = por %p280, %p281
      %p283 = scmp.ne.s32.totalorder %s274, %s275
      %p284 = scmp.eq.s32.totalorder %s33, 0
      %p285 = por %p283, %p284
      %p286 = scmp.ne.s32.totalorder %s274, %s275
      %p287 = scmp.eq.s32.totalorder %s34, 1
      %p288 = por %p286, %p287
      %p290 = scmp.ne.s32.totalorder %s275, %s289
      %p291 = scmp.eq.s32.totalorder %s34, 0
      %p292 = por %p290, %p291
      %s294 = sadd.s32 %s293, 1
      %p297 = scmp.eq.s32.totalorder %s28, 1
      %p298 = scmp.ne.s32.totalorder %s293, %s295
      %p299 = scmp.eq.s32.totalorder %s28, 0
      %p300 = por %p298, %p299
      %p301 = scmp.ne.s32.totalorder %s293, %s295
      %p302 = scmp.eq.s32.totalorder %s33, 1
      %p303 = por %p301, %p302
      %p304 = scmp.ne.s32.totalorder %s295, %s296
      %p305 = scmp.eq.s32.totalorder %s33, 0
      %p306 = por %p304, %p305
      %p307 = scmp.ne.s32.totalorder %s295, %s296
      %p308 = scmp.eq.s32.totalorder %s34, 1
      %p309 = por %p307, %p308
      %p311 = scmp.ne.s32.totalorder %s296, %s310
      %p312 = scmp.eq.s32.totalorder %s34, 0
      %p313 = por %p311, %p312
      %s315 = sadd.s32 %s314, 1
      %p318 = scmp.eq.s32.totalorder %s28, 1
      %p319 = scmp.ne.s32.totalorder %s314, %s316
      %p320 = scmp.eq.s32.totalorder %s28, 0
      %p321 = por %p319, %p320
      %p322 = scmp.ne.s32.totalorder %s314, %s316
      %p323 = scmp.eq.s32.totalorder %s33, 1
      %p324 = por %p322, %p323
      %p325 = scmp.ne.s32.totalorder %s316, %s317
      %p326 = scmp.eq.s32.totalorder %s33, 0
      %p327 = por %p325, %p326
      %p328 = scmp.ne.s32.totalorder %s316, %s317
      %p329 = scmp.eq.s32.totalorder %s34, 1
      %p330 = por %p328, %p329
      %p332 = scmp.ne.s32.totalorder %s317, %s331
      %p333 = scmp.eq.s32.totalorder %s34, 0
      %p334 = por %p332, %p333
      %s335 = ssub.s32 %s28, %s35
      %p336 = scmp.eq.s32.totalorder %s335, 0
      %s338 = sadd.s32 %s337, 1
      %s339 = scalar_select %p336, %s337, %s338
      %p342 = pneg %p336
      %p343 = scmp.eq.s32.totalorder %s28, 1
      %p344 = por %p342, %p343
      %p345 = scmp.ne.s32.totalorder %s337, %s340
      %p346 = scmp.eq.s32.totalorder %s28, 0
      %p347 = por %p345, %p346
      %p348 = scmp.ne.s32.totalorder %s337, %s340
      %p349 = scmp.eq.s32.totalorder %s33, 1
      %p350 = por %p348, %p349
      %p351 = scmp.ne.s32.totalorder %s340, %s341
      %p352 = scmp.eq.s32.totalorder %s33, 0
      %p353 = por %p351, %p352
      %p354 = scmp.ne.s32.totalorder %s340, %s341
      %p355 = scmp.eq.s32.totalorder %s34, 1
      %p356 = por %p354, %p355
      %p358 = scmp.ne.s32.totalorder %s341, %s357
      %p359 = scmp.eq.s32.totalorder %s34, 0
      %p360 = por %p358, %p359
      %p361 = scmp.le.s32.totalorder 1, %s28
      %p362 = scmp.lt.s32.totalorder %s28, 3
      %p363 = pnand %p361, %p362
      %p364 = pneg %p363
      // Predicated region
      $region9: #{tpu_custom_call.1} parent=5 // pred_check
        _
      $region10: #{tpu_custom_call.1} parent=5 // pred_check_branch
        %366 = sbr.rel (%p363) target = $region12
      $region11: #{tpu_custom_call.1} parent=5 // pred_region
        %s367 = ssub.s32 %s28, 1
        // Predicated region
        $region13: #{tpu_custom_call.1} parent=11 // pred_check
          %p368 = pneg %p75
        $region14: #{tpu_custom_call.1} parent=11 // pred_check_branch
          %370 = sbr.rel (%p368) target = $region16
        $region15: #{tpu_custom_call.1} parent=11 // pred_region
          _
        $region16: #{tpu_custom_call.1} parent=11 // pred_fallthru
          _
        // Predicated region
        $region17: #{tpu_custom_call.1} parent=11 // pred_check
          %p371 = pneg %p96
        $region18: #{tpu_custom_call.1} parent=11 // pred_check_branch
          %373 = sbr.rel (%p371) target = $region20
        $region19: #{tpu_custom_call.1} parent=11 // pred_region
          %s375 = ssub.s32 512, 512
          %376 = vsyncadd [#allocation6], %s375
          %s377 = sshll.u32 [#allocation5], 4
          %s378 = int_to_ptr.vmem [resolvable:$true] %s377
          %383 = dma.hbm_to_vmem [thread:$0]  %s2, 512, %s378, [#allocation6], 64, 64, 4
        $region20: #{tpu_custom_call.1} parent=11 // pred_fallthru
          _
        // Predicated region
        $region21: #{tpu_custom_call.1} parent=11 // pred_check
          %p384 = pneg %p117
        $region22: #{tpu_custom_call.1} parent=11 // pred_check_branch
          %386 = sbr.rel (%p384) target = $region24
        $region23: #{tpu_custom_call.1} parent=11 // pred_region
          _
        $region24: #{tpu_custom_call.1} parent=11 // pred_fallthru
          _
        // Predicated region
        $region25: #{tpu_custom_call.1} parent=11 // pred_check
          %p387 = pneg %p138
        $region26: #{tpu_custom_call.1} parent=11 // pred_check_branch
          %389 = sbr.rel (%p387) target = $region28
        $region27: #{tpu_custom_call.1} parent=11 // pred_region
          %s391 = ssub.s32 1280, 1280
          %392 = vsyncadd [#allocation6], %s391
          %s393 = sshll.u32 [#allocation7], 4
          %s394 = int_to_ptr.vmem [resolvable:$true] %s393
          %399 = dma.hbm_to_vmem [thread:$0]  %s4, 1280, %s394, [#allocation6], 256, 256, 16
        $region28: #{tpu_custom_call.1} parent=11 // pred_fallthru
          _
        // Predicated region
        $region29: #{tpu_custom_call.1} parent=11 // pred_check
          %p400 = pneg %p159
        $region30: #{tpu_custom_call.1} parent=11 // pred_check_branch
          %402 = sbr.rel (%p400) target = $region32
        $region31: #{tpu_custom_call.1} parent=11 // pred_region
          _
        $region32: #{tpu_custom_call.1} parent=11 // pred_fallthru
          _
        // Predicated region
        $region33: #{tpu_custom_call.1} parent=11 // pred_check
          %p403 = pneg %p180
        $region34: #{tpu_custom_call.1} parent=11 // pred_check_branch
          %405 = sbr.rel (%p403) target = $region36
        $region35: #{tpu_custom_call.1} parent=11 // pred_region
          _
        $region36: #{tpu_custom_call.1} parent=11 // pred_fallthru
          _
        // Predicated region
        $region37: #{tpu_custom_call.1} parent=11 // pred_check
          %p406 = pneg %p201
        $region38: #{tpu_custom_call.1} parent=11 // pred_check_branch
          %408 = sbr.rel (%p406) target = $region40
        $region39: #{tpu_custom_call.1} parent=11 // pred_region
          _
        $region40: #{tpu_custom_call.1} parent=11 // pred_fallthru
          _
        // Predicated region
        $region41: #{tpu_custom_call.1} parent=11 // pred_check
          %p409 = pneg %p222
        $region42: #{tpu_custom_call.1} parent=11 // pred_check_branch
          %411 = sbr.rel (%p409) target = $region44
        $region43: #{tpu_custom_call.1} parent=11 // pred_region
          _
        $region44: #{tpu_custom_call.1} parent=11 // pred_fallthru
          _
        // Predicated region
        $region45: #{tpu_custom_call.1} parent=11 // pred_check
          %p412 = pneg %p243
        $region46: #{tpu_custom_call.1} parent=11 // pred_check_branch
          %414 = sbr.rel (%p412) target = $region48
        $region47: #{tpu_custom_call.1} parent=11 // pred_region
          _
        $region48: #{tpu_custom_call.1} parent=11 // pred_fallthru
          _
        // Predicated region
        $region49: #{tpu_custom_call.1} parent=11 // pred_check
          %p415 = pneg %p264
        $region50: #{tpu_custom_call.1} parent=11 // pred_check_branch
          %417 = sbr.rel (%p415) target = $region52
        $region51: #{tpu_custom_call.1} parent=11 // pred_region
          %s419 = ssub.s32 16384, 16384
          %420 = vsyncadd [#allocation9], %s419
          %s421 = sshll.u32 [#allocation8], 4
          %s422 = int_to_ptr.vmem [resolvable:$true] %s421
          %427 = dma.hbm_to_vmem [thread:$0]  %s10, 16384, %s422, [#allocation9], 512, 512, 32
        $region52: #{tpu_custom_call.1} parent=11 // pred_fallthru
          _
        // Predicated region
        $region53: #{tpu_custom_call.1} parent=11 // pred_check
          %p428 = pneg %p285
        $region54: #{tpu_custom_call.1} parent=11 // pred_check_branch
          %430 = sbr.rel (%p428) target = $region56
        $region55: #{tpu_custom_call.1} parent=11 // pred_region
          _
        $region56: #{tpu_custom_call.1} parent=11 // pred_fallthru
          _
        // Predicated region
        $region57: #{tpu_custom_call.1} parent=11 // pred_check
          %p431 = pneg %p306
        $region58: #{tpu_custom_call.1} parent=11 // pred_check_branch
          %433 = sbr.rel (%p431) target = $region60
        $region59: #{tpu_custom_call.1} parent=11 // pred_region
          %s435 = ssub.s32 16384, 16384
          %436 = vsyncadd [#allocation9], %s435
          %s437 = sshll.u32 [#allocation10], 4
          %s438 = int_to_ptr.vmem [resolvable:$true] %s437
          %443 = dma.hbm_to_vmem [thread:$0]  %s12, 16384, %s438, [#allocation9], 128, 128, 8
        $region60: #{tpu_custom_call.1} parent=11 // pred_fallthru
          _
        // Predicated region
        $region61: #{tpu_custom_call.1} parent=11 // pred_check
          %p444 = pneg %p327
        $region62: #{tpu_custom_call.1} parent=11 // pred_check_branch
          %446 = sbr.rel (%p444) target = $region64
        $region63: #{tpu_custom_call.1} parent=11 // pred_region
          _
        $region64: #{tpu_custom_call.1} parent=11 // pred_fallthru
          _
      $region12: #{tpu_custom_call.1} parent=5 // pred_fallthru
        _
      %p447 = scmp.lt.s32.totalorder %s28, 2
      // Predicated region
      $region65: #{tpu_custom_call.1} parent=5 // pred_check
        %p448 = pneg %p447
      $region66: #{tpu_custom_call.1} parent=5 // pred_check_branch
        %450 = sbr.rel (%p448) target = $region68
      $region67: #{tpu_custom_call.1} parent=5 // pred_region
        // Predicated region
        $region69: #{tpu_custom_call.1} parent=67 // pred_check
          %p451 = pneg %p48
        $region70: #{tpu_custom_call.1} parent=67 // pred_check_branch
          %453 = sbr.rel (%p451) target = $region72
        $region71: #{tpu_custom_call.1} parent=67 // pred_region
          %s454 = sand.u32 %s38, 1
          %s455 = scalar_lea.sflag [#allocation3], %s454
          %s456 = sand.u32 %s38, 1
          %s457 = smul.addr %s456, 128
          %s458 = scalar_lea.vmem [#allocation2], %s457
          %s460 = ssub.s32 2048, 2048
          %461 = vsyncadd %s455, %s460
          %s462 = smul.addr %s28, 16
          %s463 = smul.addr %s462, 128
          %s464 = scalar_lea.hbm %s0, %s463
          %s465 = sshll.u32 %s458, 4
          %s466 = int_to_ptr.vmem [resolvable:$true] %s465
          %471 = dma.hbm_to_vmem [thread:$0]  %s464, 2048, %s466, %s455, 256, 256, 16
        $region72: #{tpu_custom_call.1} parent=67 // pred_fallthru
          _
      $region68: #{tpu_custom_call.1} parent=5 // pred_fallthru
        _
      %p472 = scmp.le.s32.totalorder 1, %s28
      %p473 = scmp.lt.s32.totalorder %s28, 3
      %p474 = pnand %p472, %p473
      %p475 = pneg %p474
      // Predicated region
      $region73: #{tpu_custom_call.1} parent=5 // pred_check
        _
      $region74: #{tpu_custom_call.1} parent=5 // pred_check_branch
        %477 = sbr.rel (%p474) target = $region76
      $region75: #{tpu_custom_call.1} parent=5 // pred_region
        %s478 = ssub.s32 %s28, 1
        %s479 = sand.u32 %s41, 1
        %s480 = scalar_lea.sflag [#allocation3], %s479
        %s481 = sand.u32 %s41, 1
        %s482 = smul.addr %s481, 128
        %s483 = scalar_lea.vmem [#allocation2], %s482
        // Predicated region
        $region77: #{tpu_custom_call.1} parent=75 // pred_check
          %p484 = pneg %p54
        $region78: #{tpu_custom_call.1} parent=75 // pred_check_branch
          %486 = sbr.rel (%p484) target = $region80
        $region79: #{tpu_custom_call.1} parent=75 // pred_region
          %487 = dma.done %s480, 2048
        $region80: #{tpu_custom_call.1} parent=75 // pred_fallthru
          _
        // Predicated region
        $region81: #{tpu_custom_call.1} parent=75 // pred_check
          %p488 = pneg %p96
        $region82: #{tpu_custom_call.1} parent=75 // pred_check_branch
          %490 = sbr.rel (%p488) target = $region84
        $region83: #{tpu_custom_call.1} parent=75 // pred_region
          %491 = dma.done [#allocation6], 512
        $region84: #{tpu_custom_call.1} parent=75 // pred_fallthru
          _
        // Predicated region
        $region85: #{tpu_custom_call.1} parent=75 // pred_check
          %p492 = pneg %p138
        $region86: #{tpu_custom_call.1} parent=75 // pred_check_branch
          %494 = sbr.rel (%p492) target = $region88
        $region87: #{tpu_custom_call.1} parent=75 // pred_region
          %495 = dma.done [#allocation6], 1280
        $region88: #{tpu_custom_call.1} parent=75 // pred_fallthru
          _
        // Predicated region
        $region89: #{tpu_custom_call.1} parent=75 // pred_check
          %p496 = pneg %p264
        $region90: #{tpu_custom_call.1} parent=75 // pred_check_branch
          %498 = sbr.rel (%p496) target = $region92
        $region91: #{tpu_custom_call.1} parent=75 // pred_region
          %499 = dma.done [#allocation9], 16384
        $region92: #{tpu_custom_call.1} parent=75 // pred_fallthru
          _
        // Predicated region
        $region93: #{tpu_custom_call.1} parent=75 // pred_check
          %p500 = pneg %p306
        $region94: #{tpu_custom_call.1} parent=75 // pred_check_branch
          %502 = sbr.rel (%p500) target = $region96
        $region95: #{tpu_custom_call.1} parent=75 // pred_region
          %503 = dma.done [#allocation9], 16384
        $region96: #{tpu_custom_call.1} parent=75 // pred_fallthru
          _
        %s504 = sand.u32 %s41, 1
        %s505 = scalar_lea.sflag [#allocation3], %s504
        %s506 = sand.u32 %s41, 1
        %s507 = smul.addr %s506, 128
        %s508 = scalar_lea.vmem [#allocation2], %s507
        %p509 = pneg %p54
        %p510 = pneg %p51
        %p511 = pneg %p75
        %p512 = pneg %p72
        %p513 = pneg %p96
        %p514 = pneg %p93
        %p515 = pneg %p117
        %p516 = pneg %p114
        %p517 = pneg %p138
        %p518 = pneg %p135
        %p519 = pneg %p159
        %p520 = pneg %p156
        %p521 = pneg %p180
        %p522 = pneg %p177
        %p523 = pneg %p201
        %p524 = pneg %p198
        %p525 = pneg %p222
        %p526 = pneg %p219
        %p527 = pneg %p243
        %p528 = pneg %p240
        %p529 = pneg %p264
        %p530 = pneg %p261
        %p531 = pneg %p285
        %p532 = pneg %p282
        %p533 = pneg %p306
        %p534 = pneg %p303
        %p535 = pneg %p327
        %p536 = pneg %p324
        %p537 = pneg %p353
        %p538 = pneg %p350
        %s539 = sand.u32 %s340, 1
        %s540 = scalar_lea.sflag [#allocation4], %s539
        %s541 = sand.u32 %s340, 1
        %s542 = smul.addr %s541, 128
        %s543 = scalar_lea.vmem [#allocation11], %s542
        %v545 = vld [vmem:[%s483] sm:$0xff]
        %v546 = vld [vmem:[%s483 + $0x8] sm:$0xff]
        %v547 = vld [vmem:[%s483 + $0x10] sm:$0xff]
        %v548 = vld [vmem:[%s483 + $0x18] sm:$0xff]
        %v549 = vld [vmem:[%s483 + $0x20] sm:$0xff]
        %v550 = vld [vmem:[%s483 + $0x28] sm:$0xff]
        %v551 = vld [vmem:[%s483 + $0x30] sm:$0xff]
        %v552 = vld [vmem:[%s483 + $0x38] sm:$0xff]
        %v553 = vld [vmem:[%s483 + $0x40] sm:$0xff]
        %v554 = vld [vmem:[%s483 + $0x48] sm:$0xff]
        %v555 = vld [vmem:[%s483 + $0x50] sm:$0xff]
        %v556 = vld [vmem:[%s483 + $0x58] sm:$0xff]
        %v557 = vld [vmem:[%s483 + $0x60] sm:$0xff]
        %v558 = vld [vmem:[%s483 + $0x68] sm:$0xff]
        %v559 = vld [vmem:[%s483 + $0x70] sm:$0xff]
        %v560 = vld [vmem:[%s483 + $0x78] sm:$0xff]
        %v561 = vld [vmem:[%s5] sm:$0xff]
        %v562 = vld [vmem:[%s5 + $0x8] sm:$0xff]
        %v563 = vld [vmem:[%s5 + $0x10] sm:$0xff]
        %v564 = vld [vmem:[%s5 + $0x18] sm:$0xff]
        %v565 = vld [vmem:[%s5 + $0x20] sm:$0xff]
        %v566 = vld [vmem:[%s5 + $0x28] sm:$0xff]
        %v567 = vld [vmem:[%s5 + $0x30] sm:$0xff]
        %v568 = vld [vmem:[%s5 + $0x38] sm:$0xff]
        %v569 = vld [vmem:[%s5 + $0x40] sm:$0xff]
        %v570 = vld [vmem:[%s5 + $0x48] sm:$0xff]
        %v571 = vld [vmem:[%s5 + $0x50] sm:$0xff]
        %v572 = vld [vmem:[%s5 + $0x58] sm:$0xff]
        %v573 = vld [vmem:[%s5 + $0x60] sm:$0xff]
        %v574 = vld [vmem:[%s5 + $0x68] sm:$0xff]
        %v575 = vld [vmem:[%s5 + $0x70] sm:$0xff]
        %v576 = vld [vmem:[%s5 + $0x78] sm:$0xff]
        %v577 = vld [vmem:[%s5 + $0x80] sm:$0xff]
        %v578 = vld [vmem:[%s5 + $0x88] sm:$0xff]
        %v579 = vld [vmem:[%s5 + $0x90] sm:$0xff]
        %v580 = vld [vmem:[%s5 + $0x98] sm:$0xff]
        %v581 = vld [vmem:[%s5 + $0xa0] sm:$0xff]
        %v582 = vld [vmem:[%s5 + $0xa8] sm:$0xff]
        %v583 = vld [vmem:[%s5 + $0xb0] sm:$0xff]
        %v584 = vld [vmem:[%s5 + $0xb8] sm:$0xff]
        %v585 = vld [vmem:[%s5 + $0xc0] sm:$0xff]
        %v586 = vld [vmem:[%s5 + $0xc8] sm:$0xff]
        %v587 = vld [vmem:[%s5 + $0xd0] sm:$0xff]
        %v588 = vld [vmem:[%s5 + $0xd8] sm:$0xff]
        %v589 = vld [vmem:[%s5 + $0xe0] sm:$0xff]
        %v590 = vld [vmem:[%s5 + $0xe8] sm:$0xff]
        %v591 = vld [vmem:[%s5 + $0xf0] sm:$0xff]
        %v592 = vld [vmem:[%s5 + $0xf8] sm:$0xff]
        %v593 = vld [vmem:[%s5 + $0x100] sm:$0xff]
        %v594 = vld [vmem:[%s5 + $0x108] sm:$0xff]
        %v595 = vld [vmem:[%s5 + $0x110] sm:$0xff]
        %v596 = vld [vmem:[%s5 + $0x118] sm:$0xff]
        %v597 = vld [vmem:[%s5 + $0x120] sm:$0xff]
        %v598 = vld [vmem:[%s5 + $0x128] sm:$0xff]
        %v599 = vld [vmem:[%s5 + $0x130] sm:$0xff]
        %v600 = vld [vmem:[%s5 + $0x138] sm:$0xff]
        %v601 = vld [vmem:[%s5 + $0x140] sm:$0xff]
        %v602 = vld [vmem:[%s5 + $0x148] sm:$0xff]
        %v603 = vld [vmem:[%s5 + $0x150] sm:$0xff]
        %v604 = vld [vmem:[%s5 + $0x158] sm:$0xff]
        %v605 = vld [vmem:[%s5 + $0x160] sm:$0xff]
        %v606 = vld [vmem:[%s5 + $0x168] sm:$0xff]
        %v607 = vld [vmem:[%s5 + $0x170] sm:$0xff]
        %v608 = vld [vmem:[%s5 + $0x178] sm:$0xff]
        %v609 = vld [vmem:[%s5 + $0x180] sm:$0xff]
        %v610 = vld [vmem:[%s5 + $0x188] sm:$0xff]
        %v611 = vld [vmem:[%s5 + $0x190] sm:$0xff]
        %v612 = vld [vmem:[%s5 + $0x198] sm:$0xff]
        %v613 = vld [vmem:[%s5 + $0x1a0] sm:$0xff]
        %v614 = vld [vmem:[%s5 + $0x1a8] sm:$0xff]
        %v615 = vld [vmem:[%s5 + $0x1b0] sm:$0xff]
        %v616 = vld [vmem:[%s5 + $0x1b8] sm:$0xff]
        %v617 = vld [vmem:[%s5 + $0x1c0] sm:$0xff]
        %v618 = vld [vmem:[%s5 + $0x1c8] sm:$0xff]
        %v619 = vld [vmem:[%s5 + $0x1d0] sm:$0xff]
        %v620 = vld [vmem:[%s5 + $0x1d8] sm:$0xff]
        %v621 = vld [vmem:[%s5 + $0x1e0] sm:$0xff]
        %v622 = vld [vmem:[%s5 + $0x1e8] sm:$0xff]
        %v623 = vld [vmem:[%s5 + $0x1f0] sm:$0xff]
        %v624 = vld [vmem:[%s5 + $0x1f8] sm:$0xff]
        %v625 = vld [vmem:[%s6] sm:$0x3]
        %v626 = vld [vmem:[%s7] sm:$0x3]
        %627 = vmatprep.subr.mxu0 %v562
        %628 = vmatpush1.msra.mxu0 %v561
        %629 = vmatprep.subr.mxu0 %v564
        %630 = vmatpush1.msra.mxu0 %v563
        %631 = vmatprep.subr.mxu0 %v566
        %632 = vmatpush1.msra.mxu0 %v565
        %633 = vmatprep.subr.mxu0 %v568
        %634 = vmatpush1.msra.mxu0 %v567
        %635 = vmatprep.subr.mxu0 %v570
        %636 = vmatpush1.msra.mxu0 %v569
        %637 = vmatprep.subr.mxu0 %v572
        %638 = vmatpush1.msra.mxu0 %v571
        %639 = vmatprep.subr.mxu0 %v574
        %640 = vmatpush1.msra.mxu0 %v573
        %641 = vmatprep.subr.mxu0 %v576
        %642 = vmatpush1.msra.mxu0 %v575
        %643 = vmatprep.subr.mxu0 %v578
        %644 = vmatpush1.msra.mxu0 %v577
        %645 = vmatprep.subr.mxu0 %v580
        %646 = vmatpush1.msra.mxu0 %v579
        %647 = vmatprep.subr.mxu0 %v582
        %648 = vmatpush1.msra.mxu0 %v581
        %649 = vmatprep.subr.mxu0 %v584
        %650 = vmatpush1.msra.mxu0 %v583
        %651 = vmatprep.subr.mxu0 %v586
        %652 = vmatpush1.msra.mxu0 %v585
        %653 = vmatprep.subr.mxu0 %v588
        %654 = vmatpush1.msra.mxu0 %v587
        %655 = vmatprep.subr.mxu0 %v590
        %656 = vmatpush1.msra.mxu0 %v589
        %657 = vmatprep.subr.mxu0 %v592
        %658 = vmatpush1.msra.mxu0 %v591
        %659 = vmatprep.subr.mxu0 %v594
        %660 = vmatpush1.msra.mxu0 %v593
        %661 = vmatprep.subr.mxu0 %v596
        %662 = vmatpush1.msra.mxu0 %v595
        %663 = vmatprep.subr.mxu0 %v598
        %664 = vmatpush1.msra.mxu0 %v597
        %665 = vmatprep.subr.mxu0 %v600
        %666 = vmatpush1.msra.mxu0 %v599
        %667 = vmatprep.subr.mxu0 %v602
        %668 = vmatpush1.msra.mxu0 %v601
        %669 = vmatprep.subr.mxu0 %v604
        %670 = vmatpush1.msra.mxu0 %v603
        %671 = vmatprep.subr.mxu0 %v606
        %672 = vmatpush1.msra.mxu0 %v605
        %673 = vmatprep.subr.mxu0 %v608
        %674 = vmatpush1.msra.mxu0 %v607
        %675 = vmatprep.subr.mxu0 %v610
        %676 = vmatpush1.msra.mxu0 %v609
        %677 = vmatprep.subr.mxu0 %v612
        %678 = vmatpush1.msra.mxu0 %v611
        %679 = vmatprep.subr.mxu0 %v614
        %680 = vmatpush1.msra.mxu0 %v613
        %681 = vmatprep.subr.mxu0 %v616
        %682 = vmatpush1.msra.mxu0 %v615
        %683 = vmatprep.subr.mxu0 %v618
        %684 = vmatpush1.msra.mxu0 %v617
        %685 = vmatprep.subr.mxu0 %v620
        %686 = vmatpush1.msra.mxu0 %v619
        %687 = vmatprep.subr.mxu0 %v622
        %688 = vmatpush1.msra.mxu0 %v621
        %689 = vmatprep.subr.mxu0 %v624
        %690 = vmatpush1.msra.mxu0 %v623
        %691 = vmatprep.mubr.f32.mxu0 %v546
        %692 = vmatmul.mubr.f32.gmra.mrb[0].mxu0 %v545
        %v693 = vpop.f32.mrb[0].mxu0
        %v694 = vadd.f32 0.0, %v693
        %v695 = vpop.f32.mrb[0].mxu0
        %v696 = vadd.f32 0.0, %v695
        %697 = vmatprep.mubr.f32.mxu0 %v548
        %698 = vmatmul.mubr.f32.gmra.mrb[0].mxu0 %v547
        %v699 = vpop.f32.mrb[0].mxu0
        %v700 = vadd.f32 0.0, %v699
        %v701 = vpop.f32.mrb[0].mxu0
        %v702 = vadd.f32 0.0, %v701
        %703 = vmatprep.mubr.f32.mxu0 %v550
        %704 = vmatmul.mubr.f32.gmra.mrb[0].mxu0 %v549
        %v705 = vpop.f32.mrb[0].mxu0
        %v706 = vadd.f32 0.0, %v705
        %v707 = vpop.f32.mrb[0].mxu0
        %v708 = vadd.f32 0.0, %v707
        %709 = vmatprep.mubr.f32.mxu0 %v552
        %710 = vmatmul.mubr.f32.gmra.mrb[0].mxu0 %v551
        %v711 = vpop.f32.mrb[0].mxu0
        %v712 = vadd.f32 0.0, %v711
        %v713 = vpop.f32.mrb[0].mxu0
        %v714 = vadd.f32 0.0, %v713
        %715 = vmatprep.mubr.f32.mxu0 %v554
        %716 = vmatmul.mubr.f32.gmra.mrb[0].mxu0 %v553
        %v717 = vpop.f32.mrb[0].mxu0
        %v718 = vadd.f32 0.0, %v717
        %v719 = vpop.f32.mrb[0].mxu0
        %v720 = vadd.f32 0.0, %v719
        %721 = vmatprep.mubr.f32.mxu0 %v556
        %722 = vmatmul.mubr.f32.gmra.mrb[0].mxu0 %v555
        %v723 = vpop.f32.mrb[0].mxu0
        %v724 = vadd.f32 0.0, %v723
        %v725 = vpop.f32.mrb[0].mxu0
        %v726 = vadd.f32 0.0, %v725
        %727 = vmatprep.mubr.f32.mxu0 %v558
        %728 = vmatmul.mubr.f32.gmra.mrb[0].mxu0 %v557
        %v729 = vpop.f32.mrb[0].mxu0
        %v730 = vadd.f32 0.0, %v729
        %v731 = vpop.f32.mrb[0].mxu0
        %v732 = vadd.f32 0.0, %v731
        %733 = vmatprep.mubr.f32.mxu0 %v560
        %734 = vmatmul.mubr.f32.gmra.mrb[0].mxu0 %v559
        %v735 = vpop.f32.mrb[0].mxu0
        %v736 = vadd.f32 0.0, %v735
        %v737 = vpop.f32.mrb[0].mxu0
        %v738 = vadd.f32 0.0, %v737
        %739 = vdwg.mxu0
        %v740 = vsub.f32 %v545, %v694
        %v741 = vsub.f32 %v546, %v696
        %v742 = vsub.f32 %v547, %v700
        %v743 = vsub.f32 %v548, %v702
        %v744 = vsub.f32 %v549, %v706
        %v745 = vsub.f32 %v550, %v708
        %v746 = vsub.f32 %v551, %v712
        %v747 = vsub.f32 %v552, %v714
        %v748 = vsub.f32 %v553, %v718
        %v749 = vsub.f32 %v554, %v720
        %v750 = vsub.f32 %v555, %v724
        %v751 = vsub.f32 %v556, %v726
        %v752 = vsub.f32 %v557, %v730
        %v753 = vsub.f32 %v558, %v732
        %v754 = vsub.f32 %v559, %v736
        %v755 = vsub.f32 %v560, %v738
        %v756 = vmul.f32 %v740, %v740
        %v757 = vmul.f32 %v741, %v741
        %v758 = vmul.f32 %v742, %v742
        %v759 = vmul.f32 %v743, %v743
        %v760 = vmul.f32 %v744, %v744
        %v761 = vmul.f32 %v745, %v745
        %v762 = vmul.f32 %v746, %v746
        %v763 = vmul.f32 %v747, %v747
        %v764 = vmul.f32 %v748, %v748
        %v765 = vmul.f32 %v749, %v749
        %v766 = vmul.f32 %v750, %v750
        %v767 = vmul.f32 %v751, %v751
        %v768 = vmul.f32 %v752, %v752
        %v769 = vmul.f32 %v753, %v753
        %v770 = vmul.f32 %v754, %v754
        %v771 = vmul.f32 %v755, %v755
        %772 = vmatprep.subr.mxu0 %v562
        %773 = vmatpush1.msra.mxu0 %v561
        %774 = vmatprep.subr.mxu0 %v564
        %775 = vmatpush1.msra.mxu0 %v563
        %776 = vmatprep.subr.mxu0 %v566
        %777 = vmatpush1.msra.mxu0 %v565
        %778 = vmatprep.subr.mxu0 %v568
        %779 = vmatpush1.msra.mxu0 %v567
        %780 = vmatprep.subr.mxu0 %v570
        %781 = vmatpush1.msra.mxu0 %v569
        %782 = vmatprep.subr.mxu0 %v572
        %783 = vmatpush1.msra.mxu0 %v571
        %784 = vmatprep.subr.mxu0 %v574
        %785 = vmatpush1.msra.mxu0 %v573
        %786 = vmatprep.subr.mxu0 %v576
        %787 = vmatpush1.msra.mxu0 %v575
        %788 = vmatprep.subr.mxu0 %v578
        %789 = vmatpush1.msra.mxu0 %v577
        %790 = vmatprep.subr.mxu0 %v580
        %791 = vmatpush1.msra.mxu0 %v579
        %792 = vmatprep.subr.mxu0 %v582
        %793 = vmatpush1.msra.mxu0 %v581
        %794 = vmatprep.subr.mxu0 %v584
        %795 = vmatpush1.msra.mxu0 %v583
        %796 = vmatprep.subr.mxu0 %v586
        %797 = vmatpush1.msra.mxu0 %v585
        %798 = vmatprep.subr.mxu0 %v588
        %799 = vmatpush1.msra.mxu0 %v587
        %800 = vmatprep.subr.mxu0 %v590
        %801 = vmatpush1.msra.mxu0 %v589
        %802 = vmatprep.subr.mxu0 %v592
        %803 = vmatpush1.msra.mxu0 %v591
        %804 = vmatprep.subr.mxu0 %v594
        %805 = vmatpush1.msra.mxu0 %v593
        %806 = vmatprep.subr.mxu0 %v596
        %807 = vmatpush1.msra.mxu0 %v595
        %808 = vmatprep.subr.mxu0 %v598
        %809 = vmatpush1.msra.mxu0 %v597
        %810 = vmatprep.subr.mxu0 %v600
        %811 = vmatpush1.msra.mxu0 %v599
        %812 = vmatprep.subr.mxu0 %v602
        %813 = vmatpush1.msra.mxu0 %v601
        %814 = vmatprep.subr.mxu0 %v604
        %815 = vmatpush1.msra.mxu0 %v603
        %816 = vmatprep.subr.mxu0 %v606
        %817 = vmatpush1.msra.mxu0 %v605
        %818 = vmatprep.subr.mxu0 %v608
        %819 = vmatpush1.msra.mxu0 %v607
        %820 = vmatprep.subr.mxu0 %v610
        %821 = vmatpush1.msra.mxu0 %v609
        %822 = vmatprep.subr.mxu0 %v612
        %823 = vmatpush1.msra.mxu0 %v611
        %824 = vmatprep.subr.mxu0 %v614
        %825 = vmatpush1.msra.mxu0 %v613
        %826 = vmatprep.subr.mxu0 %v616
        %827 = vmatpush1.msra.mxu0 %v615
        %828 = vmatprep.subr.mxu0 %v618
        %829 = vmatpush1.msra.mxu0 %v617
        %830 = vmatprep.subr.mxu0 %v620
        %831 = vmatpush1.msra.mxu0 %v619
        %832 = vmatprep.subr.mxu0 %v622
        %833 = vmatpush1.msra.mxu0 %v621
        %834 = vmatprep.subr.mxu0 %v624
        %835 = vmatpush1.msra.mxu0 %v623
        %836 = vmatprep.mubr.f32.mxu0 %v757
        %837 = vmatmul.mubr.f32.gmra.mrb[0].mxu0 %v756
        %v838 = vpop.f32.mrb[0].mxu0
        %v839 = vadd.f32 1e-05, %v838
        %v840 = vpop.f32.mrb[0].mxu0
        %v841 = vadd.f32 1e-05, %v840
        %842 = vmatprep.mubr.f32.mxu0 %v759
        %843 = vmatmul.mubr.f32.gmra.mrb[0].mxu0 %v758
        %v844 = vpop.f32.mrb[0].mxu0
        %v845 = vadd.f32 1e-05, %v844
        %v846 = vpop.f32.mrb[0].mxu0
        %v847 = vadd.f32 1e-05, %v846
        %848 = vmatprep.mubr.f32.mxu0 %v761
        %849 = vmatmul.mubr.f32.gmra.mrb[0].mxu0 %v760
        %v850 = vpop.f32.mrb[0].mxu0
        %v851 = vadd.f32 1e-05, %v850
        %v852 = vpop.f32.mrb[0].mxu0
        %v853 = vadd.f32 1e-05, %v852
        %854 = vmatprep.mubr.f32.mxu0 %v763
        %855 = vmatmul.mubr.f32.gmra.mrb[0].mxu0 %v762
        %v856 = vpop.f32.mrb[0].mxu0
        %v857 = vadd.f32 1e-05, %v856
        %v858 = vpop.f32.mrb[0].mxu0
        %v859 = vadd.f32 1e-05, %v858
        %860 = vmatprep.mubr.f32.mxu0 %v765
        %861 = vmatmul.mubr.f32.gmra.mrb[0].mxu0 %v764
        %v862 = vpop.f32.mrb[0].mxu0
        %v863 = vadd.f32 1e-05, %v862
        %v864 = vpop.f32.mrb[0].mxu0
        %v865 = vadd.f32 1e-05, %v864
        %866 = vmatprep.mubr.f32.mxu0 %v767
        %867 = vmatmul.mubr.f32.gmra.mrb[0].mxu0 %v766
        %v868 = vpop.f32.mrb[0].mxu0
        %v869 = vadd.f32 1e-05, %v868
        %v870 = vpop.f32.mrb[0].mxu0
        %v871 = vadd.f32 1e-05, %v870
        %872 = vmatprep.mubr.f32.mxu0 %v769
        %873 = vmatmul.mubr.f32.gmra.mrb[0].mxu0 %v768
        %v874 = vpop.f32.mrb[0].mxu0
        %v875 = vadd.f32 1e-05, %v874
        %v876 = vpop.f32.mrb[0].mxu0
        %v877 = vadd.f32 1e-05, %v876
        %878 = vmatprep.mubr.f32.mxu0 %v771
        %879 = vmatmul.mubr.f32.gmra.mrb[0].mxu0 %v770
        %v880 = vpop.f32.mrb[0].mxu0
        %v881 = vadd.f32 1e-05, %v880
        %v882 = vpop.f32.mrb[0].mxu0
        %v883 = vadd.f32 1e-05, %v882
        %884 = vdwg.mxu0
        %v885 = vrsqrt.pop %v839
        %v886 = vrsqrt.pop %v841
        %v887 = vrsqrt.pop %v845
        %v888 = vrsqrt.pop %v847
        %v889 = vrsqrt.pop %v851
        %v890 = vrsqrt.pop %v853
        %v891 = vrsqrt.pop %v857
        %v892 = vrsqrt.pop %v859
        %v893 = vrsqrt.pop %v863
        %v894 = vrsqrt.pop %v865
        %v895 = vrsqrt.pop %v869
        %v896 = vrsqrt.pop %v871
        %v897 = vrsqrt.pop %v875
        %v898 = vrsqrt.pop %v877
        %v899 = vrsqrt.pop %v881
        %v900 = vrsqrt.pop %v883
        %v901 = vmul.f32 %v740, %v885
        %v902 = vmul.f32 %v741, %v886
        %v903 = vmul.f32 %v742, %v887
        %v904 = vmul.f32 %v743, %v888
        %v905 = vmul.f32 %v744, %v889
        %v906 = vmul.f32 %v745, %v890
        %v907 = vmul.f32 %v746, %v891
        %v908 = vmul.f32 %v747, %v892
        %v909 = vmul.f32 %v748, %v893
        %v910 = vmul.f32 %v749, %v894
        %v911 = vmul.f32 %v750, %v895
        %v912 = vmul.f32 %v751, %v896
        %v913 = vmul.f32 %v752, %v897
        %v914 = vmul.f32 %v753, %v898
        %v915 = vmul.f32 %v754, %v899
        %v916 = vmul.f32 %v755, %v900
        %v918 = vlaneseq
        %v919 = vshrl.u32 %v918, 7
        %v920 = vsub.s32 0, %v919
        %v921 = vrot.slane %v625, %v920
        %v922 = vlaneseq
        %v923 = vshrl.u32 %v922, 7
        %v924 = vsub.s32 1, %v923
        %v925 = vrot.slane %v625, %v924
        %v928 = vmul.f32 %v901, %v921
        %v929 = vmul.f32 %v902, %v925
        %v930 = vmul.f32 %v903, %v921
        %v931 = vmul.f32 %v904, %v925
        %v932 = vmul.f32 %v905, %v921
        %v933 = vmul.f32 %v906, %v925
        %v934 = vmul.f32 %v907, %v921
        %v935 = vmul.f32 %v908, %v925
        %v936 = vmul.f32 %v909, %v921
        %v937 = vmul.f32 %v910, %v925
        %v938 = vmul.f32 %v911, %v921
        %v939 = vmul.f32 %v912, %v925
        %v940 = vmul.f32 %v913, %v921
        %v941 = vmul.f32 %v914, %v925
        %v942 = vmul.f32 %v915, %v921
        %v943 = vmul.f32 %v916, %v925
        %v945 = vlaneseq
        %v946 = vshrl.u32 %v945, 7
        %v947 = vsub.s32 0, %v946
        %v948 = vrot.slane %v626, %v947
        %v949 = vlaneseq
        %v950 = vshrl.u32 %v949, 7
        %v951 = vsub.s32 1, %v950
        %v952 = vrot.slane %v626, %v951
        %v955 = vadd.f32 %v928, %v948
        %v956 = vadd.f32 %v929, %v952
        %v957 = vadd.f32 %v930, %v948
        %v958 = vadd.f32 %v931, %v952
        %v959 = vadd.f32 %v932, %v948
        %v960 = vadd.f32 %v933, %v952
        %v961 = vadd.f32 %v934, %v948
        %v962 = vadd.f32 %v935, %v952
        %v963 = vadd.f32 %v936, %v948
        %v964 = vadd.f32 %v937, %v952
        %v965 = vadd.f32 %v938, %v948
        %v966 = vadd.f32 %v939, %v952
        %v967 = vadd.f32 %v940, %v948
        %v968 = vadd.f32 %v941, %v952
        %v969 = vadd.f32 %v942, %v948
        %v970 = vadd.f32 %v943, %v952
        %v971 = vld [vmem:[%s1] sm:$0xf]
        %v972 = vld [vmem:[%s1 + $0x4] sm:$0xf]
        %v973 = vld [vmem:[%s1 + $0x8] sm:$0xf]
        %v974 = vld [vmem:[%s1 + $0xc] sm:$0xf]
        %v975 = vld [vmem:[%s1 + $0x10] sm:$0xf]
        %v976 = vld [vmem:[%s1 + $0x14] sm:$0xf]
        %v977 = vld [vmem:[%s1 + $0x18] sm:$0xf]
        %v978 = vld [vmem:[%s1 + $0x1c] sm:$0xf]
        %v979 = vld [vmem:[%s1 + $0x20] sm:$0xf]
        %v980 = vld [vmem:[%s1 + $0x24] sm:$0xf]
        %v981 = vpack.c.bf16 %v957, %v955
        %v982 = vpack.c.bf16 %v958, %v956
        %v983 = vpack.c.bf16 %v961, %v959
        %v984 = vpack.c.bf16 %v962, %v960
        %v985 = vpack.c.bf16 %v965, %v963
        %v986 = vpack.c.bf16 %v966, %v964
        %v987 = vpack.c.bf16 %v969, %v967
        %v988 = vpack.c.bf16 %v970, %v968
        %v999 = vunpack.c.l.b16 %v971
        %v1000 = vunpack.c.l.b16 %v972
        %v1001 = vunpack.c.l.b16 %v973
        %v1002 = vunpack.c.l.b16 %v974
        %v1003 = vunpack.c.l.b16 %v975
        %v1004 = vunpack.c.l.b16 %v976
        %v1005 = vunpack.c.l.b16 %v977
        %v1006 = vunpack.c.l.b16 %v978
        %v1007 = vunpack.c.l.b16 %v979
        %v1008 = vunpack.c.l.b16 %v980
        %v1009 = vpack.c.b16 %v1000, %v999
        %v1010 = vpack.c.b16 %v1002, %v1001
        %v1011 = vpack.c.b16 %v1004, %v1003
        %v1012 = vpack.c.b16 %v1006, %v1005
        %v1013 = vpack.c.b16 %v1008, %v1007
        %vm1014 = vcmask 523264
        %v1016 = vsel %vm1014, %v1009, 0
        %v1019 = vsel %vm1014, %v1010, 0
        %v1022 = vsel %vm1014, %v1011, 0
        %v1025 = vsel %vm1014, %v1012, 0
        %v1028 = vsel %vm1014, %v1013, 0
        %1030 = vmatprep.subr.bf16.mxu0 %v982
        %1031 = vmatpush1.bf16.msra.mxu0 %v981
        %1032 = vmatprep.subr.bf16.mxu0 %v984
        %1033 = vmatpush1.bf16.msra.mxu0 %v983
        %1034 = vmatprep.subr.bf16.mxu0 %v986
        %1035 = vmatpush1.bf16.msra.mxu0 %v985
        %1036 = vmatprep.subr.bf16.mxu0 %v988
        %1037 = vmatpush1.bf16.msra.mxu0 %v987
        %1038 = vmatprep.subr.bf16.mxu0 0
        %1039 = vmatpush1.bf16.msra.mxu0 0
        %1040 = vmatprep.subr.bf16.mxu0 0
        %1041 = vmatpush1.bf16.msra.mxu0 0
        %1042 = vmatprep.subr.bf16.mxu0 0
        %1043 = vmatpush1.bf16.msra.mxu0 0
        %1044 = vmatprep.subr.bf16.mxu0 0
        %1045 = vmatpush1.bf16.msra.mxu0 0
        %1046 = vmatprep.subr.bf16.mxu0 0
        %1047 = vmatpush1.bf16.msra.mxu0 0
        %1048 = vmatprep.subr.bf16.mxu0 0
        %1049 = vmatpush1.bf16.msra.mxu0 0
        %1050 = vmatprep.subr.bf16.mxu0 0
        %1051 = vmatpush1.bf16.msra.mxu0 0
        %1052 = vmatprep.subr.bf16.mxu0 0
        %1053 = vmatpush1.bf16.msra.mxu0 0
        %1054 = vmatprep.subr.bf16.mxu0 0
        %1055 = vmatpush1.bf16.msra.mxu0 0
        %1056 = vmatprep.subr.bf16.mxu0 0
        %1057 = vmatpush1.bf16.msra.mxu0 0
        %1058 = vmatprep.subr.bf16.mxu0 0
        %1059 = vmatpush1.bf16.msra.mxu0 0
        %1060 = vmatprep.subr.bf16.mxu0 0
        %1061 = vmatpush1.bf16.msra.mxu0 0
        %1062 = vmatprep.mubr.bf16.mxu0 0
        %1063 = vmatmul.mubr.bf16.gmra.mrb[0].mxu0 %v1016
        %v1064 = vpop.f32.mrb[0].mxu0
        %v1065 = vadd.f32 0.0, %v1064
        %v1066 = vpop.f32.mrb[0].mxu0
        %v1067 = vadd.f32 0.0, %v1066
        %v1068 = vpop.f32.mrb[0].mxu0
        %v1069 = vadd.f32 0.0, %v1068
        %v1070 = vpop.f32.mrb[0].mxu0
        %v1071 = vadd.f32 0.0, %v1070
        %1072 = vmatprep.mubr.bf16.mxu0 0
        %1073 = vmatmul.mubr.bf16.gmra.mrb[0].mxu0 %v1019
        %v1074 = vpop.f32.mrb[0].mxu0
        %v1075 = vadd.f32 0.0, %v1074
        %v1076 = vpop.f32.mrb[0].mxu0
        %v1077 = vadd.f32 0.0, %v1076
        %v1078 = vpop.f32.mrb[0].mxu0
        %v1079 = vadd.f32 0.0, %v1078
        %v1080 = vpop.f32.mrb[0].mxu0
        %v1081 = vadd.f32 0.0, %v1080
        %1082 = vmatprep.mubr.bf16.mxu0 0
        %1083 = vmatmul.mubr.bf16.gmra.mrb[0].mxu0 %v1022
        %v1084 = vpop.f32.mrb[0].mxu0
        %v1085 = vadd.f32 0.0, %v1084
        %v1086 = vpop.f32.mrb[0].mxu0
        %v1087 = vadd.f32 0.0, %v1086
        %v1088 = vpop.f32.mrb[0].mxu0
        %v1089 = vadd.f32 0.0, %v1088
        %v1090 = vpop.f32.mrb[0].mxu0
        %v1091 = vadd.f32 0.0, %v1090
        %1092 = vmatprep.mubr.bf16.mxu0 0
        %1093 = vmatmul.mubr.bf16.gmra.mrb[0].mxu0 %v1025
        %v1094 = vpop.f32.mrb[0].mxu0
        %v1095 = vadd.f32 0.0, %v1094
        %v1096 = vpop.f32.mrb[0].mxu0
        %v1097 = vadd.f32 0.0, %v1096
        %v1098 = vpop.f32.mrb[0].mxu0
        %v1099 = vadd.f32 0.0, %v1098
        %v1100 = vpop.f32.mrb[0].mxu0
        %v1101 = vadd.f32 0.0, %v1100
        %1102 = vmatprep.mubr.bf16.mxu0 0
        %1103 = vmatmul.mubr.bf16.gmra.mrb[0].mxu0 %v1028
        %v1104 = vpop.f32.mrb[0].mxu0
        %v1105 = vadd.f32 0.0, %v1104
        %v1106 = vpop.f32.mrb[0].mxu0
        %v1107 = vadd.f32 0.0, %v1106
        %v1108 = vpop.f32.mrb[0].mxu0
        %v1109 = vadd.f32 0.0, %v1108
        %v1110 = vpop.f32.mrb[0].mxu0
        %v1111 = vadd.f32 0.0, %v1110
        %1112 = vdwg.mxu0
        %v1113 = vld [vmem:[%s3] sm:$0xff]
        %v1114 = vld [vmem:[%s3 + $0x8] sm:$0xff]
        %v1115 = vld [vmem:[%s3 + $0x10] sm:$0xff]
        %v1116 = vld [vmem:[%s3 + $0x18] sm:$0xff]
        %v1117 = vld [vmem:[%s3 + $0x20] sm:$0xff]
        %v1118 = vld [vmem:[%s3 + $0x28] sm:$0xff]
        %v1119 = vld [vmem:[%s3 + $0x30] sm:$0xff]
        %v1120 = vld [vmem:[%s3 + $0x38] sm:$0xff]
        %v1121 = vld [vmem:[%s3 + $0x40] sm:$0xff]
        %v1122 = vld [vmem:[%s3 + $0x48] sm:$0xff]
        %v1123 = vld [vmem:[#allocation7] sm:$0xff]
        %v1124 = vld [vmem:[#allocation7 + $0x8] sm:$0xff]
        %v1125 = vld [vmem:[#allocation7 + $0x10] sm:$0xff]
        %v1126 = vld [vmem:[#allocation7 + $0x18] sm:$0xff]
        %v1127 = vld [vmem:[#allocation7 + $0x20] sm:$0xff]
        %v1128 = vld [vmem:[#allocation7 + $0x28] sm:$0xff]
        %v1129 = vld [vmem:[#allocation7 + $0x30] sm:$0xff]
        %v1130 = vld [vmem:[#allocation7 + $0x38] sm:$0xff]
        %v1131 = vld [vmem:[#allocation7 + $0x40] sm:$0xff]
        %v1132 = vld [vmem:[#allocation7 + $0x48] sm:$0xff]
        %v1133 = vmul.f32 %v1065, %v1113
        %v1134 = vmul.f32 %v1067, %v1114
        %v1135 = vmul.f32 %v1069, %v1115
        %v1136 = vmul.f32 %v1071, %v1116
        %v1137 = vmul.f32 %v1075, %v1117
        %v1138 = vmul.f32 %v1077, %v1118
        %v1139 = vmul.f32 %v1079, %v1119
        %v1140 = vmul.f32 %v1081, %v1120
        %v1141 = vmul.f32 %v1085, %v1121
        %v1142 = vmul.f32 %v1087, %v1122
        %v1143 = vmul.f32 %v1089, %v1123
        %v1144 = vmul.f32 %v1091, %v1124
        %v1145 = vmul.f32 %v1095, %v1125
        %v1146 = vmul.f32 %v1097, %v1126
        %v1147 = vmul.f32 %v1099, %v1127
        %v1148 = vmul.f32 %v1101, %v1128
        %v1149 = vmul.f32 %v1105, %v1129
        %v1150 = vmul.f32 %v1107, %v1130
        %v1151 = vmul.f32 %v1109, %v1131
        %v1152 = vmul.f32 %v1111, %v1132
        %v1153 = vsub.f32 %v1133, %v1143
        %v1154 = vsub.f32 %v1134, %v1144
        %v1155 = vsub.f32 %v1135, %v1145
        %v1156 = vsub.f32 %v1136, %v1146
        %v1157 = vsub.f32 %v1137, %v1147
        %v1158 = vsub.f32 %v1138, %v1148
        %v1159 = vsub.f32 %v1139, %v1149
        %v1160 = vsub.f32 %v1140, %v1150
        %v1161 = vsub.f32 %v1141, %v1151
        %v1162 = vsub.f32 %v1142, %v1152
        %v1163 = vmul.f32 %v1065, %v1123
        %v1164 = vmul.f32 %v1067, %v1124
        %v1165 = vmul.f32 %v1069, %v1125
        %v1166 = vmul.f32 %v1071, %v1126
        %v1167 = vmul.f32 %v1075, %v1127
        %v1168 = vmul.f32 %v1077, %v1128
        %v1169 = vmul.f32 %v1079, %v1129
        %v1170 = vmul.f32 %v1081, %v1130
        %v1171 = vmul.f32 %v1085, %v1131
        %v1172 = vmul.f32 %v1087, %v1132
        %v1173 = vmul.f32 %v1089, %v1113
        %v1174 = vmul.f32 %v1091, %v1114
        %v1175 = vmul.f32 %v1095, %v1115
        %v1176 = vmul.f32 %v1097, %v1116
        %v1177 = vmul.f32 %v1099, %v1117
        %v1178 = vmul.f32 %v1101, %v1118
        %v1179 = vmul.f32 %v1105, %v1119
        %v1180 = vmul.f32 %v1107, %v1120
        %v1181 = vmul.f32 %v1109, %v1121
        %v1182 = vmul.f32 %v1111, %v1122
        %v1183 = vadd.f32 %v1163, %v1173
        %v1184 = vadd.f32 %v1164, %v1174
        %v1185 = vadd.f32 %v1165, %v1175
        %v1186 = vadd.f32 %v1166, %v1176
        %v1187 = vadd.f32 %v1167, %v1177
        %v1188 = vadd.f32 %v1168, %v1178
        %v1189 = vadd.f32 %v1169, %v1179
        %v1190 = vadd.f32 %v1170, %v1180
        %v1191 = vadd.f32 %v1171, %v1181
        %v1192 = vadd.f32 %v1172, %v1182
        %v1193 = vpack.c.bf16 %v1155, %v1153
        %v1194 = vpack.c.bf16 %v1156, %v1154
        %v1195 = vpack.c.bf16 %v1159, %v1157
        %v1196 = vpack.c.bf16 %v1160, %v1158
        %v1197 = vpack.c.bf16 %v1183, %v1161
        %v1198 = vpack.c.bf16 %v1184, %v1162
        %v1199 = vpack.c.bf16 %v1187, %v1185
        %v1200 = vpack.c.bf16 %v1188, %v1186
        %v1201 = vpack.c.bf16 %v1191, %v1189
        %v1202 = vpack.c.bf16 %v1192, %v1190
        %v1203 = vld [vmem:[#allocation5] sm:$0xf]
        %v1204 = vld [vmem:[#allocation5 + $0x4] sm:$0xf]
        %v1205 = vld [vmem:[#allocation5 + $0x8] sm:$0xf]
        %v1206 = vld [vmem:[#allocation5 + $0xc] sm:$0xf]
        %v1207 = vld [vmem:[#allocation5 + $0x10] sm:$0xf]
        %v1208 = vld [vmem:[#allocation5 + $0x14] sm:$0xf]
        %v1209 = vld [vmem:[#allocation5 + $0x18] sm:$0xf]
        %v1210 = vld [vmem:[#allocation5 + $0x1c] sm:$0xf]
        %v1219 = vunpack.c.l.b16 %v1203
        %v1220 = vunpack.c.l.b16 %v1204
        %v1221 = vunpack.c.l.b16 %v1205
        %v1222 = vunpack.c.l.b16 %v1206
        %v1223 = vunpack.c.l.b16 %v1207
        %v1224 = vunpack.c.l.b16 %v1208
        %v1225 = vunpack.c.l.b16 %v1209
        %v1226 = vunpack.c.l.b16 %v1210
        %v1227 = vpack.c.b16 %v1220, %v1219
        %v1228 = vpack.c.b16 %v1222, %v1221
        %v1229 = vpack.c.b16 %v1224, %v1223
        %v1230 = vpack.c.b16 %v1226, %v1225
        %vm1231 = vcmask 654336
        %v1233 = vsel %vm1231, %v1227, 0
        %v1236 = vsel %vm1231, %v1228, 0
        %v1239 = vsel %vm1231, %v1229, 0
        %v1242 = vsel %vm1231, %v1230, 0
        %1244 = vmatprep.subr.bf16.mxu0 %v1194
        %1245 = vmatpush1.bf16.msra.mxu0 %v1193
        %1246 = vmatprep.subr.bf16.mxu0 %v1196
        %1247 = vmatpush1.bf16.msra.mxu0 %v1195
        %1248 = vmatprep.subr.bf16.mxu0 %v1198
        %1249 = vmatpush1.bf16.msra.mxu0 %v1197
        %1250 = vmatprep.subr.bf16.mxu0 %v1200
        %1251 = vmatpush1.bf16.msra.mxu0 %v1199
        %1252 = vmatprep.subr.bf16.mxu0 %v1202
        %1253 = vmatpush1.bf16.msra.mxu0 %v1201
        %1254 = vmatprep.subr.bf16.mxu0 0
        %1255 = vmatpush1.bf16.msra.mxu0 0
        %1256 = vmatprep.subr.bf16.mxu0 0
        %1257 = vmatpush1.bf16.msra.mxu0 0
        %1258 = vmatprep.subr.bf16.mxu0 0
        %1259 = vmatpush1.bf16.msra.mxu0 0
        %1260 = vmatprep.subr.bf16.mxu0 0
        %1261 = vmatpush1.bf16.msra.mxu0 0
        %1262 = vmatprep.subr.bf16.mxu0 0
        %1263 = vmatpush1.bf16.msra.mxu0 0
        %1264 = vmatprep.subr.bf16.mxu0 0
        %1265 = vmatpush1.bf16.msra.mxu0 0
        %1266 = vmatprep.subr.bf16.mxu0 0
        %1267 = vmatpush1.bf16.msra.mxu0 0
        %1268 = vmatprep.subr.bf16.mxu0 0
        %1269 = vmatpush1.bf16.msra.mxu0 0
        %1270 = vmatprep.subr.bf16.mxu0 0
        %1271 = vmatpush1.bf16.msra.mxu0 0
        %1272 = vmatprep.subr.bf16.mxu0 0
        %1273 = vmatpush1.bf16.msra.mxu0 0
        %1274 = vmatprep.subr.bf16.mxu0 0
        %1275 = vmatpush1.bf16.msra.mxu0 0
        %1276 = vmatprep.mubr.bf16.mxu0 0
        %1277 = vmatmul.mubr.bf16.gmra.mrb[0].mxu0 %v1233
        %v1278 = vpop.f32.mrb[0].mxu0
        %v1279 = vadd.f32 0.0, %v1278
        %v1280 = vpop.f32.mrb[0].mxu0
        %v1281 = vadd.f32 0.0, %v1280
        %v1282 = vpop.f32.mrb[0].mxu0
        %v1283 = vadd.f32 0.0, %v1282
        %v1284 = vpop.f32.mrb[0].mxu0
        %v1285 = vadd.f32 0.0, %v1284
        %1286 = vmatprep.mubr.bf16.mxu0 0
        %1287 = vmatmul.mubr.bf16.gmra.mrb[0].mxu0 %v1236
        %v1288 = vpop.f32.mrb[0].mxu0
        %v1289 = vadd.f32 0.0, %v1288
        %v1290 = vpop.f32.mrb[0].mxu0
        %v1291 = vadd.f32 0.0, %v1290
        %v1292 = vpop.f32.mrb[0].mxu0
        %v1293 = vadd.f32 0.0, %v1292
        %v1294 = vpop.f32.mrb[0].mxu0
        %v1295 = vadd.f32 0.0, %v1294
        %1296 = vmatprep.mubr.bf16.mxu0 0
        %1297 = vmatmul.mubr.bf16.gmra.mrb[0].mxu0 %v1239
        %v1298 = vpop.f32.mrb[0].mxu0
        %v1299 = vadd.f32 0.0, %v1298
        %v1300 = vpop.f32.mrb[0].mxu0
        %v1301 = vadd.f32 0.0, %v1300
        %v1302 = vpop.f32.mrb[0].mxu0
        %v1303 = vadd.f32 0.0, %v1302
        %v1304 = vpop.f32.mrb[0].mxu0
        %v1305 = vadd.f32 0.0, %v1304
        %1306 = vmatprep.mubr.bf16.mxu0 0
        %1307 = vmatmul.mubr.bf16.gmra.mrb[0].mxu0 %v1242
        %v1308 = vpop.f32.mrb[0].mxu0
        %v1309 = vadd.f32 0.0, %v1308
        %v1310 = vpop.f32.mrb[0].mxu0
        %v1311 = vadd.f32 0.0, %v1310
        %v1312 = vpop.f32.mrb[0].mxu0
        %v1313 = vadd.f32 0.0, %v1312
        %v1314 = vpop.f32.mrb[0].mxu0
        %v1315 = vadd.f32 0.0, %v1314
        %1316 = vdwg.mxu0
        %v1317 = vld [vmem:[%s8] sm:$0x3]
        %v1318 = vld [vmem:[%s9] sm:$0x3]
        %1319 = vmatprep.subr.mxu0 %v562
        %1320 = vmatpush1.msra.mxu0 %v561
        %1321 = vmatprep.subr.mxu0 %v564
        %1322 = vmatpush1.msra.mxu0 %v563
        %1323 = vmatprep.subr.mxu0 %v566
        %1324 = vmatpush1.msra.mxu0 %v565
        %1325 = vmatprep.subr.mxu0 %v568
        %1326 = vmatpush1.msra.mxu0 %v567
        %1327 = vmatprep.subr.mxu0 %v570
        %1328 = vmatpush1.msra.mxu0 %v569
        %1329 = vmatprep.subr.mxu0 %v572
        %1330 = vmatpush1.msra.mxu0 %v571
        %1331 = vmatprep.subr.mxu0 %v574
        %1332 = vmatpush1.msra.mxu0 %v573
        %1333 = vmatprep.subr.mxu0 %v576
        %1334 = vmatpush1.msra.mxu0 %v575
        %1335 = vmatprep.subr.mxu0 %v578
        %1336 = vmatpush1.msra.mxu0 %v577
        %1337 = vmatprep.subr.mxu0 %v580
        %1338 = vmatpush1.msra.mxu0 %v579
        %1339 = vmatprep.subr.mxu0 %v582
        %1340 = vmatpush1.msra.mxu0 %v581
        %1341 = vmatprep.subr.mxu0 %v584
        %1342 = vmatpush1.msra.mxu0 %v583
        %1343 = vmatprep.subr.mxu0 %v586
        %1344 = vmatpush1.msra.mxu0 %v585
        %1345 = vmatprep.subr.mxu0 %v588
        %1346 = vmatpush1.msra.mxu0 %v587
        %1347 = vmatprep.subr.mxu0 %v590
        %1348 = vmatpush1.msra.mxu0 %v589
        %1349 = vmatprep.subr.mxu0 %v592
        %1350 = vmatpush1.msra.mxu0 %v591
        %1351 = vmatprep.subr.mxu0 %v594
        %1352 = vmatpush1.msra.mxu0 %v593
        %1353 = vmatprep.subr.mxu0 %v596
        %1354 = vmatpush1.msra.mxu0 %v595
        %1355 = vmatprep.subr.mxu0 %v598
        %1356 = vmatpush1.msra.mxu0 %v597
        %1357 = vmatprep.subr.mxu0 %v600
        %1358 = vmatpush1.msra.mxu0 %v599
        %1359 = vmatprep.subr.mxu0 %v602
        %1360 = vmatpush1.msra.mxu0 %v601
        %1361 = vmatprep.subr.mxu0 %v604
        %1362 = vmatpush1.msra.mxu0 %v603
        %1363 = vmatprep.subr.mxu0 %v606
        %1364 = vmatpush1.msra.mxu0 %v605
        %1365 = vmatprep.subr.mxu0 %v608
        %1366 = vmatpush1.msra.mxu0 %v607
        %1367 = vmatprep.subr.mxu0 %v610
        %1368 = vmatpush1.msra.mxu0 %v609
        %1369 = vmatprep.subr.mxu0 %v612
        %1370 = vmatpush1.msra.mxu0 %v611
        %1371 = vmatprep.subr.mxu0 %v614
        %1372 = vmatpush1.msra.mxu0 %v613
        %1373 = vmatprep.subr.mxu0 %v616
        %1374 = vmatpush1.msra.mxu0 %v615
        %1375 = vmatprep.subr.mxu0 %v618
        %1376 = vmatpush1.msra.mxu0 %v617
        %1377 = vmatprep.subr.mxu0 %v620
        %1378 = vmatpush1.msra.mxu0 %v619
        %1379 = vmatprep.subr.mxu0 %v622
        %1380 = vmatpush1.msra.mxu0 %v621
        %1381 = vmatprep.subr.mxu0 %v624
        %1382 = vmatpush1.msra.mxu0 %v623
        %1383 = vmatprep.mubr.f32.mxu0 %v1281
        %1384 = vmatmul.mubr.f32.gmra.mrb[0].mxu0 %v1279
        %v1385 = vpop.f32.mrb[0].mxu0
        %v1386 = vadd.f32 0.0, %v1385
        %v1387 = vpop.f32.mrb[0].mxu0
        %v1388 = vadd.f32 0.0, %v1387
        %1389 = vmatprep.mubr.f32.mxu0 %v1285
        %1390 = vmatmul.mubr.f32.gmra.mrb[0].mxu0 %v1283
        %v1391 = vpop.f32.mrb[0].mxu0
        %v1392 = vadd.f32 0.0, %v1391
        %v1393 = vpop.f32.mrb[0].mxu0
        %v1394 = vadd.f32 0.0, %v1393
        %1395 = vmatprep.mubr.f32.mxu0 %v1291
        %1396 = vmatmul.mubr.f32.gmra.mrb[0].mxu0 %v1289
        %v1397 = vpop.f32.mrb[0].mxu0
        %v1398 = vadd.f32 0.0, %v1397
        %v1399 = vpop.f32.mrb[0].mxu0
        %v1400 = vadd.f32 0.0, %v1399
        %1401 = vmatprep.mubr.f32.mxu0 %v1295
        %1402 = vmatmul.mubr.f32.gmra.mrb[0].mxu0 %v1293
        %v1403 = vpop.f32.mrb[0].mxu0
        %v1404 = vadd.f32 0.0, %v1403
        %v1405 = vpop.f32.mrb[0].mxu0
        %v1406 = vadd.f32 0.0, %v1405
        %1407 = vmatprep.mubr.f32.mxu0 %v1301
        %1408 = vmatmul.mubr.f32.gmra.mrb[0].mxu0 %v1299
        %v1409 = vpop.f32.mrb[0].mxu0
        %v1410 = vadd.f32 0.0, %v1409
        %v1411 = vpop.f32.mrb[0].mxu0
        %v1412 = vadd.f32 0.0, %v1411
        %1413 = vmatprep.mubr.f32.mxu0 %v1305
        %1414 = vmatmul.mubr.f32.gmra.mrb[0].mxu0 %v1303
        %v1415 = vpop.f32.mrb[0].mxu0
        %v1416 = vadd.f32 0.0, %v1415
        %v1417 = vpop.f32.mrb[0].mxu0
        %v1418 = vadd.f32 0.0, %v1417
        %1419 = vmatprep.mubr.f32.mxu0 %v1311
        %1420 = vmatmul.mubr.f32.gmra.mrb[0].mxu0 %v1309
        %v1421 = vpop.f32.mrb[0].mxu0
        %v1422 = vadd.f32 0.0, %v1421
        %v1423 = vpop.f32.mrb[0].mxu0
        %v1424 = vadd.f32 0.0, %v1423
        %1425 = vmatprep.mubr.f32.mxu0 %v1315
        %1426 = vmatmul.mubr.f32.gmra.mrb[0].mxu0 %v1313
        %v1427 = vpop.f32.mrb[0].mxu0
        %v1428 = vadd.f32 0.0, %v1427
        %v1429 = vpop.f32.mrb[0].mxu0
        %v1430 = vadd.f32 0.0, %v1429
        %1431 = vdwg.mxu0
        %v1432 = vsub.f32 %v1279, %v1386
        %v1433 = vsub.f32 %v1281, %v1388
        %v1434 = vsub.f32 %v1283, %v1392
        %v1435 = vsub.f32 %v1285, %v1394
        %v1436 = vsub.f32 %v1289, %v1398
        %v1437 = vsub.f32 %v1291, %v1400
        %v1438 = vsub.f32 %v1293, %v1404
        %v1439 = vsub.f32 %v1295, %v1406
        %v1440 = vsub.f32 %v1299, %v1410
        %v1441 = vsub.f32 %v1301, %v1412
        %v1442 = vsub.f32 %v1303, %v1416
        %v1443 = vsub.f32 %v1305, %v1418
        %v1444 = vsub.f32 %v1309, %v1422
        %v1445 = vsub.f32 %v1311, %v1424
        %v1446 = vsub.f32 %v1313, %v1428
        %v1447 = vsub.f32 %v1315, %v1430
        %v1448 = vmul.f32 %v1432, %v1432
        %v1449 = vmul.f32 %v1433, %v1433
        %v1450 = vmul.f32 %v1434, %v1434
        %v1451 = vmul.f32 %v1435, %v1435
        %v1452 = vmul.f32 %v1436, %v1436
        %v1453 = vmul.f32 %v1437, %v1437
        %v1454 = vmul.f32 %v1438, %v1438
        %v1455 = vmul.f32 %v1439, %v1439
        %v1456 = vmul.f32 %v1440, %v1440
        %v1457 = vmul.f32 %v1441, %v1441
        %v1458 = vmul.f32 %v1442, %v1442
        %v1459 = vmul.f32 %v1443, %v1443
        %v1460 = vmul.f32 %v1444, %v1444
        %v1461 = vmul.f32 %v1445, %v1445
        %v1462 = vmul.f32 %v1446, %v1446
        %v1463 = vmul.f32 %v1447, %v1447
        %1464 = vmatprep.subr.mxu0 %v562
        %1465 = vmatpush1.msra.mxu0 %v561
        %1466 = vmatprep.subr.mxu0 %v564
        %1467 = vmatpush1.msra.mxu0 %v563
        %1468 = vmatprep.subr.mxu0 %v566
        %1469 = vmatpush1.msra.mxu0 %v565
        %1470 = vmatprep.subr.mxu0 %v568
        %1471 = vmatpush1.msra.mxu0 %v567
        %1472 = vmatprep.subr.mxu0 %v570
        %1473 = vmatpush1.msra.mxu0 %v569
        %1474 = vmatprep.subr.mxu0 %v572
        %1475 = vmatpush1.msra.mxu0 %v571
        %1476 = vmatprep.subr.mxu0 %v574
        %1477 = vmatpush1.msra.mxu0 %v573
        %1478 = vmatprep.subr.mxu0 %v576
        %1479 = vmatpush1.msra.mxu0 %v575
        %1480 = vmatprep.subr.mxu0 %v578
        %1481 = vmatpush1.msra.mxu0 %v577
        %1482 = vmatprep.subr.mxu0 %v580
        %1483 = vmatpush1.msra.mxu0 %v579
        %1484 = vmatprep.subr.mxu0 %v582
        %1485 = vmatpush1.msra.mxu0 %v581
        %1486 = vmatprep.subr.mxu0 %v584
        %1487 = vmatpush1.msra.mxu0 %v583
        %1488 = vmatprep.subr.mxu0 %v586
        %1489 = vmatpush1.msra.mxu0 %v585
        %1490 = vmatprep.subr.mxu0 %v588
        %1491 = vmatpush1.msra.mxu0 %v587
        %1492 = vmatprep.subr.mxu0 %v590
        %1493 = vmatpush1.msra.mxu0 %v589
        %1494 = vmatprep.subr.mxu0 %v592
        %1495 = vmatpush1.msra.mxu0 %v591
        %1496 = vmatprep.subr.mxu0 %v594
        %1497 = vmatpush1.msra.mxu0 %v593
        %1498 = vmatprep.subr.mxu0 %v596
        %1499 = vmatpush1.msra.mxu0 %v595
        %1500 = vmatprep.subr.mxu0 %v598
        %1501 = vmatpush1.msra.mxu0 %v597
        %1502 = vmatprep.subr.mxu0 %v600
        %1503 = vmatpush1.msra.mxu0 %v599
        %1504 = vmatprep.subr.mxu0 %v602
        %1505 = vmatpush1.msra.mxu0 %v601
        %1506 = vmatprep.subr.mxu0 %v604
        %1507 = vmatpush1.msra.mxu0 %v603
        %1508 = vmatprep.subr.mxu0 %v606
        %1509 = vmatpush1.msra.mxu0 %v605
        %1510 = vmatprep.subr.mxu0 %v608
        %1511 = vmatpush1.msra.mxu0 %v607
        %1512 = vmatprep.subr.mxu0 %v610
        %1513 = vmatpush1.msra.mxu0 %v609
        %1514 = vmatprep.subr.mxu0 %v612
        %1515 = vmatpush1.msra.mxu0 %v611
        %1516 = vmatprep.subr.mxu0 %v614
        %1517 = vmatpush1.msra.mxu0 %v613
        %1518 = vmatprep.subr.mxu0 %v616
        %1519 = vmatpush1.msra.mxu0 %v615
        %1520 = vmatprep.subr.mxu0 %v618
        %1521 = vmatpush1.msra.mxu0 %v617
        %1522 = vmatprep.subr.mxu0 %v620
        %1523 = vmatpush1.msra.mxu0 %v619
        %1524 = vmatprep.subr.mxu0 %v622
        %1525 = vmatpush1.msra.mxu0 %v621
        %1526 = vmatprep.subr.mxu0 %v624
        %1527 = vmatpush1.msra.mxu0 %v623
        %1528 = vmatprep.mubr.f32.mxu0 %v1449
        %1529 = vmatmul.mubr.f32.gmra.mrb[0].mxu0 %v1448
        %v1530 = vpop.f32.mrb[0].mxu0
        %v1531 = vadd.f32 1e-05, %v1530
        %v1532 = vpop.f32.mrb[0].mxu0
        %v1533 = vadd.f32 1e-05, %v1532
        %1534 = vmatprep.mubr.f32.mxu0 %v1451
        %1535 = vmatmul.mubr.f32.gmra.mrb[0].mxu0 %v1450
        %v1536 = vpop.f32.mrb[0].mxu0
        %v1537 = vadd.f32 1e-05, %v1536
        %v1538 = vpop.f32.mrb[0].mxu0
        %v1539 = vadd.f32 1e-05, %v1538
        %1540 = vmatprep.mubr.f32.mxu0 %v1453
        %1541 = vmatmul.mubr.f32.gmra.mrb[0].mxu0 %v1452
        %v1542 = vpop.f32.mrb[0].mxu0
        %v1543 = vadd.f32 1e-05, %v1542
        %v1544 = vpop.f32.mrb[0].mxu0
        %v1545 = vadd.f32 1e-05, %v1544
        %1546 = vmatprep.mubr.f32.mxu0 %v1455
        %1547 = vmatmul.mubr.f32.gmra.mrb[0].mxu0 %v1454
        %v1548 = vpop.f32.mrb[0].mxu0
        %v1549 = vadd.f32 1e-05, %v1548
        %v1550 = vpop.f32.mrb[0].mxu0
        %v1551 = vadd.f32 1e-05, %v1550
        %1552 = vmatprep.mubr.f32.mxu0 %v1457
        %1553 = vmatmul.mubr.f32.gmra.mrb[0].mxu0 %v1456
        %v1554 = vpop.f32.mrb[0].mxu0
        %v1555 = vadd.f32 1e-05, %v1554
        %v1556 = vpop.f32.mrb[0].mxu0
        %v1557 = vadd.f32 1e-05, %v1556
        %1558 = vmatprep.mubr.f32.mxu0 %v1459
        %1559 = vmatmul.mubr.f32.gmra.mrb[0].mxu0 %v1458
        %v1560 = vpop.f32.mrb[0].mxu0
        %v1561 = vadd.f32 1e-05, %v1560
        %v1562 = vpop.f32.mrb[0].mxu0
        %v1563 = vadd.f32 1e-05, %v1562
        %1564 = vmatprep.mubr.f32.mxu0 %v1461
        %1565 = vmatmul.mubr.f32.gmra.mrb[0].mxu0 %v1460
        %v1566 = vpop.f32.mrb[0].mxu0
        %v1567 = vadd.f32 1e-05, %v1566
        %v1568 = vpop.f32.mrb[0].mxu0
        %v1569 = vadd.f32 1e-05, %v1568
        %1570 = vmatprep.mubr.f32.mxu0 %v1463
        %1571 = vmatmul.mubr.f32.gmra.mrb[0].mxu0 %v1462
        %v1572 = vpop.f32.mrb[0].mxu0
        %v1573 = vadd.f32 1e-05, %v1572
        %v1574 = vpop.f32.mrb[0].mxu0
        %v1575 = vadd.f32 1e-05, %v1574
        %1576 = vdwg.mxu0
        %v1577 = vrsqrt.pop %v1531
        %v1578 = vrsqrt.pop %v1533
        %v1579 = vrsqrt.pop %v1537
        %v1580 = vrsqrt.pop %v1539
        %v1581 = vrsqrt.pop %v1543
        %v1582 = vrsqrt.pop %v1545
        %v1583 = vrsqrt.pop %v1549
        %v1584 = vrsqrt.pop %v1551
        %v1585 = vrsqrt.pop %v1555
        %v1586 = vrsqrt.pop %v1557
        %v1587 = vrsqrt.pop %v1561
        %v1588 = vrsqrt.pop %v1563
        %v1589 = vrsqrt.pop %v1567
        %v1590 = vrsqrt.pop %v1569
        %v1591 = vrsqrt.pop %v1573
        %v1592 = vrsqrt.pop %v1575
        %v1593 = vmul.f32 %v1432, %v1577
        %v1594 = vmul.f32 %v1433, %v1578
        %v1595 = vmul.f32 %v1434, %v1579
        %v1596 = vmul.f32 %v1435, %v1580
        %v1597 = vmul.f32 %v1436, %v1581
        %v1598 = vmul.f32 %v1437, %v1582
        %v1599 = vmul.f32 %v1438, %v1583
        %v1600 = vmul.f32 %v1439, %v1584
        %v1601 = vmul.f32 %v1440, %v1585
        %v1602 = vmul.f32 %v1441, %v1586
        %v1603 = vmul.f32 %v1442, %v1587
        %v1604 = vmul.f32 %v1443, %v1588
        %v1605 = vmul.f32 %v1444, %v1589
        %v1606 = vmul.f32 %v1445, %v1590
        %v1607 = vmul.f32 %v1446, %v1591
        %v1608 = vmul.f32 %v1447, %v1592
        %v1610 = vlaneseq
        %v1611 = vshrl.u32 %v1610, 7
        %v1612 = vsub.s32 0, %v1611
        %v1613 = vrot.slane %v1317, %v1612
        %v1614 = vlaneseq
        %v1615 = vshrl.u32 %v1614, 7
        %v1616 = vsub.s32 1, %v1615
        %v1617 = vrot.slane %v1317, %v1616
        %v1620 = vmul.f32 %v1593, %v1613
        %v1621 = vmul.f32 %v1594, %v1617
        %v1622 = vmul.f32 %v1595, %v1613
        %v1623 = vmul.f32 %v1596, %v1617
        %v1624 = vmul.f32 %v1597, %v1613
        %v1625 = vmul.f32 %v1598, %v1617
        %v1626 = vmul.f32 %v1599, %v1613
        %v1627 = vmul.f32 %v1600, %v1617
        %v1628 = vmul.f32 %v1601, %v1613
        %v1629 = vmul.f32 %v1602, %v1617
        %v1630 = vmul.f32 %v1603, %v1613
        %v1631 = vmul.f32 %v1604, %v1617
        %v1632 = vmul.f32 %v1605, %v1613
        %v1633 = vmul.f32 %v1606, %v1617
        %v1634 = vmul.f32 %v1607, %v1613
        %v1635 = vmul.f32 %v1608, %v1617
        %v1637 = vlaneseq
        %v1638 = vshrl.u32 %v1637, 7
        %v1639 = vsub.s32 0, %v1638
        %v1640 = vrot.slane %v1318, %v1639
        %v1641 = vlaneseq
        %v1642 = vshrl.u32 %v1641, 7
        %v1643 = vsub.s32 1, %v1642
        %v1644 = vrot.slane %v1318, %v1643
        %v1647 = vadd.f32 %v1620, %v1640
        %v1648 = vadd.f32 %v1621, %v1644
        %v1649 = vadd.f32 %v1622, %v1640
        %v1650 = vadd.f32 %v1623, %v1644
        %v1651 = vadd.f32 %v1624, %v1640
        %v1652 = vadd.f32 %v1625, %v1644
        %v1653 = vadd.f32 %v1626, %v1640
        %v1654 = vadd.f32 %v1627, %v1644
        %v1655 = vadd.f32 %v1628, %v1640
        %v1656 = vadd.f32 %v1629, %v1644
        %v1657 = vadd.f32 %v1630, %v1640
        %v1658 = vadd.f32 %v1631, %v1644
        %v1659 = vadd.f32 %v1632, %v1640
        %v1660 = vadd.f32 %v1633, %v1644
        %v1661 = vadd.f32 %v1634, %v1640
        %v1662 = vadd.f32 %v1635, %v1644
        %v1663 = vpack.c.bf16 %v1649, %v1647
        %v1664 = vpack.c.bf16 %v1650, %v1648
        %v1665 = vpack.c.bf16 %v1653, %v1651
        %v1666 = vpack.c.bf16 %v1654, %v1652
        %v1667 = vpack.c.bf16 %v1657, %v1655
        %v1668 = vpack.c.bf16 %v1658, %v1656
        %v1669 = vpack.c.bf16 %v1661, %v1659
        %v1670 = vpack.c.bf16 %v1662, %v1660
        %v1671 = vld [vmem:[#allocation8] sm:$0xff]
        %v1672 = vld [vmem:[#allocation8 + $0x8] sm:$0xff]
        %v1673 = vld [vmem:[#allocation8 + $0x10] sm:$0xff]
        %v1674 = vld [vmem:[#allocation8 + $0x18] sm:$0xff]
        %v1675 = vld [vmem:[#allocation8 + $0x20] sm:$0xff]
        %v1676 = vld [vmem:[#allocation8 + $0x28] sm:$0xff]
        %v1677 = vld [vmem:[#allocation8 + $0x30] sm:$0xff]
        %v1678 = vld [vmem:[#allocation8 + $0x38] sm:$0xff]
        %v1679 = vld [vmem:[#allocation8 + $0x40] sm:$0xff]
        %v1680 = vld [vmem:[#allocation8 + $0x48] sm:$0xff]
        %v1681 = vld [vmem:[#allocation8 + $0x50] sm:$0xff]
        %v1682 = vld [vmem:[#allocation8 + $0x58] sm:$0xff]
        %v1683 = vld [vmem:[#allocation8 + $0x60] sm:$0xff]
        %v1684 = vld [vmem:[#allocation8 + $0x68] sm:$0xff]
        %v1685 = vld [vmem:[#allocation8 + $0x70] sm:$0xff]
        %v1686 = vld [vmem:[#allocation8 + $0x78] sm:$0xff]
        %v1687 = vld [vmem:[#allocation8 + $0x80] sm:$0xff]
        %v1688 = vld [vmem:[#allocation8 + $0x88] sm:$0xff]
        %v1689 = vld [vmem:[#allocation8 + $0x90] sm:$0xff]
        %v1690 = vld [vmem:[#allocation8 + $0x98] sm:$0xff]
        %v1691 = vld [vmem:[#allocation8 + $0xa0] sm:$0xff]
        %v1692 = vld [vmem:[#allocation8 + $0xa8] sm:$0xff]
        %v1693 = vld [vmem:[#allocation8 + $0xb0] sm:$0xff]
        %v1694 = vld [vmem:[#allocation8 + $0xb8] sm:$0xff]
        %v1695 = vld [vmem:[#allocation8 + $0xc0] sm:$0xff]
        %v1696 = vld [vmem:[#allocation8 + $0xc8] sm:$0xff]
        %v1697 = vld [vmem:[#allocation8 + $0xd0] sm:$0xff]
        %v1698 = vld [vmem:[#allocation8 + $0xd8] sm:$0xff]
        %v1699 = vld [vmem:[#allocation8 + $0xe0] sm:$0xff]
        %v1700 = vld [vmem:[#allocation8 + $0xe8] sm:$0xff]
        %v1701 = vld [vmem:[#allocation8 + $0xf0] sm:$0xff]
        %v1702 = vld [vmem:[#allocation8 + $0xf8] sm:$0xff]
        %v1703 = vld [vmem:[#allocation8 + $0x100] sm:$0xff]
        %v1704 = vld [vmem:[#allocation8 + $0x108] sm:$0xff]
        %v1705 = vld [vmem:[#allocation8 + $0x110] sm:$0xff]
        %v1706 = vld [vmem:[#allocation8 + $0x118] sm:$0xff]
        %v1707 = vld [vmem:[#allocation8 + $0x120] sm:$0xff]
        %v1708 = vld [vmem:[#allocation8 + $0x128] sm:$0xff]
        %v1709 = vld [vmem:[#allocation8 + $0x130] sm:$0xff]
        %v1710 = vld [vmem:[#allocation8 + $0x138] sm:$0xff]
        %v1711 = vld [vmem:[#allocation8 + $0x140] sm:$0xff]
        %v1712 = vld [vmem:[#allocation8 + $0x148] sm:$0xff]
        %v1713 = vld [vmem:[#allocation8 + $0x150] sm:$0xff]
        %v1714 = vld [vmem:[#allocation8 + $0x158] sm:$0xff]
        %v1715 = vld [vmem:[#allocation8 + $0x160] sm:$0xff]
        %v1716 = vld [vmem:[#allocation8 + $0x168] sm:$0xff]
        %v1717 = vld [vmem:[#allocation8 + $0x170] sm:$0xff]
        %v1718 = vld [vmem:[#allocation8 + $0x178] sm:$0xff]
        %v1719 = vld [vmem:[#allocation8 + $0x180] sm:$0xff]
        %v1720 = vld [vmem:[#allocation8 + $0x188] sm:$0xff]
        %v1721 = vld [vmem:[#allocation8 + $0x190] sm:$0xff]
        %v1722 = vld [vmem:[#allocation8 + $0x198] sm:$0xff]
        %v1723 = vld [vmem:[#allocation8 + $0x1a0] sm:$0xff]
        %v1724 = vld [vmem:[#allocation8 + $0x1a8] sm:$0xff]
        %v1725 = vld [vmem:[#allocation8 + $0x1b0] sm:$0xff]
        %v1726 = vld [vmem:[#allocation8 + $0x1b8] sm:$0xff]
        %v1727 = vld [vmem:[#allocation8 + $0x1c0] sm:$0xff]
        %v1728 = vld [vmem:[#allocation8 + $0x1c8] sm:$0xff]
        %v1729 = vld [vmem:[#allocation8 + $0x1d0] sm:$0xff]
        %v1730 = vld [vmem:[#allocation8 + $0x1d8] sm:$0xff]
        %v1731 = vld [vmem:[#allocation8 + $0x1e0] sm:$0xff]
        %v1732 = vld [vmem:[#allocation8 + $0x1e8] sm:$0xff]
        %v1733 = vld [vmem:[#allocation8 + $0x1f0] sm:$0xff]
        %v1734 = vld [vmem:[#allocation8 + $0x1f8] sm:$0xff]
        %v1735 = vld [vmem:[#allocation8 + $0x200] sm:$0xff]
        %v1736 = vld [vmem:[#allocation8 + $0x208] sm:$0xff]
        %v1737 = vld [vmem:[#allocation8 + $0x210] sm:$0xff]
        %v1738 = vld [vmem:[#allocation8 + $0x218] sm:$0xff]
        %v1739 = vld [vmem:[#allocation8 + $0x220] sm:$0xff]
        %v1740 = vld [vmem:[#allocation8 + $0x228] sm:$0xff]
        %v1741 = vld [vmem:[#allocation8 + $0x230] sm:$0xff]
        %v1742 = vld [vmem:[#allocation8 + $0x238] sm:$0xff]
        %v1743 = vld [vmem:[#allocation8 + $0x240] sm:$0xff]
        %v1744 = vld [vmem:[#allocation8 + $0x248] sm:$0xff]
        %v1745 = vld [vmem:[#allocation8 + $0x250] sm:$0xff]
        %v1746 = vld [vmem:[#allocation8 + $0x258] sm:$0xff]
        %v1747 = vld [vmem:[#allocation8 + $0x260] sm:$0xff]
        %v1748 = vld [vmem:[#allocation8 + $0x268] sm:$0xff]
        %v1749 = vld [vmem:[#allocation8 + $0x270] sm:$0xff]
        %v1750 = vld [vmem:[#allocation8 + $0x278] sm:$0xff]
        %v1751 = vld [vmem:[#allocation8 + $0x280] sm:$0xff]
        %v1752 = vld [vmem:[#allocation8 + $0x288] sm:$0xff]
        %v1753 = vld [vmem:[#allocation8 + $0x290] sm:$0xff]
        %v1754 = vld [vmem:[#allocation8 + $0x298] sm:$0xff]
        %v1755 = vld [vmem:[#allocation8 + $0x2a0] sm:$0xff]
        %v1756 = vld [vmem:[#allocation8 + $0x2a8] sm:$0xff]
        %v1757 = vld [vmem:[#allocation8 + $0x2b0] sm:$0xff]
        %v1758 = vld [vmem:[#allocation8 + $0x2b8] sm:$0xff]
        %v1759 = vld [vmem:[#allocation8 + $0x2c0] sm:$0xff]
        %v1760 = vld [vmem:[#allocation8 + $0x2c8] sm:$0xff]
        %v1761 = vld [vmem:[#allocation8 + $0x2d0] sm:$0xff]
        %v1762 = vld [vmem:[#allocation8 + $0x2d8] sm:$0xff]
        %v1763 = vld [vmem:[#allocation8 + $0x2e0] sm:$0xff]
        %v1764 = vld [vmem:[#allocation8 + $0x2e8] sm:$0xff]
        %v1765 = vld [vmem:[#allocation8 + $0x2f0] sm:$0xff]
        %v1766 = vld [vmem:[#allocation8 + $0x2f8] sm:$0xff]
        %v1767 = vld [vmem:[#allocation8 + $0x300] sm:$0xff]
        %v1768 = vld [vmem:[#allocation8 + $0x308] sm:$0xff]
        %v1769 = vld [vmem:[#allocation8 + $0x310] sm:$0xff]
        %v1770 = vld [vmem:[#allocation8 + $0x318] sm:$0xff]
        %v1771 = vld [vmem:[#allocation8 + $0x320] sm:$0xff]
        %v1772 = vld [vmem:[#allocation8 + $0x328] sm:$0xff]
        %v1773 = vld [vmem:[#allocation8 + $0x330] sm:$0xff]
        %v1774 = vld [vmem:[#allocation8 + $0x338] sm:$0xff]
        %v1775 = vld [vmem:[#allocation8 + $0x340] sm:$0xff]
        %v1776 = vld [vmem:[#allocation8 + $0x348] sm:$0xff]
        %v1777 = vld [vmem:[#allocation8 + $0x350] sm:$0xff]
        %v1778 = vld [vmem:[#allocation8 + $0x358] sm:$0xff]
        %v1779 = vld [vmem:[#allocation8 + $0x360] sm:$0xff]
        %v1780 = vld [vmem:[#allocation8 + $0x368] sm:$0xff]
        %v1781 = vld [vmem:[#allocation8 + $0x370] sm:$0xff]
        %v1782 = vld [vmem:[#allocation8 + $0x378] sm:$0xff]
        %v1783 = vld [vmem:[#allocation8 + $0x380] sm:$0xff]
        %v1784 = vld [vmem:[#allocation8 + $0x388] sm:$0xff]
        %v1785 = vld [vmem:[#allocation8 + $0x390] sm:$0xff]
        %v1786 = vld [vmem:[#allocation8 + $0x398] sm:$0xff]
        %v1787 = vld [vmem:[#allocation8 + $0x3a0] sm:$0xff]
        %v1788 = vld [vmem:[#allocation8 + $0x3a8] sm:$0xff]
        %v1789 = vld [vmem:[#allocation8 + $0x3b0] sm:$0xff]
        %v1790 = vld [vmem:[#allocation8 + $0x3b8] sm:$0xff]
        %v1791 = vld [vmem:[#allocation8 + $0x3c0] sm:$0xff]
        %v1792 = vld [vmem:[#allocation8 + $0x3c8] sm:$0xff]
        %v1793 = vld [vmem:[#allocation8 + $0x3d0] sm:$0xff]
        %v1794 = vld [vmem:[#allocation8 + $0x3d8] sm:$0xff]
        %v1795 = vld [vmem:[#allocation8 + $0x3e0] sm:$0xff]
        %v1796 = vld [vmem:[#allocation8 + $0x3e8] sm:$0xff]
        %v1797 = vld [vmem:[#allocation8 + $0x3f0] sm:$0xff]
        %v1798 = vld [vmem:[#allocation8 + $0x3f8] sm:$0xff]
        %v1799 = vld [vmem:[%s11] sm:$0xff]
        %v1801 = vlaneseq
        %v1802 = vshrl.u32 %v1801, 7
        %v1803 = vsub.s32 0, %v1802
        %v1804 = vrot.slane %v1799, %v1803
        %v1805 = vlaneseq
        %v1806 = vshrl.u32 %v1805, 7
        %v1807 = vsub.s32 1, %v1806
        %v1808 = vrot.slane %v1799, %v1807
        %v1809 = vlaneseq
        %v1810 = vshrl.u32 %v1809, 7
        %v1811 = vsub.s32 2, %v1810
        %v1812 = vrot.slane %v1799, %v1811
        %v1813 = vlaneseq
        %v1814 = vshrl.u32 %v1813, 7
        %v1815 = vsub.s32 3, %v1814
        %v1816 = vrot.slane %v1799, %v1815
        %v1817 = vlaneseq
        %v1818 = vshrl.u32 %v1817, 7
        %v1819 = vsub.s32 4, %v1818
        %v1820 = vrot.slane %v1799, %v1819
        %v1821 = vlaneseq
        %v1822 = vshrl.u32 %v1821, 7
        %v1823 = vsub.s32 5, %v1822
        %v1824 = vrot.slane %v1799, %v1823
        %v1825 = vlaneseq
        %v1826 = vshrl.u32 %v1825, 7
        %v1827 = vsub.s32 6, %v1826
        %v1828 = vrot.slane %v1799, %v1827
        %v1829 = vlaneseq
        %v1830 = vshrl.u32 %v1829, 7
        %v1831 = vsub.s32 7, %v1830
        %v1832 = vrot.slane %v1799, %v1831
        %v1969 = vunpack.c.l.b16 %v1671
        %v1970 = vunpack.c.h.b16 %v1671
        %v1971 = vunpack.c.l.b16 %v1672
        %v1972 = vunpack.c.h.b16 %v1672
        %v1973 = vunpack.c.l.b16 %v1673
        %v1974 = vunpack.c.h.b16 %v1673
        %v1975 = vunpack.c.l.b16 %v1674
        %v1976 = vunpack.c.h.b16 %v1674
        %v1977 = vunpack.c.l.b16 %v1675
        %v1978 = vunpack.c.h.b16 %v1675
        %v1979 = vunpack.c.l.b16 %v1676
        %v1980 = vunpack.c.h.b16 %v1676
        %v1981 = vunpack.c.l.b16 %v1677
        %v1982 = vunpack.c.h.b16 %v1677
        %v1983 = vunpack.c.l.b16 %v1678
        %v1984 = vunpack.c.h.b16 %v1678
        %v1985 = vunpack.c.l.b16 %v1679
        %v1986 = vunpack.c.h.b16 %v1679
        %v1987 = vunpack.c.l.b16 %v1680
        %v1988 = vunpack.c.h.b16 %v1680
        %v1989 = vunpack.c.l.b16 %v1681
        %v1990 = vunpack.c.h.b16 %v1681
        %v1991 = vunpack.c.l.b16 %v1682
        %v1992 = vunpack.c.h.b16 %v1682
        %v1993 = vunpack.c.l.b16 %v1683
        %v1994 = vunpack.c.h.b16 %v1683
        %v1995 = vunpack.c.l.b16 %v1684
        %v1996 = vunpack.c.h.b16 %v1684
        %v1997 = vunpack.c.l.b16 %v1685
        %v1998 = vunpack.c.h.b16 %v1685
        %v1999 = vunpack.c.l.b16 %v1686
        %v2000 = vunpack.c.h.b16 %v1686
        %v2001 = vunpack.c.l.b16 %v1687
        %v2002 = vunpack.c.h.b16 %v1687
        %v2003 = vunpack.c.l.b16 %v1688
        %v2004 = vunpack.c.h.b16 %v1688
        %v2005 = vunpack.c.l.b16 %v1689
        %v2006 = vunpack.c.h.b16 %v1689
        %v2007 = vunpack.c.l.b16 %v1690
        %v2008 = vunpack.c.h.b16 %v1690
        %v2009 = vunpack.c.l.b16 %v1691
        %v2010 = vunpack.c.h.b16 %v1691
        %v2011 = vunpack.c.l.b16 %v1692
        %v2012 = vunpack.c.h.b16 %v1692
        %v2013 = vunpack.c.l.b16 %v1693
        %v2014 = vunpack.c.h.b16 %v1693
        %v2015 = vunpack.c.l.b16 %v1694
        %v2016 = vunpack.c.h.b16 %v1694
        %v2017 = vunpack.c.l.b16 %v1695
        %v2018 = vunpack.c.h.b16 %v1695
        %v2019 = vunpack.c.l.b16 %v1696
        %v2020 = vunpack.c.h.b16 %v1696
        %v2021 = vunpack.c.l.b16 %v1697
        %v2022 = vunpack.c.h.b16 %v1697
        %v2023 = vunpack.c.l.b16 %v1698
        %v2024 = vunpack.c.h.b16 %v1698
        %v2025 = vunpack.c.l.b16 %v1699
        %v2026 = vunpack.c.h.b16 %v1699
        %v2027 = vunpack.c.l.b16 %v1700
        %v2028 = vunpack.c.h.b16 %v1700
        %v2029 = vunpack.c.l.b16 %v1701
        %v2030 = vunpack.c.h.b16 %v1701
        %v2031 = vunpack.c.l.b16 %v1702
        %v2032 = vunpack.c.h.b16 %v1702
        %v2033 = vunpack.c.l.b16 %v1703
        %v2034 = vunpack.c.h.b16 %v1703
        %v2035 = vunpack.c.l.b16 %v1704
        %v2036 = vunpack.c.h.b16 %v1704
        %v2037 = vunpack.c.l.b16 %v1705
        %v2038 = vunpack.c.h.b16 %v1705
        %v2039 = vunpack.c.l.b16 %v1706
        %v2040 = vunpack.c.h.b16 %v1706
        %v2041 = vunpack.c.l.b16 %v1707
        %v2042 = vunpack.c.h.b16 %v1707
        %v2043 = vunpack.c.l.b16 %v1708
        %v2044 = vunpack.c.h.b16 %v1708
        %v2045 = vunpack.c.l.b16 %v1709
        %v2046 = vunpack.c.h.b16 %v1709
        %v2047 = vunpack.c.l.b16 %v1710
        %v2048 = vunpack.c.h.b16 %v1710
        %v2049 = vunpack.c.l.b16 %v1711
        %v2050 = vunpack.c.h.b16 %v1711
        %v2051 = vunpack.c.l.b16 %v1712
        %v2052 = vunpack.c.h.b16 %v1712
        %v2053 = vunpack.c.l.b16 %v1713
        %v2054 = vunpack.c.h.b16 %v1713
        %v2055 = vunpack.c.l.b16 %v1714
        %v2056 = vunpack.c.h.b16 %v1714
        %v2057 = vunpack.c.l.b16 %v1715
        %v2058 = vunpack.c.h.b16 %v1715
        %v2059 = vunpack.c.l.b16 %v1716
        %v2060 = vunpack.c.h.b16 %v1716
        %v2061 = vunpack.c.l.b16 %v1717
        %v2062 = vunpack.c.h.b16 %v1717
        %v2063 = vunpack.c.l.b16 %v1718
        %v2064 = vunpack.c.h.b16 %v1718
        %v2065 = vunpack.c.l.b16 %v1719
        %v2066 = vunpack.c.h.b16 %v1719
        %v2067 = vunpack.c.l.b16 %v1720
        %v2068 = vunpack.c.h.b16 %v1720
        %v2069 = vunpack.c.l.b16 %v1721
        %v2070 = vunpack.c.h.b16 %v1721
        %v2071 = vunpack.c.l.b16 %v1722
        %v2072 = vunpack.c.h.b16 %v1722
        %v2073 = vunpack.c.l.b16 %v1723
        %v2074 = vunpack.c.h.b16 %v1723
        %v2075 = vunpack.c.l.b16 %v1724
        %v2076 = vunpack.c.h.b16 %v1724
        %v2077 = vunpack.c.l.b16 %v1725
        %v2078 = vunpack.c.h.b16 %v1725
        %v2079 = vunpack.c.l.b16 %v1726
        %v2080 = vunpack.c.h.b16 %v1726
        %v2081 = vunpack.c.l.b16 %v1727
        %v2082 = vunpack.c.h.b16 %v1727
        %v2083 = vunpack.c.l.b16 %v1728
        %v2084 = vunpack.c.h.b16 %v1728
        %v2085 = vunpack.c.l.b16 %v1729
        %v2086 = vunpack.c.h.b16 %v1729
        %v2087 = vunpack.c.l.b16 %v1730
        %v2088 = vunpack.c.h.b16 %v1730
        %v2089 = vunpack.c.l.b16 %v1731
        %v2090 = vunpack.c.h.b16 %v1731
        %v2091 = vunpack.c.l.b16 %v1732
        %v2092 = vunpack.c.h.b16 %v1732
        %v2093 = vunpack.c.l.b16 %v1733
        %v2094 = vunpack.c.h.b16 %v1733
        %v2095 = vunpack.c.l.b16 %v1734
        %v2096 = vunpack.c.h.b16 %v1734
        %v2097 = vunpack.c.l.b16 %v1735
        %v2098 = vunpack.c.h.b16 %v1735
        %v2099 = vunpack.c.l.b16 %v1736
        %v2100 = vunpack.c.h.b16 %v1736
        %v2101 = vunpack.c.l.b16 %v1737
        %v2102 = vunpack.c.h.b16 %v1737
        %v2103 = vunpack.c.l.b16 %v1738
        %v2104 = vunpack.c.h.b16 %v1738
        %v2105 = vunpack.c.l.b16 %v1739
        %v2106 = vunpack.c.h.b16 %v1739
        %v2107 = vunpack.c.l.b16 %v1740
        %v2108 = vunpack.c.h.b16 %v1740
        %v2109 = vunpack.c.l.b16 %v1741
        %v2110 = vunpack.c.h.b16 %v1741
        %v2111 = vunpack.c.l.b16 %v1742
        %v2112 = vunpack.c.h.b16 %v1742
        %v2113 = vunpack.c.l.b16 %v1743
        %v2114 = vunpack.c.h.b16 %v1743
        %v2115 = vunpack.c.l.b16 %v1744
        %v2116 = vunpack.c.h.b16 %v1744
        %v2117 = vunpack.c.l.b16 %v1745
        %v2118 = vunpack.c.h.b16 %v1745
        %v2119 = vunpack.c.l.b16 %v1746
        %v2120 = vunpack.c.h.b16 %v1746
        %v2121 = vunpack.c.l.b16 %v1747
        %v2122 = vunpack.c.h.b16 %v1747
        %v2123 = vunpack.c.l.b16 %v1748
        %v2124 = vunpack.c.h.b16 %v1748
        %v2125 = vunpack.c.l.b16 %v1749
        %v2126 = vunpack.c.h.b16 %v1749
        %v2127 = vunpack.c.l.b16 %v1750
        %v2128 = vunpack.c.h.b16 %v1750
        %v2129 = vunpack.c.l.b16 %v1751
        %v2130 = vunpack.c.h.b16 %v1751
        %v2131 = vunpack.c.l.b16 %v1752
        %v2132 = vunpack.c.h.b16 %v1752
        %v2133 = vunpack.c.l.b16 %v1753
        %v2134 = vunpack.c.h.b16 %v1753
        %v2135 = vunpack.c.l.b16 %v1754
        %v2136 = vunpack.c.h.b16 %v1754
        %v2137 = vunpack.c.l.b16 %v1755
        %v2138 = vunpack.c.h.b16 %v1755
        %v2139 = vunpack.c.l.b16 %v1756
        %v2140 = vunpack.c.h.b16 %v1756
        %v2141 = vunpack.c.l.b16 %v1757
        %v2142 = vunpack.c.h.b16 %v1757
        %v2143 = vunpack.c.l.b16 %v1758
        %v2144 = vunpack.c.h.b16 %v1758
        %v2145 = vunpack.c.l.b16 %v1759
        %v2146 = vunpack.c.h.b16 %v1759
        %v2147 = vunpack.c.l.b16 %v1760
        %v2148 = vunpack.c.h.b16 %v1760
        %v2149 = vunpack.c.l.b16 %v1761
        %v2150 = vunpack.c.h.b16 %v1761
        %v2151 = vunpack.c.l.b16 %v1762
        %v2152 = vunpack.c.h.b16 %v1762
        %v2153 = vunpack.c.l.b16 %v1763
        %v2154 = vunpack.c.h.b16 %v1763
        %v2155 = vunpack.c.l.b16 %v1764
        %v2156 = vunpack.c.h.b16 %v1764
        %v2157 = vunpack.c.l.b16 %v1765
        %v2158 = vunpack.c.h.b16 %v1765
        %v2159 = vunpack.c.l.b16 %v1766
        %v2160 = vunpack.c.h.b16 %v1766
        %v2161 = vunpack.c.l.b16 %v1767
        %v2162 = vunpack.c.h.b16 %v1767
        %v2163 = vunpack.c.l.b16 %v1768
        %v2164 = vunpack.c.h.b16 %v1768
        %v2165 = vunpack.c.l.b16 %v1769
        %v2166 = vunpack.c.h.b16 %v1769
        %v2167 = vunpack.c.l.b16 %v1770
        %v2168 = vunpack.c.h.b16 %v1770
        %v2169 = vunpack.c.l.b16 %v1771
        %v2170 = vunpack.c.h.b16 %v1771
        %v2171 = vunpack.c.l.b16 %v1772
        %v2172 = vunpack.c.h.b16 %v1772
        %v2173 = vunpack.c.l.b16 %v1773
        %v2174 = vunpack.c.h.b16 %v1773
        %v2175 = vunpack.c.l.b16 %v1774
        %v2176 = vunpack.c.h.b16 %v1774
        %v2177 = vunpack.c.l.b16 %v1775
        %v2178 = vunpack.c.h.b16 %v1775
        %v2179 = vunpack.c.l.b16 %v1776
        %v2180 = vunpack.c.h.b16 %v1776
        %v2181 = vunpack.c.l.b16 %v1777
        %v2182 = vunpack.c.h.b16 %v1777
        %v2183 = vunpack.c.l.b16 %v1778
        %v2184 = vunpack.c.h.b16 %v1778
        %v2185 = vunpack.c.l.b16 %v1779
        %v2186 = vunpack.c.h.b16 %v1779
        %v2187 = vunpack.c.l.b16 %v1780
        %v2188 = vunpack.c.h.b16 %v1780
        %v2189 = vunpack.c.l.b16 %v1781
        %v2190 = vunpack.c.h.b16 %v1781
        %v2191 = vunpack.c.l.b16 %v1782
        %v2192 = vunpack.c.h.b16 %v1782
        %v2193 = vunpack.c.l.b16 %v1783
        %v2194 = vunpack.c.h.b16 %v1783
        %v2195 = vunpack.c.l.b16 %v1784
        %v2196 = vunpack.c.h.b16 %v1784
        %v2197 = vunpack.c.l.b16 %v1785
        %v2198 = vunpack.c.h.b16 %v1785
        %v2199 = vunpack.c.l.b16 %v1786
        %v2200 = vunpack.c.h.b16 %v1786
        %v2201 = vunpack.c.l.b16 %v1787
        %v2202 = vunpack.c.h.b16 %v1787
        %v2203 = vunpack.c.l.b16 %v1788
        %v2204 = vunpack.c.h.b16 %v1788
        %v2205 = vunpack.c.l.b16 %v1789
        %v2206 = vunpack.c.h.b16 %v1789
        %v2207 = vunpack.c.l.b16 %v1790
        %v2208 = vunpack.c.h.b16 %v1790
        %v2209 = vunpack.c.l.b16 %v1791
        %v2210 = vunpack.c.h.b16 %v1791
        %v2211 = vunpack.c.l.b16 %v1792
        %v2212 = vunpack.c.h.b16 %v1792
        %v2213 = vunpack.c.l.b16 %v1793
        %v2214 = vunpack.c.h.b16 %v1793
        %v2215 = vunpack.c.l.b16 %v1794
        %v2216 = vunpack.c.h.b16 %v1794
        %v2217 = vunpack.c.l.b16 %v1795
        %v2218 = vunpack.c.h.b16 %v1795
        %v2219 = vunpack.c.l.b16 %v1796
        %v2220 = vunpack.c.h.b16 %v1796
        %v2221 = vunpack.c.l.b16 %v1797
        %v2222 = vunpack.c.h.b16 %v1797
        %v2223 = vunpack.c.l.b16 %v1798
        %v2224 = vunpack.c.h.b16 %v1798
        %v2225 = vpack.c.b16 %v1977, %v1969
        %v2226 = vpack.c.b16 %v1978, %v1970
        %v2227 = vpack.c.b16 %v1979, %v1971
        %v2228 = vpack.c.b16 %v1980, %v1972
        %v2229 = vpack.c.b16 %v1981, %v1973
        %v2230 = vpack.c.b16 %v1982, %v1974
        %v2231 = vpack.c.b16 %v1983, %v1975
        %v2232 = vpack.c.b16 %v1984, %v1976
        %v2233 = vpack.c.b16 %v1993, %v1985
        %v2234 = vpack.c.b16 %v1994, %v1986
        %v2235 = vpack.c.b16 %v1995, %v1987
        %v2236 = vpack.c.b16 %v1996, %v1988
        %v2237 = vpack.c.b16 %v1997, %v1989
        %v2238 = vpack.c.b16 %v1998, %v1990
        %v2239 = vpack.c.b16 %v1999, %v1991
        %v2240 = vpack.c.b16 %v2000, %v1992
        %v2241 = vpack.c.b16 %v2009, %v2001
        %v2242 = vpack.c.b16 %v2010, %v2002
        %v2243 = vpack.c.b16 %v2011, %v2003
        %v2244 = vpack.c.b16 %v2012, %v2004
        %v2245 = vpack.c.b16 %v2013, %v2005
        %v2246 = vpack.c.b16 %v2014, %v2006
        %v2247 = vpack.c.b16 %v2015, %v2007
        %v2248 = vpack.c.b16 %v2016, %v2008
        %v2249 = vpack.c.b16 %v2025, %v2017
        %v2250 = vpack.c.b16 %v2026, %v2018
        %v2251 = vpack.c.b16 %v2027, %v2019
        %v2252 = vpack.c.b16 %v2028, %v2020
        %v2253 = vpack.c.b16 %v2029, %v2021
        %v2254 = vpack.c.b16 %v2030, %v2022
        %v2255 = vpack.c.b16 %v2031, %v2023
        %v2256 = vpack.c.b16 %v2032, %v2024
        %v2257 = vpack.c.b16 %v2041, %v2033
        %v2258 = vpack.c.b16 %v2042, %v2034
        %v2259 = vpack.c.b16 %v2043, %v2035
        %v2260 = vpack.c.b16 %v2044, %v2036
        %v2261 = vpack.c.b16 %v2045, %v2037
        %v2262 = vpack.c.b16 %v2046, %v2038
        %v2263 = vpack.c.b16 %v2047, %v2039
        %v2264 = vpack.c.b16 %v2048, %v2040
        %v2265 = vpack.c.b16 %v2057, %v2049
        %v2266 = vpack.c.b16 %v2058, %v2050
        %v2267 = vpack.c.b16 %v2059, %v2051
        %v2268 = vpack.c.b16 %v2060, %v2052
        %v2269 = vpack.c.b16 %v2061, %v2053
        %v2270 = vpack.c.b16 %v2062, %v2054
        %v2271 = vpack.c.b16 %v2063, %v2055
        %v2272 = vpack.c.b16 %v2064, %v2056
        %v2273 = vpack.c.b16 %v2073, %v2065
        %v2274 = vpack.c.b16 %v2074, %v2066
        %v2275 = vpack.c.b16 %v2075, %v2067
        %v2276 = vpack.c.b16 %v2076, %v2068
        %v2277 = vpack.c.b16 %v2077, %v2069
        %v2278 = vpack.c.b16 %v2078, %v2070
        %v2279 = vpack.c.b16 %v2079, %v2071
        %v2280 = vpack.c.b16 %v2080, %v2072
        %v2281 = vpack.c.b16 %v2089, %v2081
        %v2282 = vpack.c.b16 %v2090, %v2082
        %v2283 = vpack.c.b16 %v2091, %v2083
        %v2284 = vpack.c.b16 %v2092, %v2084
        %v2285 = vpack.c.b16 %v2093, %v2085
        %v2286 = vpack.c.b16 %v2094, %v2086
        %v2287 = vpack.c.b16 %v2095, %v2087
        %v2288 = vpack.c.b16 %v2096, %v2088
        %v2289 = vpack.c.b16 %v2105, %v2097
        %v2290 = vpack.c.b16 %v2106, %v2098
        %v2291 = vpack.c.b16 %v2107, %v2099
        %v2292 = vpack.c.b16 %v2108, %v2100
        %v2293 = vpack.c.b16 %v2109, %v2101
        %v2294 = vpack.c.b16 %v2110, %v2102
        %v2295 = vpack.c.b16 %v2111, %v2103
        %v2296 = vpack.c.b16 %v2112, %v2104
        %v2297 = vpack.c.b16 %v2121, %v2113
        %v2298 = vpack.c.b16 %v2122, %v2114
        %v2299 = vpack.c.b16 %v2123, %v2115
        %v2300 = vpack.c.b16 %v2124, %v2116
        %v2301 = vpack.c.b16 %v2125, %v2117
        %v2302 = vpack.c.b16 %v2126, %v2118
        %v2303 = vpack.c.b16 %v2127, %v2119
        %v2304 = vpack.c.b16 %v2128, %v2120
        %v2305 = vpack.c.b16 %v2137, %v2129
        %v2306 = vpack.c.b16 %v2138, %v2130
        %v2307 = vpack.c.b16 %v2139, %v2131
        %v2308 = vpack.c.b16 %v2140, %v2132
        %v2309 = vpack.c.b16 %v2141, %v2133
        %v2310 = vpack.c.b16 %v2142, %v2134
        %v2311 = vpack.c.b16 %v2143, %v2135
        %v2312 = vpack.c.b16 %v2144, %v2136
        %v2313 = vpack.c.b16 %v2153, %v2145
        %v2314 = vpack.c.b16 %v2154, %v2146
        %v2315 = vpack.c.b16 %v2155, %v2147
        %v2316 = vpack.c.b16 %v2156, %v2148
        %v2317 = vpack.c.b16 %v2157, %v2149
        %v2318 = vpack.c.b16 %v2158, %v2150
        %v2319 = vpack.c.b16 %v2159, %v2151
        %v2320 = vpack.c.b16 %v2160, %v2152
        %v2321 = vpack.c.b16 %v2169, %v2161
        %v2322 = vpack.c.b16 %v2170, %v2162
        %v2323 = vpack.c.b16 %v2171, %v2163
        %v2324 = vpack.c.b16 %v2172, %v2164
        %v2325 = vpack.c.b16 %v2173, %v2165
        %v2326 = vpack.c.b16 %v2174, %v2166
        %v2327 = vpack.c.b16 %v2175, %v2167
        %v2328 = vpack.c.b16 %v2176, %v2168
        %v2329 = vpack.c.b16 %v2185, %v2177
        %v2330 = vpack.c.b16 %v2186, %v2178
        %v2331 = vpack.c.b16 %v2187, %v2179
        %v2332 = vpack.c.b16 %v2188, %v2180
        %v2333 = vpack.c.b16 %v2189, %v2181
        %v2334 = vpack.c.b16 %v2190, %v2182
        %v2335 = vpack.c.b16 %v2191, %v2183
        %v2336 = vpack.c.b16 %v2192, %v2184
        %v2337 = vpack.c.b16 %v2201, %v2193
        %v2338 = vpack.c.b16 %v2202, %v2194
        %v2339 = vpack.c.b16 %v2203, %v2195
        %v2340 = vpack.c.b16 %v2204, %v2196
        %v2341 = vpack.c.b16 %v2205, %v2197
        %v2342 = vpack.c.b16 %v2206, %v2198
        %v2343 = vpack.c.b16 %v2207, %v2199
        %v2344 = vpack.c.b16 %v2208, %v2200
        %v2345 = vpack.c.b16 %v2217, %v2209
        %v2346 = vpack.c.b16 %v2218, %v2210
        %v2347 = vpack.c.b16 %v2219, %v2211
        %v2348 = vpack.c.b16 %v2220, %v2212
        %v2349 = vpack.c.b16 %v2221, %v2213
        %v2350 = vpack.c.b16 %v2222, %v2214
        %v2351 = vpack.c.b16 %v2223, %v2215
        %v2352 = vpack.c.b16 %v2224, %v2216
        %2481 = vmatprep.subr.bf16.mxu0 %v2226
        %2482 = vmatpush1.bf16.msra.mxu0 %v2225
        %2483 = vmatprep.subr.bf16.mxu0 %v2234
        %2484 = vmatpush1.bf16.msra.mxu0 %v2233
        %2485 = vmatprep.subr.bf16.mxu0 %v2242
        %2486 = vmatpush1.bf16.msra.mxu0 %v2241
        %2487 = vmatprep.subr.bf16.mxu0 %v2250
        %2488 = vmatpush1.bf16.msra.mxu0 %v2249
        %2489 = vmatprep.subr.bf16.mxu0 %v2258
        %2490 = vmatpush1.bf16.msra.mxu0 %v2257
        %2491 = vmatprep.subr.bf16.mxu0 %v2266
        %2492 = vmatpush1.bf16.msra.mxu0 %v2265
        %2493 = vmatprep.subr.bf16.mxu0 %v2274
        %2494 = vmatpush1.bf16.msra.mxu0 %v2273
        %2495 = vmatprep.subr.bf16.mxu0 %v2282
        %2496 = vmatpush1.bf16.msra.mxu0 %v2281
        %2497 = vmatprep.subr.bf16.mxu0 %v2290
        %2498 = vmatpush1.bf16.msra.mxu0 %v2289
        %2499 = vmatprep.subr.bf16.mxu0 %v2298
        %2500 = vmatpush1.bf16.msra.mxu0 %v2297
        %2501 = vmatprep.subr.bf16.mxu0 %v2306
        %2502 = vmatpush1.bf16.msra.mxu0 %v2305
        %2503 = vmatprep.subr.bf16.mxu0 %v2314
        %2504 = vmatpush1.bf16.msra.mxu0 %v2313
        %2505 = vmatprep.subr.bf16.mxu0 %v2322
        %2506 = vmatpush1.bf16.msra.mxu0 %v2321
        %2507 = vmatprep.subr.bf16.mxu0 %v2330
        %2508 = vmatpush1.bf16.msra.mxu0 %v2329
        %2509 = vmatprep.subr.bf16.mxu0 %v2338
        %2510 = vmatpush1.bf16.msra.mxu0 %v2337
        %2511 = vmatprep.subr.bf16.mxu0 %v2346
        %2512 = vmatpush1.bf16.msra.mxu0 %v2345
        %2513 = vmatprep.mubr.bf16.mxu0 %v1664
        %2514 = vmatmul.mubr.bf16.gmra.mrb[0].mxu0 %v1663
        %v2515 = vpop.f32.mrb[0].mxu0
        %v2516 = vadd.f32 %v1804, %v2515
        %v2517 = vpop.f32.mrb[0].mxu0
        %v2518 = vadd.f32 %v1808, %v2517
        %v2519 = vpop.f32.mrb[0].mxu0
        %v2520 = vadd.f32 %v1804, %v2519
        %v2521 = vpop.f32.mrb[0].mxu0
        %v2522 = vadd.f32 %v1808, %v2521
        %2523 = vmatprep.mubr.bf16.mxu0 %v1666
        %2524 = vmatmul.mubr.bf16.gmra.mrb[0].mxu0 %v1665
        %v2525 = vpop.f32.mrb[0].mxu0
        %v2526 = vadd.f32 %v1804, %v2525
        %v2527 = vpop.f32.mrb[0].mxu0
        %v2528 = vadd.f32 %v1808, %v2527
        %v2529 = vpop.f32.mrb[0].mxu0
        %v2530 = vadd.f32 %v1804, %v2529
        %v2531 = vpop.f32.mrb[0].mxu0
        %v2532 = vadd.f32 %v1808, %v2531
        %2533 = vmatprep.mubr.bf16.mxu0 %v1668
        %2534 = vmatmul.mubr.bf16.gmra.mrb[0].mxu0 %v1667
        %v2535 = vpop.f32.mrb[0].mxu0
        %v2536 = vadd.f32 %v1804, %v2535
        %v2537 = vpop.f32.mrb[0].mxu0
        %v2538 = vadd.f32 %v1808, %v2537
        %v2539 = vpop.f32.mrb[0].mxu0
        %v2540 = vadd.f32 %v1804, %v2539
        %v2541 = vpop.f32.mrb[0].mxu0
        %v2542 = vadd.f32 %v1808, %v2541
        %2543 = vmatprep.mubr.bf16.mxu0 %v1670
        %2544 = vmatmul.mubr.bf16.gmra.mrb[0].mxu0 %v1669
        %v2545 = vpop.f32.mrb[0].mxu0
        %v2546 = vadd.f32 %v1804, %v2545
        %v2547 = vpop.f32.mrb[0].mxu0
        %v2548 = vadd.f32 %v1808, %v2547
        %v2549 = vpop.f32.mrb[0].mxu0
        %v2550 = vadd.f32 %v1804, %v2549
        %v2551 = vpop.f32.mrb[0].mxu0
        %v2552 = vadd.f32 %v1808, %v2551
        %2553 = vdwg.mxu0
        %2554 = vmatprep.subr.bf16.mxu0 %v2228
        %2555 = vmatpush1.bf16.msra.mxu0 %v2227
        %2556 = vmatprep.subr.bf16.mxu0 %v2236
        %2557 = vmatpush1.bf16.msra.mxu0 %v2235
        %2558 = vmatprep.subr.bf16.mxu0 %v2244
        %2559 = vmatpush1.bf16.msra.mxu0 %v2243
        %2560 = vmatprep.subr.bf16.mxu0 %v2252
        %2561 = vmatpush1.bf16.msra.mxu0 %v2251
        %2562 = vmatprep.subr.bf16.mxu0 %v2260
        %2563 = vmatpush1.bf16.msra.mxu0 %v2259
        %2564 = vmatprep.subr.bf16.mxu0 %v2268
        %2565 = vmatpush1.bf16.msra.mxu0 %v2267
        %2566 = vmatprep.subr.bf16.mxu0 %v2276
        %2567 = vmatpush1.bf16.msra.mxu0 %v2275
        %2568 = vmatprep.subr.bf16.mxu0 %v2284
        %2569 = vmatpush1.bf16.msra.mxu0 %v2283
        %2570 = vmatprep.subr.bf16.mxu0 %v2292
        %2571 = vmatpush1.bf16.msra.mxu0 %v2291
        %2572 = vmatprep.subr.bf16.mxu0 %v2300
        %2573 = vmatpush1.bf16.msra.mxu0 %v2299
        %2574 = vmatprep.subr.bf16.mxu0 %v2308
        %2575 = vmatpush1.bf16.msra.mxu0 %v2307
        %2576 = vmatprep.subr.bf16.mxu0 %v2316
        %2577 = vmatpush1.bf16.msra.mxu0 %v2315
        %2578 = vmatprep.subr.bf16.mxu0 %v2324
        %2579 = vmatpush1.bf16.msra.mxu0 %v2323
        %2580 = vmatprep.subr.bf16.mxu0 %v2332
        %2581 = vmatpush1.bf16.msra.mxu0 %v2331
        %2582 = vmatprep.subr.bf16.mxu0 %v2340
        %2583 = vmatpush1.bf16.msra.mxu0 %v2339
        %2584 = vmatprep.subr.bf16.mxu0 %v2348
        %2585 = vmatpush1.bf16.msra.mxu0 %v2347
        %2586 = vmatprep.mubr.bf16.mxu0 %v1664
        %2587 = vmatmul.mubr.bf16.gmra.mrb[0].mxu0 %v1663
        %v2588 = vpop.f32.mrb[0].mxu0
        %v2589 = vadd.f32 %v1812, %v2588
        %v2590 = vpop.f32.mrb[0].mxu0
        %v2591 = vadd.f32 %v1816, %v2590
        %v2592 = vpop.f32.mrb[0].mxu0
        %v2593 = vadd.f32 %v1812, %v2592
        %v2594 = vpop.f32.mrb[0].mxu0
        %v2595 = vadd.f32 %v1816, %v2594
        %2596 = vmatprep.mubr.bf16.mxu0 %v1666
        %2597 = vmatmul.mubr.bf16.gmra.mrb[0].mxu0 %v1665
        %v2598 = vpop.f32.mrb[0].mxu0
        %v2599 = vadd.f32 %v1812, %v2598
        %v2600 = vpop.f32.mrb[0].mxu0
        %v2601 = vadd.f32 %v1816, %v2600
        %v2602 = vpop.f32.mrb[0].mxu0
        %v2603 = vadd.f32 %v1812, %v2602
        %v2604 = vpop.f32.mrb[0].mxu0
        %v2605 = vadd.f32 %v1816, %v2604
        %2606 = vmatprep.mubr.bf16.mxu0 %v1668
        %2607 = vmatmul.mubr.bf16.gmra.mrb[0].mxu0 %v1667
        %v2608 = vpop.f32.mrb[0].mxu0
        %v2609 = vadd.f32 %v1812, %v2608
        %v2610 = vpop.f32.mrb[0].mxu0
        %v2611 = vadd.f32 %v1816, %v2610
        %v2612 = vpop.f32.mrb[0].mxu0
        %v2613 = vadd.f32 %v1812, %v2612
        %v2614 = vpop.f32.mrb[0].mxu0
        %v2615 = vadd.f32 %v1816, %v2614
        %2616 = vmatprep.mubr.bf16.mxu0 %v1670
        %2617 = vmatmul.mubr.bf16.gmra.mrb[0].mxu0 %v1669
        %v2618 = vpop.f32.mrb[0].mxu0
        %v2619 = vadd.f32 %v1812, %v2618
        %v2620 = vpop.f32.mrb[0].mxu0
        %v2621 = vadd.f32 %v1816, %v2620
        %v2622 = vpop.f32.mrb[0].mxu0
        %v2623 = vadd.f32 %v1812, %v2622
        %v2624 = vpop.f32.mrb[0].mxu0
        %v2625 = vadd.f32 %v1816, %v2624
        %2626 = vdwg.mxu0
        %2627 = vmatprep.subr.bf16.mxu0 %v2230
        %2628 = vmatpush1.bf16.msra.mxu0 %v2229
        %2629 = vmatprep.subr.bf16.mxu0 %v2238
        %2630 = vmatpush1.bf16.msra.mxu0 %v2237
        %2631 = vmatprep.subr.bf16.mxu0 %v2246
        %2632 = vmatpush1.bf16.msra.mxu0 %v2245
        %2633 = vmatprep.subr.bf16.mxu0 %v2254
        %2634 = vmatpush1.bf16.msra.mxu0 %v2253
        %2635 = vmatprep.subr.bf16.mxu0 %v2262
        %2636 = vmatpush1.bf16.msra.mxu0 %v2261
        %2637 = vmatprep.subr.bf16.mxu0 %v2270
        %2638 = vmatpush1.bf16.msra.mxu0 %v2269
        %2639 = vmatprep.subr.bf16.mxu0 %v2278
        %2640 = vmatpush1.bf16.msra.mxu0 %v2277
        %2641 = vmatprep.subr.bf16.mxu0 %v2286
        %2642 = vmatpush1.bf16.msra.mxu0 %v2285
        %2643 = vmatprep.subr.bf16.mxu0 %v2294
        %2644 = vmatpush1.bf16.msra.mxu0 %v2293
        %2645 = vmatprep.subr.bf16.mxu0 %v2302
        %2646 = vmatpush1.bf16.msra.mxu0 %v2301
        %2647 = vmatprep.subr.bf16.mxu0 %v2310
        %2648 = vmatpush1.bf16.msra.mxu0 %v2309
        %2649 = vmatprep.subr.bf16.mxu0 %v2318
        %2650 = vmatpush1.bf16.msra.mxu0 %v2317
        %2651 = vmatprep.subr.bf16.mxu0 %v2326
        %2652 = vmatpush1.bf16.msra.mxu0 %v2325
        %2653 = vmatprep.subr.bf16.mxu0 %v2334
        %2654 = vmatpush1.bf16.msra.mxu0 %v2333
        %2655 = vmatprep.subr.bf16.mxu0 %v2342
        %2656 = vmatpush1.bf16.msra.mxu0 %v2341
        %2657 = vmatprep.subr.bf16.mxu0 %v2350
        %2658 = vmatpush1.bf16.msra.mxu0 %v2349
        %2659 = vmatprep.mubr.bf16.mxu0 %v1664
        %2660 = vmatmul.mubr.bf16.gmra.mrb[0].mxu0 %v1663
        %v2661 = vpop.f32.mrb[0].mxu0
        %v2662 = vadd.f32 %v1820, %v2661
        %v2663 = vpop.f32.mrb[0].mxu0
        %v2664 = vadd.f32 %v1824, %v2663
        %v2665 = vpop.f32.mrb[0].mxu0
        %v2666 = vadd.f32 %v1820, %v2665
        %v2667 = vpop.f32.mrb[0].mxu0
        %v2668 = vadd.f32 %v1824, %v2667
        %2669 = vmatprep.mubr.bf16.mxu0 %v1666
        %2670 = vmatmul.mubr.bf16.gmra.mrb[0].mxu0 %v1665
        %v2671 = vpop.f32.mrb[0].mxu0
        %v2672 = vadd.f32 %v1820, %v2671
        %v2673 = vpop.f32.mrb[0].mxu0
        %v2674 = vadd.f32 %v1824, %v2673
        %v2675 = vpop.f32.mrb[0].mxu0
        %v2676 = vadd.f32 %v1820, %v2675
        %v2677 = vpop.f32.mrb[0].mxu0
        %v2678 = vadd.f32 %v1824, %v2677
        %2679 = vmatprep.mubr.bf16.mxu0 %v1668
        %2680 = vmatmul.mubr.bf16.gmra.mrb[0].mxu0 %v1667
        %v2681 = vpop.f32.mrb[0].mxu0
        %v2682 = vadd.f32 %v1820, %v2681
        %v2683 = vpop.f32.mrb[0].mxu0
        %v2684 = vadd.f32 %v1824, %v2683
        %v2685 = vpop.f32.mrb[0].mxu0
        %v2686 = vadd.f32 %v1820, %v2685
        %v2687 = vpop.f32.mrb[0].mxu0
        %v2688 = vadd.f32 %v1824, %v2687
        %2689 = vmatprep.mubr.bf16.mxu0 %v1670
        %2690 = vmatmul.mubr.bf16.gmra.mrb[0].mxu0 %v1669
        %v2691 = vpop.f32.mrb[0].mxu0
        %v2692 = vadd.f32 %v1820, %v2691
        %v2693 = vpop.f32.mrb[0].mxu0
        %v2694 = vadd.f32 %v1824, %v2693
        %v2695 = vpop.f32.mrb[0].mxu0
        %v2696 = vadd.f32 %v1820, %v2695
        %v2697 = vpop.f32.mrb[0].mxu0
        %v2698 = vadd.f32 %v1824, %v2697
        %2699 = vdwg.mxu0
        %2700 = vmatprep.subr.bf16.mxu0 %v2232
        %2701 = vmatpush1.bf16.msra.mxu0 %v2231
        %2702 = vmatprep.subr.bf16.mxu0 %v2240
        %2703 = vmatpush1.bf16.msra.mxu0 %v2239
        %2704 = vmatprep.subr.bf16.mxu0 %v2248
        %2705 = vmatpush1.bf16.msra.mxu0 %v2247
        %2706 = vmatprep.subr.bf16.mxu0 %v2256
        %2707 = vmatpush1.bf16.msra.mxu0 %v2255
        %2708 = vmatprep.subr.bf16.mxu0 %v2264
        %2709 = vmatpush1.bf16.msra.mxu0 %v2263
        %2710 = vmatprep.subr.bf16.mxu0 %v2272
        %2711 = vmatpush1.bf16.msra.mxu0 %v2271
        %2712 = vmatprep.subr.bf16.mxu0 %v2280
        %2713 = vmatpush1.bf16.msra.mxu0 %v2279
        %2714 = vmatprep.subr.bf16.mxu0 %v2288
        %2715 = vmatpush1.bf16.msra.mxu0 %v2287
        %2716 = vmatprep.subr.bf16.mxu0 %v2296
        %2717 = vmatpush1.bf16.msra.mxu0 %v2295
        %2718 = vmatprep.subr.bf16.mxu0 %v2304
        %2719 = vmatpush1.bf16.msra.mxu0 %v2303
        %2720 = vmatprep.subr.bf16.mxu0 %v2312
        %2721 = vmatpush1.bf16.msra.mxu0 %v2311
        %2722 = vmatprep.subr.bf16.mxu0 %v2320
        %2723 = vmatpush1.bf16.msra.mxu0 %v2319
        %2724 = vmatprep.subr.bf16.mxu0 %v2328
        %2725 = vmatpush1.bf16.msra.mxu0 %v2327
        %2726 = vmatprep.subr.bf16.mxu0 %v2336
        %2727 = vmatpush1.bf16.msra.mxu0 %v2335
        %2728 = vmatprep.subr.bf16.mxu0 %v2344
        %2729 = vmatpush1.bf16.msra.mxu0 %v2343
        %2730 = vmatprep.subr.bf16.mxu0 %v2352
        %2731 = vmatpush1.bf16.msra.mxu0 %v2351
        %2732 = vmatprep.mubr.bf16.mxu0 %v1664
        %2733 = vmatmul.mubr.bf16.gmra.mrb[0].mxu0 %v1663
        %v2734 = vpop.f32.mrb[0].mxu0
        %v2735 = vadd.f32 %v1828, %v2734
        %v2736 = vpop.f32.mrb[0].mxu0
        %v2737 = vadd.f32 %v1832, %v2736
        %v2738 = vpop.f32.mrb[0].mxu0
        %v2739 = vadd.f32 %v1828, %v2738
        %v2740 = vpop.f32.mrb[0].mxu0
        %v2741 = vadd.f32 %v1832, %v2740
        %2742 = vmatprep.mubr.bf16.mxu0 %v1666
        %2743 = vmatmul.mubr.bf16.gmra.mrb[0].mxu0 %v1665
        %v2744 = vpop.f32.mrb[0].mxu0
        %v2745 = vadd.f32 %v1828, %v2744
        %v2746 = vpop.f32.mrb[0].mxu0
        %v2747 = vadd.f32 %v1832, %v2746
        %v2748 = vpop.f32.mrb[0].mxu0
        %v2749 = vadd.f32 %v1828, %v2748
        %v2750 = vpop.f32.mrb[0].mxu0
        %v2751 = vadd.f32 %v1832, %v2750
        %2752 = vmatprep.mubr.bf16.mxu0 %v1668
        %2753 = vmatmul.mubr.bf16.gmra.mrb[0].mxu0 %v1667
        %v2754 = vpop.f32.mrb[0].mxu0
        %v2755 = vadd.f32 %v1828, %v2754
        %v2756 = vpop.f32.mrb[0].mxu0
        %v2757 = vadd.f32 %v1832, %v2756
        %v2758 = vpop.f32.mrb[0].mxu0
        %v2759 = vadd.f32 %v1828, %v2758
        %v2760 = vpop.f32.mrb[0].mxu0
        %v2761 = vadd.f32 %v1832, %v2760
        %2762 = vmatprep.mubr.bf16.mxu0 %v1670
        %2763 = vmatmul.mubr.bf16.gmra.mrb[0].mxu0 %v1669
        %v2764 = vpop.f32.mrb[0].mxu0
        %v2765 = vadd.f32 %v1828, %v2764
        %v2766 = vpop.f32.mrb[0].mxu0
        %v2767 = vadd.f32 %v1832, %v2766
        %v2768 = vpop.f32.mrb[0].mxu0
        %v2769 = vadd.f32 %v1828, %v2768
        %v2770 = vpop.f32.mrb[0].mxu0
        %v2771 = vadd.f32 %v1832, %v2770
        %2772 = vdwg.mxu0
        %v2773 = vmul.f32 %v2516, 0.5
        %v2774 = vmul.f32 %v2518, 0.5
        %v2775 = vmul.f32 %v2589, 0.5
        %v2776 = vmul.f32 %v2591, 0.5
        %v2777 = vmul.f32 %v2662, 0.5
        %v2778 = vmul.f32 %v2664, 0.5
        %v2779 = vmul.f32 %v2735, 0.5
        %v2780 = vmul.f32 %v2737, 0.5
        %v2781 = vmul.f32 %v2520, 0.5
        %v2782 = vmul.f32 %v2522, 0.5
        %v2783 = vmul.f32 %v2593, 0.5
        %v2784 = vmul.f32 %v2595, 0.5
        %v2785 = vmul.f32 %v2666, 0.5
        %v2786 = vmul.f32 %v2668, 0.5
        %v2787 = vmul.f32 %v2739, 0.5
        %v2788 = vmul.f32 %v2741, 0.5
        %v2789 = vmul.f32 %v2526, 0.5
        %v2790 = vmul.f32 %v2528, 0.5
        %v2791 = vmul.f32 %v2599, 0.5
        %v2792 = vmul.f32 %v2601, 0.5
        %v2793 = vmul.f32 %v2672, 0.5
        %v2794 = vmul.f32 %v2674, 0.5
        %v2795 = vmul.f32 %v2745, 0.5
        %v2796 = vmul.f32 %v2747, 0.5
        %v2797 = vmul.f32 %v2530, 0.5
        %v2798 = vmul.f32 %v2532, 0.5
        %v2799 = vmul.f32 %v2603, 0.5
        %v2800 = vmul.f32 %v2605, 0.5
        %v2801 = vmul.f32 %v2676, 0.5
        %v2802 = vmul.f32 %v2678, 0.5
        %v2803 = vmul.f32 %v2749, 0.5
        %v2804 = vmul.f32 %v2751, 0.5
        %v2805 = vmul.f32 %v2536, 0.5
        %v2806 = vmul.f32 %v2538, 0.5
        %v2807 = vmul.f32 %v2609, 0.5
        %v2808 = vmul.f32 %v2611, 0.5
        %v2809 = vmul.f32 %v2682, 0.5
        %v2810 = vmul.f32 %v2684, 0.5
        %v2811 = vmul.f32 %v2755, 0.5
        %v2812 = vmul.f32 %v2757, 0.5
        %v2813 = vmul.f32 %v2540, 0.5
        %v2814 = vmul.f32 %v2542, 0.5
        %v2815 = vmul.f32 %v2613, 0.5
        %v2816 = vmul.f32 %v2615, 0.5
        %v2817 = vmul.f32 %v2686, 0.5
        %v2818 = vmul.f32 %v2688, 0.5
        %v2819 = vmul.f32 %v2759, 0.5
        %v2820 = vmul.f32 %v2761, 0.5
        %v2821 = vmul.f32 %v2546, 0.5
        %v2822 = vmul.f32 %v2548, 0.5
        %v2823 = vmul.f32 %v2619, 0.5
        %v2824 = vmul.f32 %v2621, 0.5
        %v2825 = vmul.f32 %v2692, 0.5
        %v2826 = vmul.f32 %v2694, 0.5
        %v2827 = vmul.f32 %v2765, 0.5
        %v2828 = vmul.f32 %v2767, 0.5
        %v2829 = vmul.f32 %v2550, 0.5
        %v2830 = vmul.f32 %v2552, 0.5
        %v2831 = vmul.f32 %v2623, 0.5
        %v2832 = vmul.f32 %v2625, 0.5
        %v2833 = vmul.f32 %v2696, 0.5
        %v2834 = vmul.f32 %v2698, 0.5
        %v2835 = vmul.f32 %v2769, 0.5
        %v2836 = vmul.f32 %v2771, 0.5
        %v2837 = vmul.f32 %v2516, 0.70710677
        %v2838 = vmul.f32 %v2518, 0.70710677
        %v2839 = vmul.f32 %v2589, 0.70710677
        %v2840 = vmul.f32 %v2591, 0.70710677
        %v2841 = vmul.f32 %v2662, 0.70710677
        %v2842 = vmul.f32 %v2664, 0.70710677
        %v2843 = vmul.f32 %v2735, 0.70710677
        %v2844 = vmul.f32 %v2737, 0.70710677
        %v2845 = vmul.f32 %v2520, 0.70710677
        %v2846 = vmul.f32 %v2522, 0.70710677
        %v2847 = vmul.f32 %v2593, 0.70710677
        %v2848 = vmul.f32 %v2595, 0.70710677
        %v2849 = vmul.f32 %v2666, 0.70710677
        %v2850 = vmul.f32 %v2668, 0.70710677
        %v2851 = vmul.f32 %v2739, 0.70710677
        %v2852 = vmul.f32 %v2741, 0.70710677
        %v2853 = vmul.f32 %v2526, 0.70710677
        %v2854 = vmul.f32 %v2528, 0.70710677
        %v2855 = vmul.f32 %v2599, 0.70710677
        %v2856 = vmul.f32 %v2601, 0.70710677
        %v2857 = vmul.f32 %v2672, 0.70710677
        %v2858 = vmul.f32 %v2674, 0.70710677
        %v2859 = vmul.f32 %v2745, 0.70710677
        %v2860 = vmul.f32 %v2747, 0.70710677
        %v2861 = vmul.f32 %v2530, 0.70710677
        %v2862 = vmul.f32 %v2532, 0.70710677
        %v2863 = vmul.f32 %v2603, 0.70710677
        %v2864 = vmul.f32 %v2605, 0.70710677
        %v2865 = vmul.f32 %v2676, 0.70710677
        %v2866 = vmul.f32 %v2678, 0.70710677
        %v2867 = vmul.f32 %v2749, 0.70710677
        %v2868 = vmul.f32 %v2751, 0.70710677
        %v2869 = vmul.f32 %v2536, 0.70710677
        %v2870 = vmul.f32 %v2538, 0.70710677
        %v2871 = vmul.f32 %v2609, 0.70710677
        %v2872 = vmul.f32 %v2611, 0.70710677
        %v2873 = vmul.f32 %v2682, 0.70710677
        %v2874 = vmul.f32 %v2684, 0.70710677
        %v2875 = vmul.f32 %v2755, 0.70710677
        %v2876 = vmul.f32 %v2757, 0.70710677
        %v2877 = vmul.f32 %v2540, 0.70710677
        %v2878 = vmul.f32 %v2542, 0.70710677
        %v2879 = vmul.f32 %v2613, 0.70710677
        %v2880 = vmul.f32 %v2615, 0.70710677
        %v2881 = vmul.f32 %v2686, 0.70710677
        %v2882 = vmul.f32 %v2688, 0.70710677
        %v2883 = vmul.f32 %v2759, 0.70710677
        %v2884 = vmul.f32 %v2761, 0.70710677
        %v2885 = vmul.f32 %v2546, 0.70710677
        %v2886 = vmul.f32 %v2548, 0.70710677
        %v2887 = vmul.f32 %v2619, 0.70710677
        %v2888 = vmul.f32 %v2621, 0.70710677
        %v2889 = vmul.f32 %v2692, 0.70710677
        %v2890 = vmul.f32 %v2694, 0.70710677
        %v2891 = vmul.f32 %v2765, 0.70710677
        %v2892 = vmul.f32 %v2767, 0.70710677
        %v2893 = vmul.f32 %v2550, 0.70710677
        %v2894 = vmul.f32 %v2552, 0.70710677
        %v2895 = vmul.f32 %v2623, 0.70710677
        %v2896 = vmul.f32 %v2625, 0.70710677
        %v2897 = vmul.f32 %v2696, 0.70710677
        %v2898 = vmul.f32 %v2698, 0.70710677
        %v2899 = vmul.f32 %v2769, 0.70710677
        %v2900 = vmul.f32 %v2771, 0.70710677
        %v2901 = verf.f32.pop %v2837
        %v2902 = verf.f32.pop %v2838
        %v2903 = verf.f32.pop %v2839
        %v2904 = verf.f32.pop %v2840
        %v2905 = verf.f32.pop %v2841
        %v2906 = verf.f32.pop %v2842
        %v2907 = verf.f32.pop %v2843
        %v2908 = verf.f32.pop %v2844
        %v2909 = verf.f32.pop %v2845
        %v2910 = verf.f32.pop %v2846
        %v2911 = verf.f32.pop %v2847
        %v2912 = verf.f32.pop %v2848
        %v2913 = verf.f32.pop %v2849
        %v2914 = verf.f32.pop %v2850
        %v2915 = verf.f32.pop %v2851
        %v2916 = verf.f32.pop %v2852
        %v2917 = verf.f32.pop %v2853
        %v2918 = verf.f32.pop %v2854
        %v2919 = verf.f32.pop %v2855
        %v2920 = verf.f32.pop %v2856
        %v2921 = verf.f32.pop %v2857
        %v2922 = verf.f32.pop %v2858
        %v2923 = verf.f32.pop %v2859
        %v2924 = verf.f32.pop %v2860
        %v2925 = verf.f32.pop %v2861
        %v2926 = verf.f32.pop %v2862
        %v2927 = verf.f32.pop %v2863
        %v2928 = verf.f32.pop %v2864
        %v2929 = verf.f32.pop %v2865
        %v2930 = verf.f32.pop %v2866
        %v2931 = verf.f32.pop %v2867
        %v2932 = verf.f32.pop %v2868
        %v2933 = verf.f32.pop %v2869
        %v2934 = verf.f32.pop %v2870
        %v2935 = verf.f32.pop %v2871
        %v2936 = verf.f32.pop %v2872
        %v2937 = verf.f32.pop %v2873
        %v2938 = verf.f32.pop %v2874
        %v2939 = verf.f32.pop %v2875
        %v2940 = verf.f32.pop %v2876
        %v2941 = verf.f32.pop %v2877
        %v2942 = verf.f32.pop %v2878
        %v2943 = verf.f32.pop %v2879
        %v2944 = verf.f32.pop %v2880
        %v2945 = verf.f32.pop %v2881
        %v2946 = verf.f32.pop %v2882
        %v2947 = verf.f32.pop %v2883
        %v2948 = verf.f32.pop %v2884
        %v2949 = verf.f32.pop %v2885
        %v2950 = verf.f32.pop %v2886
        %v2951 = verf.f32.pop %v2887
        %v2952 = verf.f32.pop %v2888
        %v2953 = verf.f32.pop %v2889
        %v2954 = verf.f32.pop %v2890
        %v2955 = verf.f32.pop %v2891
        %v2956 = verf.f32.pop %v2892
        %v2957 = verf.f32.pop %v2893
        %v2958 = verf.f32.pop %v2894
        %v2959 = verf.f32.pop %v2895
        %v2960 = verf.f32.pop %v2896
        %v2961 = verf.f32.pop %v2897
        %v2962 = verf.f32.pop %v2898
        %v2963 = verf.f32.pop %v2899
        %v2964 = verf.f32.pop %v2900
        %v2965 = vadd.f32 %v2901, 1.0
        %v2966 = vadd.f32 %v2902, 1.0
        %v2967 = vadd.f32 %v2903, 1.0
        %v2968 = vadd.f32 %v2904, 1.0
        %v2969 = vadd.f32 %v2905, 1.0
        %v2970 = vadd.f32 %v2906, 1.0
        %v2971 = vadd.f32 %v2907, 1.0
        %v2972 = vadd.f32 %v2908, 1.0
        %v2973 = vadd.f32 %v2909, 1.0
        %v2974 = vadd.f32 %v2910, 1.0
        %v2975 = vadd.f32 %v2911, 1.0
        %v2976 = vadd.f32 %v2912, 1.0
        %v2977 = vadd.f32 %v2913, 1.0
        %v2978 = vadd.f32 %v2914, 1.0
        %v2979 = vadd.f32 %v2915, 1.0
        %v2980 = vadd.f32 %v2916, 1.0
        %v2981 = vadd.f32 %v2917, 1.0
        %v2982 = vadd.f32 %v2918, 1.0
        %v2983 = vadd.f32 %v2919, 1.0
        %v2984 = vadd.f32 %v2920, 1.0
        %v2985 = vadd.f32 %v2921, 1.0
        %v2986 = vadd.f32 %v2922, 1.0
        %v2987 = vadd.f32 %v2923, 1.0
        %v2988 = vadd.f32 %v2924, 1.0
        %v2989 = vadd.f32 %v2925, 1.0
        %v2990 = vadd.f32 %v2926, 1.0
        %v2991 = vadd.f32 %v2927, 1.0
        %v2992 = vadd.f32 %v2928, 1.0
        %v2993 = vadd.f32 %v2929, 1.0
        %v2994 = vadd.f32 %v2930, 1.0
        %v2995 = vadd.f32 %v2931, 1.0
        %v2996 = vadd.f32 %v2932, 1.0
        %v2997 = vadd.f32 %v2933, 1.0
        %v2998 = vadd.f32 %v2934, 1.0
        %v2999 = vadd.f32 %v2935, 1.0
        %v3000 = vadd.f32 %v2936, 1.0
        %v3001 = vadd.f32 %v2937, 1.0
        %v3002 = vadd.f32 %v2938, 1.0
        %v3003 = vadd.f32 %v2939, 1.0
        %v3004 = vadd.f32 %v2940, 1.0
        %v3005 = vadd.f32 %v2941, 1.0
        %v3006 = vadd.f32 %v2942, 1.0
        %v3007 = vadd.f32 %v2943, 1.0
        %v3008 = vadd.f32 %v2944, 1.0
        %v3009 = vadd.f32 %v2945, 1.0
        %v3010 = vadd.f32 %v2946, 1.0
        %v3011 = vadd.f32 %v2947, 1.0
        %v3012 = vadd.f32 %v2948, 1.0
        %v3013 = vadd.f32 %v2949, 1.0
        %v3014 = vadd.f32 %v2950, 1.0
        %v3015 = vadd.f32 %v2951, 1.0
        %v3016 = vadd.f32 %v2952, 1.0
        %v3017 = vadd.f32 %v2953, 1.0
        %v3018 = vadd.f32 %v2954, 1.0
        %v3019 = vadd.f32 %v2955, 1.0
        %v3020 = vadd.f32 %v2956, 1.0
        %v3021 = vadd.f32 %v2957, 1.0
        %v3022 = vadd.f32 %v2958, 1.0
        %v3023 = vadd.f32 %v2959, 1.0
        %v3024 = vadd.f32 %v2960, 1.0
        %v3025 = vadd.f32 %v2961, 1.0
        %v3026 = vadd.f32 %v2962, 1.0
        %v3027 = vadd.f32 %v2963, 1.0
        %v3028 = vadd.f32 %v2964, 1.0
        %v3029 = vmul.f32 %v2773, %v2965
        %v3030 = vmul.f32 %v2774, %v2966
        %v3031 = vmul.f32 %v2775, %v2967
        %v3032 = vmul.f32 %v2776, %v2968
        %v3033 = vmul.f32 %v2777, %v2969
        %v3034 = vmul.f32 %v2778, %v2970
        %v3035 = vmul.f32 %v2779, %v2971
        %v3036 = vmul.f32 %v2780, %v2972
        %v3037 = vmul.f32 %v2781, %v2973
        %v3038 = vmul.f32 %v2782, %v2974
        %v3039 = vmul.f32 %v2783, %v2975
        %v3040 = vmul.f32 %v2784, %v2976
        %v3041 = vmul.f32 %v2785, %v2977
        %v3042 = vmul.f32 %v2786, %v2978
        %v3043 = vmul.f32 %v2787, %v2979
        %v3044 = vmul.f32 %v2788, %v2980
        %v3045 = vmul.f32 %v2789, %v2981
        %v3046 = vmul.f32 %v2790, %v2982
        %v3047 = vmul.f32 %v2791, %v2983
        %v3048 = vmul.f32 %v2792, %v2984
        %v3049 = vmul.f32 %v2793, %v2985
        %v3050 = vmul.f32 %v2794, %v2986
        %v3051 = vmul.f32 %v2795, %v2987
        %v3052 = vmul.f32 %v2796, %v2988
        %v3053 = vmul.f32 %v2797, %v2989
        %v3054 = vmul.f32 %v2798, %v2990
        %v3055 = vmul.f32 %v2799, %v2991
        %v3056 = vmul.f32 %v2800, %v2992
        %v3057 = vmul.f32 %v2801, %v2993
        %v3058 = vmul.f32 %v2802, %v2994
        %v3059 = vmul.f32 %v2803, %v2995
        %v3060 = vmul.f32 %v2804, %v2996
        %v3061 = vmul.f32 %v2805, %v2997
        %v3062 = vmul.f32 %v2806, %v2998
        %v3063 = vmul.f32 %v2807, %v2999
        %v3064 = vmul.f32 %v2808, %v3000
        %v3065 = vmul.f32 %v2809, %v3001
        %v3066 = vmul.f32 %v2810, %v3002
        %v3067 = vmul.f32 %v2811, %v3003
        %v3068 = vmul.f32 %v2812, %v3004
        %v3069 = vmul.f32 %v2813, %v3005
        %v3070 = vmul.f32 %v2814, %v3006
        %v3071 = vmul.f32 %v2815, %v3007
        %v3072 = vmul.f32 %v2816, %v3008
        %v3073 = vmul.f32 %v2817, %v3009
        %v3074 = vmul.f32 %v2818, %v3010
        %v3075 = vmul.f32 %v2819, %v3011
        %v3076 = vmul.f32 %v2820, %v3012
        %v3077 = vmul.f32 %v2821, %v3013
        %v3078 = vmul.f32 %v2822, %v3014
        %v3079 = vmul.f32 %v2823, %v3015
        %v3080 = vmul.f32 %v2824, %v3016
        %v3081 = vmul.f32 %v2825, %v3017
        %v3082 = vmul.f32 %v2826, %v3018
        %v3083 = vmul.f32 %v2827, %v3019
        %v3084 = vmul.f32 %v2828, %v3020
        %v3085 = vmul.f32 %v2829, %v3021
        %v3086 = vmul.f32 %v2830, %v3022
        %v3087 = vmul.f32 %v2831, %v3023
        %v3088 = vmul.f32 %v2832, %v3024
        %v3089 = vmul.f32 %v2833, %v3025
        %v3090 = vmul.f32 %v2834, %v3026
        %v3091 = vmul.f32 %v2835, %v3027
        %v3092 = vmul.f32 %v2836, %v3028
        %v3093 = vpack.c.bf16 %v3037, %v3029
        %v3094 = vpack.c.bf16 %v3038, %v3030
        %v3095 = vpack.c.bf16 %v3039, %v3031
        %v3096 = vpack.c.bf16 %v3040, %v3032
        %v3097 = vpack.c.bf16 %v3041, %v3033
        %v3098 = vpack.c.bf16 %v3042, %v3034
        %v3099 = vpack.c.bf16 %v3043, %v3035
        %v3100 = vpack.c.bf16 %v3044, %v3036
        %v3101 = vpack.c.bf16 %v3053, %v3045
        %v3102 = vpack.c.bf16 %v3054, %v3046
        %v3103 = vpack.c.bf16 %v3055, %v3047
        %v3104 = vpack.c.bf16 %v3056, %v3048
        %v3105 = vpack.c.bf16 %v3057, %v3049
        %v3106 = vpack.c.bf16 %v3058, %v3050
        %v3107 = vpack.c.bf16 %v3059, %v3051
        %v3108 = vpack.c.bf16 %v3060, %v3052
        %v3109 = vpack.c.bf16 %v3069, %v3061
        %v3110 = vpack.c.bf16 %v3070, %v3062
        %v3111 = vpack.c.bf16 %v3071, %v3063
        %v3112 = vpack.c.bf16 %v3072, %v3064
        %v3113 = vpack.c.bf16 %v3073, %v3065
        %v3114 = vpack.c.bf16 %v3074, %v3066
        %v3115 = vpack.c.bf16 %v3075, %v3067
        %v3116 = vpack.c.bf16 %v3076, %v3068
        %v3117 = vpack.c.bf16 %v3085, %v3077
        %v3118 = vpack.c.bf16 %v3086, %v3078
        %v3119 = vpack.c.bf16 %v3087, %v3079
        %v3120 = vpack.c.bf16 %v3088, %v3080
        %v3121 = vpack.c.bf16 %v3089, %v3081
        %v3122 = vpack.c.bf16 %v3090, %v3082
        %v3123 = vpack.c.bf16 %v3091, %v3083
        %v3124 = vpack.c.bf16 %v3092, %v3084
        %v3125 = vld [vmem:[#allocation10] sm:$0xff]
        %v3126 = vld [vmem:[#allocation10 + $0x8] sm:$0xff]
        %v3127 = vld [vmem:[#allocation10 + $0x10] sm:$0xff]
        %v3128 = vld [vmem:[#allocation10 + $0x18] sm:$0xff]
        %v3129 = vld [vmem:[#allocation10 + $0x20] sm:$0xff]
        %v3130 = vld [vmem:[#allocation10 + $0x28] sm:$0xff]
        %v3131 = vld [vmem:[#allocation10 + $0x30] sm:$0xff]
        %v3132 = vld [vmem:[#allocation10 + $0x38] sm:$0xff]
        %v3133 = vld [vmem:[#allocation10 + $0x40] sm:$0xff]
        %v3134 = vld [vmem:[#allocation10 + $0x48] sm:$0xff]
        %v3135 = vld [vmem:[#allocation10 + $0x50] sm:$0xff]
        %v3136 = vld [vmem:[#allocation10 + $0x58] sm:$0xff]
        %v3137 = vld [vmem:[#allocation10 + $0x60] sm:$0xff]
        %v3138 = vld [vmem:[#allocation10 + $0x68] sm:$0xff]
        %v3139 = vld [vmem:[#allocation10 + $0x70] sm:$0xff]
        %v3140 = vld [vmem:[#allocation10 + $0x78] sm:$0xff]
        %v3141 = vld [vmem:[#allocation10 + $0x80] sm:$0xff]
        %v3142 = vld [vmem:[#allocation10 + $0x88] sm:$0xff]
        %v3143 = vld [vmem:[#allocation10 + $0x90] sm:$0xff]
        %v3144 = vld [vmem:[#allocation10 + $0x98] sm:$0xff]
        %v3145 = vld [vmem:[#allocation10 + $0xa0] sm:$0xff]
        %v3146 = vld [vmem:[#allocation10 + $0xa8] sm:$0xff]
        %v3147 = vld [vmem:[#allocation10 + $0xb0] sm:$0xff]
        %v3148 = vld [vmem:[#allocation10 + $0xb8] sm:$0xff]
        %v3149 = vld [vmem:[#allocation10 + $0xc0] sm:$0xff]
        %v3150 = vld [vmem:[#allocation10 + $0xc8] sm:$0xff]
        %v3151 = vld [vmem:[#allocation10 + $0xd0] sm:$0xff]
        %v3152 = vld [vmem:[#allocation10 + $0xd8] sm:$0xff]
        %v3153 = vld [vmem:[#allocation10 + $0xe0] sm:$0xff]
        %v3154 = vld [vmem:[#allocation10 + $0xe8] sm:$0xff]
        %v3155 = vld [vmem:[#allocation10 + $0xf0] sm:$0xff]
        %v3156 = vld [vmem:[#allocation10 + $0xf8] sm:$0xff]
        %v3157 = vld [vmem:[#allocation10 + $0x100] sm:$0xff]
        %v3158 = vld [vmem:[#allocation10 + $0x108] sm:$0xff]
        %v3159 = vld [vmem:[#allocation10 + $0x110] sm:$0xff]
        %v3160 = vld [vmem:[#allocation10 + $0x118] sm:$0xff]
        %v3161 = vld [vmem:[#allocation10 + $0x120] sm:$0xff]
        %v3162 = vld [vmem:[#allocation10 + $0x128] sm:$0xff]
        %v3163 = vld [vmem:[#allocation10 + $0x130] sm:$0xff]
        %v3164 = vld [vmem:[#allocation10 + $0x138] sm:$0xff]
        %v3165 = vld [vmem:[#allocation10 + $0x140] sm:$0xff]
        %v3166 = vld [vmem:[#allocation10 + $0x148] sm:$0xff]
        %v3167 = vld [vmem:[#allocation10 + $0x150] sm:$0xff]
        %v3168 = vld [vmem:[#allocation10 + $0x158] sm:$0xff]
        %v3169 = vld [vmem:[#allocation10 + $0x160] sm:$0xff]
        %v3170 = vld [vmem:[#allocation10 + $0x168] sm:$0xff]
        %v3171 = vld [vmem:[#allocation10 + $0x170] sm:$0xff]
        %v3172 = vld [vmem:[#allocation10 + $0x178] sm:$0xff]
        %v3173 = vld [vmem:[#allocation10 + $0x180] sm:$0xff]
        %v3174 = vld [vmem:[#allocation10 + $0x188] sm:$0xff]
        %v3175 = vld [vmem:[#allocation10 + $0x190] sm:$0xff]
        %v3176 = vld [vmem:[#allocation10 + $0x198] sm:$0xff]
        %v3177 = vld [vmem:[#allocation10 + $0x1a0] sm:$0xff]
        %v3178 = vld [vmem:[#allocation10 + $0x1a8] sm:$0xff]
        %v3179 = vld [vmem:[#allocation10 + $0x1b0] sm:$0xff]
        %v3180 = vld [vmem:[#allocation10 + $0x1b8] sm:$0xff]
        %v3181 = vld [vmem:[#allocation10 + $0x1c0] sm:$0xff]
        %v3182 = vld [vmem:[#allocation10 + $0x1c8] sm:$0xff]
        %v3183 = vld [vmem:[#allocation10 + $0x1d0] sm:$0xff]
        %v3184 = vld [vmem:[#allocation10 + $0x1d8] sm:$0xff]
        %v3185 = vld [vmem:[#allocation10 + $0x1e0] sm:$0xff]
        %v3186 = vld [vmem:[#allocation10 + $0x1e8] sm:$0xff]
        %v3187 = vld [vmem:[#allocation10 + $0x1f0] sm:$0xff]
        %v3188 = vld [vmem:[#allocation10 + $0x1f8] sm:$0xff]
        %v3189 = vld [vmem:[#allocation10 + $0x200] sm:$0xff]
        %v3190 = vld [vmem:[#allocation10 + $0x208] sm:$0xff]
        %v3191 = vld [vmem:[#allocation10 + $0x210] sm:$0xff]
        %v3192 = vld [vmem:[#allocation10 + $0x218] sm:$0xff]
        %v3193 = vld [vmem:[#allocation10 + $0x220] sm:$0xff]
        %v3194 = vld [vmem:[#allocation10 + $0x228] sm:$0xff]
        %v3195 = vld [vmem:[#allocation10 + $0x230] sm:$0xff]
        %v3196 = vld [vmem:[#allocation10 + $0x238] sm:$0xff]
        %v3197 = vld [vmem:[#allocation10 + $0x240] sm:$0xff]
        %v3198 = vld [vmem:[#allocation10 + $0x248] sm:$0xff]
        %v3199 = vld [vmem:[#allocation10 + $0x250] sm:$0xff]
        %v3200 = vld [vmem:[#allocation10 + $0x258] sm:$0xff]
        %v3201 = vld [vmem:[#allocation10 + $0x260] sm:$0xff]
        %v3202 = vld [vmem:[#allocation10 + $0x268] sm:$0xff]
        %v3203 = vld [vmem:[#allocation10 + $0x270] sm:$0xff]
        %v3204 = vld [vmem:[#allocation10 + $0x278] sm:$0xff]
        %v3205 = vld [vmem:[#allocation10 + $0x280] sm:$0xff]
        %v3206 = vld [vmem:[#allocation10 + $0x288] sm:$0xff]
        %v3207 = vld [vmem:[#allocation10 + $0x290] sm:$0xff]
        %v3208 = vld [vmem:[#allocation10 + $0x298] sm:$0xff]
        %v3209 = vld [vmem:[#allocation10 + $0x2a0] sm:$0xff]
        %v3210 = vld [vmem:[#allocation10 + $0x2a8] sm:$0xff]
        %v3211 = vld [vmem:[#allocation10 + $0x2b0] sm:$0xff]
        %v3212 = vld [vmem:[#allocation10 + $0x2b8] sm:$0xff]
        %v3213 = vld [vmem:[#allocation10 + $0x2c0] sm:$0xff]
        %v3214 = vld [vmem:[#allocation10 + $0x2c8] sm:$0xff]
        %v3215 = vld [vmem:[#allocation10 + $0x2d0] sm:$0xff]
        %v3216 = vld [vmem:[#allocation10 + $0x2d8] sm:$0xff]
        %v3217 = vld [vmem:[#allocation10 + $0x2e0] sm:$0xff]
        %v3218 = vld [vmem:[#allocation10 + $0x2e8] sm:$0xff]
        %v3219 = vld [vmem:[#allocation10 + $0x2f0] sm:$0xff]
        %v3220 = vld [vmem:[#allocation10 + $0x2f8] sm:$0xff]
        %v3221 = vld [vmem:[#allocation10 + $0x300] sm:$0xff]
        %v3222 = vld [vmem:[#allocation10 + $0x308] sm:$0xff]
        %v3223 = vld [vmem:[#allocation10 + $0x310] sm:$0xff]
        %v3224 = vld [vmem:[#allocation10 + $0x318] sm:$0xff]
        %v3225 = vld [vmem:[#allocation10 + $0x320] sm:$0xff]
        %v3226 = vld [vmem:[#allocation10 + $0x328] sm:$0xff]
        %v3227 = vld [vmem:[#allocation10 + $0x330] sm:$0xff]
        %v3228 = vld [vmem:[#allocation10 + $0x338] sm:$0xff]
        %v3229 = vld [vmem:[#allocation10 + $0x340] sm:$0xff]
        %v3230 = vld [vmem:[#allocation10 + $0x348] sm:$0xff]
        %v3231 = vld [vmem:[#allocation10 + $0x350] sm:$0xff]
        %v3232 = vld [vmem:[#allocation10 + $0x358] sm:$0xff]
        %v3233 = vld [vmem:[#allocation10 + $0x360] sm:$0xff]
        %v3234 = vld [vmem:[#allocation10 + $0x368] sm:$0xff]
        %v3235 = vld [vmem:[#allocation10 + $0x370] sm:$0xff]
        %v3236 = vld [vmem:[#allocation10 + $0x378] sm:$0xff]
        %v3237 = vld [vmem:[#allocation10 + $0x380] sm:$0xff]
        %v3238 = vld [vmem:[#allocation10 + $0x388] sm:$0xff]
        %v3239 = vld [vmem:[#allocation10 + $0x390] sm:$0xff]
        %v3240 = vld [vmem:[#allocation10 + $0x398] sm:$0xff]
        %v3241 = vld [vmem:[#allocation10 + $0x3a0] sm:$0xff]
        %v3242 = vld [vmem:[#allocation10 + $0x3a8] sm:$0xff]
        %v3243 = vld [vmem:[#allocation10 + $0x3b0] sm:$0xff]
        %v3244 = vld [vmem:[#allocation10 + $0x3b8] sm:$0xff]
        %v3245 = vld [vmem:[#allocation10 + $0x3c0] sm:$0xff]
        %v3246 = vld [vmem:[#allocation10 + $0x3c8] sm:$0xff]
        %v3247 = vld [vmem:[#allocation10 + $0x3d0] sm:$0xff]
        %v3248 = vld [vmem:[#allocation10 + $0x3d8] sm:$0xff]
        %v3249 = vld [vmem:[#allocation10 + $0x3e0] sm:$0xff]
        %v3250 = vld [vmem:[#allocation10 + $0x3e8] sm:$0xff]
        %v3251 = vld [vmem:[#allocation10 + $0x3f0] sm:$0xff]
        %v3252 = vld [vmem:[#allocation10 + $0x3f8] sm:$0xff]
        %v3253 = vld [vmem:[%s13] sm:$0x3]
        %v3255 = vlaneseq
        %v3256 = vshrl.u32 %v3255, 7
        %v3257 = vsub.s32 0, %v3256
        %v3258 = vrot.slane %v3253, %v3257
        %v3259 = vlaneseq
        %v3260 = vshrl.u32 %v3259, 7
        %v3261 = vsub.s32 1, %v3260
        %v3262 = vrot.slane %v3253, %v3261
        %v3393 = vunpack.c.l.b16 %v3125
        %v3394 = vunpack.c.h.b16 %v3125
        %v3395 = vunpack.c.l.b16 %v3126
        %v3396 = vunpack.c.h.b16 %v3126
        %v3397 = vunpack.c.l.b16 %v3127
        %v3398 = vunpack.c.h.b16 %v3127
        %v3399 = vunpack.c.l.b16 %v3128
        %v3400 = vunpack.c.h.b16 %v3128
        %v3401 = vunpack.c.l.b16 %v3129
        %v3402 = vunpack.c.h.b16 %v3129
        %v3403 = vunpack.c.l.b16 %v3130
        %v3404 = vunpack.c.h.b16 %v3130
        %v3405 = vunpack.c.l.b16 %v3131
        %v3406 = vunpack.c.h.b16 %v3131
        %v3407 = vunpack.c.l.b16 %v3132
        %v3408 = vunpack.c.h.b16 %v3132
        %v3409 = vunpack.c.l.b16 %v3133
        %v3410 = vunpack.c.h.b16 %v3133
        %v3411 = vunpack.c.l.b16 %v3134
        %v3412 = vunpack.c.h.b16 %v3134
        %v3413 = vunpack.c.l.b16 %v3135
        %v3414 = vunpack.c.h.b16 %v3135
        %v3415 = vunpack.c.l.b16 %v3136
        %v3416 = vunpack.c.h.b16 %v3136
        %v3417 = vunpack.c.l.b16 %v3137
        %v3418 = vunpack.c.h.b16 %v3137
        %v3419 = vunpack.c.l.b16 %v3138
        %v3420 = vunpack.c.h.b16 %v3138
        %v3421 = vunpack.c.l.b16 %v3139
        %v3422 = vunpack.c.h.b16 %v3139
        %v3423 = vunpack.c.l.b16 %v3140
        %v3424 = vunpack.c.h.b16 %v3140
        %v3425 = vunpack.c.l.b16 %v3141
        %v3426 = vunpack.c.h.b16 %v3141
        %v3427 = vunpack.c.l.b16 %v3142
        %v3428 = vunpack.c.h.b16 %v3142
        %v3429 = vunpack.c.l.b16 %v3143
        %v3430 = vunpack.c.h.b16 %v3143
        %v3431 = vunpack.c.l.b16 %v3144
        %v3432 = vunpack.c.h.b16 %v3144
        %v3433 = vunpack.c.l.b16 %v3145
        %v3434 = vunpack.c.h.b16 %v3145
        %v3435 = vunpack.c.l.b16 %v3146
        %v3436 = vunpack.c.h.b16 %v3146
        %v3437 = vunpack.c.l.b16 %v3147
        %v3438 = vunpack.c.h.b16 %v3147
        %v3439 = vunpack.c.l.b16 %v3148
        %v3440 = vunpack.c.h.b16 %v3148
        %v3441 = vunpack.c.l.b16 %v3149
        %v3442 = vunpack.c.h.b16 %v3149
        %v3443 = vunpack.c.l.b16 %v3150
        %v3444 = vunpack.c.h.b16 %v3150
        %v3445 = vunpack.c.l.b16 %v3151
        %v3446 = vunpack.c.h.b16 %v3151
        %v3447 = vunpack.c.l.b16 %v3152
        %v3448 = vunpack.c.h.b16 %v3152
        %v3449 = vunpack.c.l.b16 %v3153
        %v3450 = vunpack.c.h.b16 %v3153
        %v3451 = vunpack.c.l.b16 %v3154
        %v3452 = vunpack.c.h.b16 %v3154
        %v3453 = vunpack.c.l.b16 %v3155
        %v3454 = vunpack.c.h.b16 %v3155
        %v3455 = vunpack.c.l.b16 %v3156
        %v3456 = vunpack.c.h.b16 %v3156
        %v3457 = vunpack.c.l.b16 %v3157
        %v3458 = vunpack.c.h.b16 %v3157
        %v3459 = vunpack.c.l.b16 %v3158
        %v3460 = vunpack.c.h.b16 %v3158
        %v3461 = vunpack.c.l.b16 %v3159
        %v3462 = vunpack.c.h.b16 %v3159
        %v3463 = vunpack.c.l.b16 %v3160
        %v3464 = vunpack.c.h.b16 %v3160
        %v3465 = vunpack.c.l.b16 %v3161
        %v3466 = vunpack.c.h.b16 %v3161
        %v3467 = vunpack.c.l.b16 %v3162
        %v3468 = vunpack.c.h.b16 %v3162
        %v3469 = vunpack.c.l.b16 %v3163
        %v3470 = vunpack.c.h.b16 %v3163
        %v3471 = vunpack.c.l.b16 %v3164
        %v3472 = vunpack.c.h.b16 %v3164
        %v3473 = vunpack.c.l.b16 %v3165
        %v3474 = vunpack.c.h.b16 %v3165
        %v3475 = vunpack.c.l.b16 %v3166
        %v3476 = vunpack.c.h.b16 %v3166
        %v3477 = vunpack.c.l.b16 %v3167
        %v3478 = vunpack.c.h.b16 %v3167
        %v3479 = vunpack.c.l.b16 %v3168
        %v3480 = vunpack.c.h.b16 %v3168
        %v3481 = vunpack.c.l.b16 %v3169
        %v3482 = vunpack.c.h.b16 %v3169
        %v3483 = vunpack.c.l.b16 %v3170
        %v3484 = vunpack.c.h.b16 %v3170
        %v3485 = vunpack.c.l.b16 %v3171
        %v3486 = vunpack.c.h.b16 %v3171
        %v3487 = vunpack.c.l.b16 %v3172
        %v3488 = vunpack.c.h.b16 %v3172
        %v3489 = vunpack.c.l.b16 %v3173
        %v3490 = vunpack.c.h.b16 %v3173
        %v3491 = vunpack.c.l.b16 %v3174
        %v3492 = vunpack.c.h.b16 %v3174
        %v3493 = vunpack.c.l.b16 %v3175
        %v3494 = vunpack.c.h.b16 %v3175
        %v3495 = vunpack.c.l.b16 %v3176
        %v3496 = vunpack.c.h.b16 %v3176
        %v3497 = vunpack.c.l.b16 %v3177
        %v3498 = vunpack.c.h.b16 %v3177
        %v3499 = vunpack.c.l.b16 %v3178
        %v3500 = vunpack.c.h.b16 %v3178
        %v3501 = vunpack.c.l.b16 %v3179
        %v3502 = vunpack.c.h.b16 %v3179
        %v3503 = vunpack.c.l.b16 %v3180
        %v3504 = vunpack.c.h.b16 %v3180
        %v3505 = vunpack.c.l.b16 %v3181
        %v3506 = vunpack.c.h.b16 %v3181
        %v3507 = vunpack.c.l.b16 %v3182
        %v3508 = vunpack.c.h.b16 %v3182
        %v3509 = vunpack.c.l.b16 %v3183
        %v3510 = vunpack.c.h.b16 %v3183
        %v3511 = vunpack.c.l.b16 %v3184
        %v3512 = vunpack.c.h.b16 %v3184
        %v3513 = vunpack.c.l.b16 %v3185
        %v3514 = vunpack.c.h.b16 %v3185
        %v3515 = vunpack.c.l.b16 %v3186
        %v3516 = vunpack.c.h.b16 %v3186
        %v3517 = vunpack.c.l.b16 %v3187
        %v3518 = vunpack.c.h.b16 %v3187
        %v3519 = vunpack.c.l.b16 %v3188
        %v3520 = vunpack.c.h.b16 %v3188
        %v3521 = vunpack.c.l.b16 %v3189
        %v3522 = vunpack.c.h.b16 %v3189
        %v3523 = vunpack.c.l.b16 %v3190
        %v3524 = vunpack.c.h.b16 %v3190
        %v3525 = vunpack.c.l.b16 %v3191
        %v3526 = vunpack.c.h.b16 %v3191
        %v3527 = vunpack.c.l.b16 %v3192
        %v3528 = vunpack.c.h.b16 %v3192
        %v3529 = vunpack.c.l.b16 %v3193
        %v3530 = vunpack.c.h.b16 %v3193
        %v3531 = vunpack.c.l.b16 %v3194
        %v3532 = vunpack.c.h.b16 %v3194
        %v3533 = vunpack.c.l.b16 %v3195
        %v3534 = vunpack.c.h.b16 %v3195
        %v3535 = vunpack.c.l.b16 %v3196
        %v3536 = vunpack.c.h.b16 %v3196
        %v3537 = vunpack.c.l.b16 %v3197
        %v3538 = vunpack.c.h.b16 %v3197
        %v3539 = vunpack.c.l.b16 %v3198
        %v3540 = vunpack.c.h.b16 %v3198
        %v3541 = vunpack.c.l.b16 %v3199
        %v3542 = vunpack.c.h.b16 %v3199
        %v3543 = vunpack.c.l.b16 %v3200
        %v3544 = vunpack.c.h.b16 %v3200
        %v3545 = vunpack.c.l.b16 %v3201
        %v3546 = vunpack.c.h.b16 %v3201
        %v3547 = vunpack.c.l.b16 %v3202
        %v3548 = vunpack.c.h.b16 %v3202
        %v3549 = vunpack.c.l.b16 %v3203
        %v3550 = vunpack.c.h.b16 %v3203
        %v3551 = vunpack.c.l.b16 %v3204
        %v3552 = vunpack.c.h.b16 %v3204
        %v3553 = vunpack.c.l.b16 %v3205
        %v3554 = vunpack.c.h.b16 %v3205
        %v3555 = vunpack.c.l.b16 %v3206
        %v3556 = vunpack.c.h.b16 %v3206
        %v3557 = vunpack.c.l.b16 %v3207
        %v3558 = vunpack.c.h.b16 %v3207
        %v3559 = vunpack.c.l.b16 %v3208
        %v3560 = vunpack.c.h.b16 %v3208
        %v3561 = vunpack.c.l.b16 %v3209
        %v3562 = vunpack.c.h.b16 %v3209
        %v3563 = vunpack.c.l.b16 %v3210
        %v3564 = vunpack.c.h.b16 %v3210
        %v3565 = vunpack.c.l.b16 %v3211
        %v3566 = vunpack.c.h.b16 %v3211
        %v3567 = vunpack.c.l.b16 %v3212
        %v3568 = vunpack.c.h.b16 %v3212
        %v3569 = vunpack.c.l.b16 %v3213
        %v3570 = vunpack.c.h.b16 %v3213
        %v3571 = vunpack.c.l.b16 %v3214
        %v3572 = vunpack.c.h.b16 %v3214
        %v3573 = vunpack.c.l.b16 %v3215
        %v3574 = vunpack.c.h.b16 %v3215
        %v3575 = vunpack.c.l.b16 %v3216
        %v3576 = vunpack.c.h.b16 %v3216
        %v3577 = vunpack.c.l.b16 %v3217
        %v3578 = vunpack.c.h.b16 %v3217
        %v3579 = vunpack.c.l.b16 %v3218
        %v3580 = vunpack.c.h.b16 %v3218
        %v3581 = vunpack.c.l.b16 %v3219
        %v3582 = vunpack.c.h.b16 %v3219
        %v3583 = vunpack.c.l.b16 %v3220
        %v3584 = vunpack.c.h.b16 %v3220
        %v3585 = vunpack.c.l.b16 %v3221
        %v3586 = vunpack.c.h.b16 %v3221
        %v3587 = vunpack.c.l.b16 %v3222
        %v3588 = vunpack.c.h.b16 %v3222
        %v3589 = vunpack.c.l.b16 %v3223
        %v3590 = vunpack.c.h.b16 %v3223
        %v3591 = vunpack.c.l.b16 %v3224
        %v3592 = vunpack.c.h.b16 %v3224
        %v3593 = vunpack.c.l.b16 %v3225
        %v3594 = vunpack.c.h.b16 %v3225
        %v3595 = vunpack.c.l.b16 %v3226
        %v3596 = vunpack.c.h.b16 %v3226
        %v3597 = vunpack.c.l.b16 %v3227
        %v3598 = vunpack.c.h.b16 %v3227
        %v3599 = vunpack.c.l.b16 %v3228
        %v3600 = vunpack.c.h.b16 %v3228
        %v3601 = vunpack.c.l.b16 %v3229
        %v3602 = vunpack.c.h.b16 %v3229
        %v3603 = vunpack.c.l.b16 %v3230
        %v3604 = vunpack.c.h.b16 %v3230
        %v3605 = vunpack.c.l.b16 %v3231
        %v3606 = vunpack.c.h.b16 %v3231
        %v3607 = vunpack.c.l.b16 %v3232
        %v3608 = vunpack.c.h.b16 %v3232
        %v3609 = vunpack.c.l.b16 %v3233
        %v3610 = vunpack.c.h.b16 %v3233
        %v3611 = vunpack.c.l.b16 %v3234
        %v3612 = vunpack.c.h.b16 %v3234
        %v3613 = vunpack.c.l.b16 %v3235
        %v3614 = vunpack.c.h.b16 %v3235
        %v3615 = vunpack.c.l.b16 %v3236
        %v3616 = vunpack.c.h.b16 %v3236
        %v3617 = vunpack.c.l.b16 %v3237
        %v3618 = vunpack.c.h.b16 %v3237
        %v3619 = vunpack.c.l.b16 %v3238
        %v3620 = vunpack.c.h.b16 %v3238
        %v3621 = vunpack.c.l.b16 %v3239
        %v3622 = vunpack.c.h.b16 %v3239
        %v3623 = vunpack.c.l.b16 %v3240
        %v3624 = vunpack.c.h.b16 %v3240
        %v3625 = vunpack.c.l.b16 %v3241
        %v3626 = vunpack.c.h.b16 %v3241
        %v3627 = vunpack.c.l.b16 %v3242
        %v3628 = vunpack.c.h.b16 %v3242
        %v3629 = vunpack.c.l.b16 %v3243
        %v3630 = vunpack.c.h.b16 %v3243
        %v3631 = vunpack.c.l.b16 %v3244
        %v3632 = vunpack.c.h.b16 %v3244
        %v3633 = vunpack.c.l.b16 %v3245
        %v3634 = vunpack.c.h.b16 %v3245
        %v3635 = vunpack.c.l.b16 %v3246
        %v3636 = vunpack.c.h.b16 %v3246
        %v3637 = vunpack.c.l.b16 %v3247
        %v3638 = vunpack.c.h.b16 %v3247
        %v3639 = vunpack.c.l.b16 %v3248
        %v3640 = vunpack.c.h.b16 %v3248
        %v3641 = vunpack.c.l.b16 %v3249
        %v3642 = vunpack.c.h.b16 %v3249
        %v3643 = vunpack.c.l.b16 %v3250
        %v3644 = vunpack.c.h.b16 %v3250
        %v3645 = vunpack.c.l.b16 %v3251
        %v3646 = vunpack.c.h.b16 %v3251
        %v3647 = vunpack.c.l.b16 %v3252
        %v3648 = vunpack.c.h.b16 %v3252
        %v3649 = vpack.c.b16 %v3395, %v3393
        %v3650 = vpack.c.b16 %v3396, %v3394
        %v3651 = vpack.c.b16 %v3399, %v3397
        %v3652 = vpack.c.b16 %v3400, %v3398
        %v3653 = vpack.c.b16 %v3403, %v3401
        %v3654 = vpack.c.b16 %v3404, %v3402
        %v3655 = vpack.c.b16 %v3407, %v3405
        %v3656 = vpack.c.b16 %v3408, %v3406
        %v3657 = vpack.c.b16 %v3411, %v3409
        %v3658 = vpack.c.b16 %v3412, %v3410
        %v3659 = vpack.c.b16 %v3415, %v3413
        %v3660 = vpack.c.b16 %v3416, %v3414
        %v3661 = vpack.c.b16 %v3419, %v3417
        %v3662 = vpack.c.b16 %v3420, %v3418
        %v3663 = vpack.c.b16 %v3423, %v3421
        %v3664 = vpack.c.b16 %v3424, %v3422
        %v3665 = vpack.c.b16 %v3427, %v3425
        %v3666 = vpack.c.b16 %v3428, %v3426
        %v3667 = vpack.c.b16 %v3431, %v3429
        %v3668 = vpack.c.b16 %v3432, %v3430
        %v3669 = vpack.c.b16 %v3435, %v3433
        %v3670 = vpack.c.b16 %v3436, %v3434
        %v3671 = vpack.c.b16 %v3439, %v3437
        %v3672 = vpack.c.b16 %v3440, %v3438
        %v3673 = vpack.c.b16 %v3443, %v3441
        %v3674 = vpack.c.b16 %v3444, %v3442
        %v3675 = vpack.c.b16 %v3447, %v3445
        %v3676 = vpack.c.b16 %v3448, %v3446
        %v3677 = vpack.c.b16 %v3451, %v3449
        %v3678 = vpack.c.b16 %v3452, %v3450
        %v3679 = vpack.c.b16 %v3455, %v3453
        %v3680 = vpack.c.b16 %v3456, %v3454
        %v3681 = vpack.c.b16 %v3459, %v3457
        %v3682 = vpack.c.b16 %v3460, %v3458
        %v3683 = vpack.c.b16 %v3463, %v3461
        %v3684 = vpack.c.b16 %v3464, %v3462
        %v3685 = vpack.c.b16 %v3467, %v3465
        %v3686 = vpack.c.b16 %v3468, %v3466
        %v3687 = vpack.c.b16 %v3471, %v3469
        %v3688 = vpack.c.b16 %v3472, %v3470
        %v3689 = vpack.c.b16 %v3475, %v3473
        %v3690 = vpack.c.b16 %v3476, %v3474
        %v3691 = vpack.c.b16 %v3479, %v3477
        %v3692 = vpack.c.b16 %v3480, %v3478
        %v3693 = vpack.c.b16 %v3483, %v3481
        %v3694 = vpack.c.b16 %v3484, %v3482
        %v3695 = vpack.c.b16 %v3487, %v3485
        %v3696 = vpack.c.b16 %v3488, %v3486
        %v3697 = vpack.c.b16 %v3491, %v3489
        %v3698 = vpack.c.b16 %v3492, %v3490
        %v3699 = vpack.c.b16 %v3495, %v3493
        %v3700 = vpack.c.b16 %v3496, %v3494
        %v3701 = vpack.c.b16 %v3499, %v3497
        %v3702 = vpack.c.b16 %v3500, %v3498
        %v3703 = vpack.c.b16 %v3503, %v3501
        %v3704 = vpack.c.b16 %v3504, %v3502
        %v3705 = vpack.c.b16 %v3507, %v3505
        %v3706 = vpack.c.b16 %v3508, %v3506
        %v3707 = vpack.c.b16 %v3511, %v3509
        %v3708 = vpack.c.b16 %v3512, %v3510
        %v3709 = vpack.c.b16 %v3515, %v3513
        %v3710 = vpack.c.b16 %v3516, %v3514
        %v3711 = vpack.c.b16 %v3519, %v3517
        %v3712 = vpack.c.b16 %v3520, %v3518
        %v3713 = vpack.c.b16 %v3523, %v3521
        %v3714 = vpack.c.b16 %v3524, %v3522
        %v3715 = vpack.c.b16 %v3527, %v3525
        %v3716 = vpack.c.b16 %v3528, %v3526
        %v3717 = vpack.c.b16 %v3531, %v3529
        %v3718 = vpack.c.b16 %v3532, %v3530
        %v3719 = vpack.c.b16 %v3535, %v3533
        %v3720 = vpack.c.b16 %v3536, %v3534
        %v3721 = vpack.c.b16 %v3539, %v3537
        %v3722 = vpack.c.b16 %v3540, %v3538
        %v3723 = vpack.c.b16 %v3543, %v3541
        %v3724 = vpack.c.b16 %v3544, %v3542
        %v3725 = vpack.c.b16 %v3547, %v3545
        %v3726 = vpack.c.b16 %v3548, %v3546
        %v3727 = vpack.c.b16 %v3551, %v3549
        %v3728 = vpack.c.b16 %v3552, %v3550
        %v3729 = vpack.c.b16 %v3555, %v3553
        %v3730 = vpack.c.b16 %v3556, %v3554
        %v3731 = vpack.c.b16 %v3559, %v3557
        %v3732 = vpack.c.b16 %v3560, %v3558
        %v3733 = vpack.c.b16 %v3563, %v3561
        %v3734 = vpack.c.b16 %v3564, %v3562
        %v3735 = vpack.c.b16 %v3567, %v3565
        %v3736 = vpack.c.b16 %v3568, %v3566
        %v3737 = vpack.c.b16 %v3571, %v3569
        %v3738 = vpack.c.b16 %v3572, %v3570
        %v3739 = vpack.c.b16 %v3575, %v3573
        %v3740 = vpack.c.b16 %v3576, %v3574
        %v3741 = vpack.c.b16 %v3579, %v3577
        %v3742 = vpack.c.b16 %v3580, %v3578
        %v3743 = vpack.c.b16 %v3583, %v3581
        %v3744 = vpack.c.b16 %v3584, %v3582
        %v3745 = vpack.c.b16 %v3587, %v3585
        %v3746 = vpack.c.b16 %v3588, %v3586
        %v3747 = vpack.c.b16 %v3591, %v3589
        %v3748 = vpack.c.b16 %v3592, %v3590
        %v3749 = vpack.c.b16 %v3595, %v3593
        %v3750 = vpack.c.b16 %v3596, %v3594
        %v3751 = vpack.c.b16 %v3599, %v3597
        %v3752 = vpack.c.b16 %v3600, %v3598
        %v3753 = vpack.c.b16 %v3603, %v3601
        %v3754 = vpack.c.b16 %v3604, %v3602
        %v3755 = vpack.c.b16 %v3607, %v3605
        %v3756 = vpack.c.b16 %v3608, %v3606
        %v3757 = vpack.c.b16 %v3611, %v3609
        %v3758 = vpack.c.b16 %v3612, %v3610
        %v3759 = vpack.c.b16 %v3615, %v3613
        %v3760 = vpack.c.b16 %v3616, %v3614
        %v3761 = vpack.c.b16 %v3619, %v3617
        %v3762 = vpack.c.b16 %v3620, %v3618
        %v3763 = vpack.c.b16 %v3623, %v3621
        %v3764 = vpack.c.b16 %v3624, %v3622
        %v3765 = vpack.c.b16 %v3627, %v3625
        %v3766 = vpack.c.b16 %v3628, %v3626
        %v3767 = vpack.c.b16 %v3631, %v3629
        %v3768 = vpack.c.b16 %v3632, %v3630
        %v3769 = vpack.c.b16 %v3635, %v3633
        %v3770 = vpack.c.b16 %v3636, %v3634
        %v3771 = vpack.c.b16 %v3639, %v3637
        %v3772 = vpack.c.b16 %v3640, %v3638
        %v3773 = vpack.c.b16 %v3643, %v3641
        %v3774 = vpack.c.b16 %v3644, %v3642
        %v3775 = vpack.c.b16 %v3647, %v3645
        %v3776 = vpack.c.b16 %v3648, %v3646
        %3905 = vmatprep.subr.bf16.mxu0 %v3650
        %3906 = vmatpush1.bf16.msra.mxu0 %v3649
        %3907 = vmatprep.subr.bf16.mxu0 %v3652
        %3908 = vmatpush1.bf16.msra.mxu0 %v3651
        %3909 = vmatprep.subr.bf16.mxu0 %v3654
        %3910 = vmatpush1.bf16.msra.mxu0 %v3653
        %3911 = vmatprep.subr.bf16.mxu0 %v3656
        %3912 = vmatpush1.bf16.msra.mxu0 %v3655
        %3913 = vmatprep.subr.bf16.mxu0 %v3658
        %3914 = vmatpush1.bf16.msra.mxu0 %v3657
        %3915 = vmatprep.subr.bf16.mxu0 %v3660
        %3916 = vmatpush1.bf16.msra.mxu0 %v3659
        %3917 = vmatprep.subr.bf16.mxu0 %v3662
        %3918 = vmatpush1.bf16.msra.mxu0 %v3661
        %3919 = vmatprep.subr.bf16.mxu0 %v3664
        %3920 = vmatpush1.bf16.msra.mxu0 %v3663
        %3921 = vmatprep.subr.bf16.mxu0 %v3666
        %3922 = vmatpush1.bf16.msra.mxu0 %v3665
        %3923 = vmatprep.subr.bf16.mxu0 %v3668
        %3924 = vmatpush1.bf16.msra.mxu0 %v3667
        %3925 = vmatprep.subr.bf16.mxu0 %v3670
        %3926 = vmatpush1.bf16.msra.mxu0 %v3669
        %3927 = vmatprep.subr.bf16.mxu0 %v3672
        %3928 = vmatpush1.bf16.msra.mxu0 %v3671
        %3929 = vmatprep.subr.bf16.mxu0 %v3674
        %3930 = vmatpush1.bf16.msra.mxu0 %v3673
        %3931 = vmatprep.subr.bf16.mxu0 %v3676
        %3932 = vmatpush1.bf16.msra.mxu0 %v3675
        %3933 = vmatprep.subr.bf16.mxu0 %v3678
        %3934 = vmatpush1.bf16.msra.mxu0 %v3677
        %3935 = vmatprep.subr.bf16.mxu0 %v3680
        %3936 = vmatpush1.bf16.msra.mxu0 %v3679
        %3937 = vmatprep.mubr.bf16.mxu0 %v3094
        %3938 = vmatmul.mubr.bf16.gmra.mrb[0].mxu0 %v3093
        %v3939 = vpop.f32.mrb[0].mxu0
        %v3940 = vadd.f32 %v3258, %v3939
        %v3941 = vpop.f32.mrb[0].mxu0
        %v3942 = vadd.f32 %v3262, %v3941
        %v3943 = vpop.f32.mrb[0].mxu0
        %v3944 = vadd.f32 %v3258, %v3943
        %v3945 = vpop.f32.mrb[0].mxu0
        %v3946 = vadd.f32 %v3262, %v3945
        %3947 = vmatprep.mubr.bf16.mxu0 %v3102
        %3948 = vmatmul.mubr.bf16.gmra.mrb[0].mxu0 %v3101
        %v3949 = vpop.f32.mrb[0].mxu0
        %v3950 = vadd.f32 %v3258, %v3949
        %v3951 = vpop.f32.mrb[0].mxu0
        %v3952 = vadd.f32 %v3262, %v3951
        %v3953 = vpop.f32.mrb[0].mxu0
        %v3954 = vadd.f32 %v3258, %v3953
        %v3955 = vpop.f32.mrb[0].mxu0
        %v3956 = vadd.f32 %v3262, %v3955
        %3957 = vmatprep.mubr.bf16.mxu0 %v3110
        %3958 = vmatmul.mubr.bf16.gmra.mrb[0].mxu0 %v3109
        %v3959 = vpop.f32.mrb[0].mxu0
        %v3960 = vadd.f32 %v3258, %v3959
        %v3961 = vpop.f32.mrb[0].mxu0
        %v3962 = vadd.f32 %v3262, %v3961
        %v3963 = vpop.f32.mrb[0].mxu0
        %v3964 = vadd.f32 %v3258, %v3963
        %v3965 = vpop.f32.mrb[0].mxu0
        %v3966 = vadd.f32 %v3262, %v3965
        %3967 = vmatprep.mubr.bf16.mxu0 %v3118
        %3968 = vmatmul.mubr.bf16.gmra.mrb[0].mxu0 %v3117
        %v3969 = vpop.f32.mrb[0].mxu0
        %v3970 = vadd.f32 %v3258, %v3969
        %v3971 = vpop.f32.mrb[0].mxu0
        %v3972 = vadd.f32 %v3262, %v3971
        %v3973 = vpop.f32.mrb[0].mxu0
        %v3974 = vadd.f32 %v3258, %v3973
        %v3975 = vpop.f32.mrb[0].mxu0
        %v3976 = vadd.f32 %v3262, %v3975
        %3977 = vdwg.mxu0
        %3978 = vmatprep.subr.bf16.mxu0 %v3682
        %3979 = vmatpush1.bf16.msra.mxu0 %v3681
        %3980 = vmatprep.subr.bf16.mxu0 %v3684
        %3981 = vmatpush1.bf16.msra.mxu0 %v3683
        %3982 = vmatprep.subr.bf16.mxu0 %v3686
        %3983 = vmatpush1.bf16.msra.mxu0 %v3685
        %3984 = vmatprep.subr.bf16.mxu0 %v3688
        %3985 = vmatpush1.bf16.msra.mxu0 %v3687
        %3986 = vmatprep.subr.bf16.mxu0 %v3690
        %3987 = vmatpush1.bf16.msra.mxu0 %v3689
        %3988 = vmatprep.subr.bf16.mxu0 %v3692
        %3989 = vmatpush1.bf16.msra.mxu0 %v3691
        %3990 = vmatprep.subr.bf16.mxu0 %v3694
        %3991 = vmatpush1.bf16.msra.mxu0 %v3693
        %3992 = vmatprep.subr.bf16.mxu0 %v3696
        %3993 = vmatpush1.bf16.msra.mxu0 %v3695
        %3994 = vmatprep.subr.bf16.mxu0 %v3698
        %3995 = vmatpush1.bf16.msra.mxu0 %v3697
        %3996 = vmatprep.subr.bf16.mxu0 %v3700
        %3997 = vmatpush1.bf16.msra.mxu0 %v3699
        %3998 = vmatprep.subr.bf16.mxu0 %v3702
        %3999 = vmatpush1.bf16.msra.mxu0 %v3701
        %4000 = vmatprep.subr.bf16.mxu0 %v3704
        %4001 = vmatpush1.bf16.msra.mxu0 %v3703
        %4002 = vmatprep.subr.bf16.mxu0 %v3706
        %4003 = vmatpush1.bf16.msra.mxu0 %v3705
        %4004 = vmatprep.subr.bf16.mxu0 %v3708
        %4005 = vmatpush1.bf16.msra.mxu0 %v3707
        %4006 = vmatprep.subr.bf16.mxu0 %v3710
        %4007 = vmatpush1.bf16.msra.mxu0 %v3709
        %4008 = vmatprep.subr.bf16.mxu0 %v3712
        %4009 = vmatpush1.bf16.msra.mxu0 %v3711
        %4010 = vmatprep.mubr.bf16.mxu0 %v3096
        %4011 = vmatmul.mubr.bf16.gmra.mrb[0].mxu0 %v3095
        %v4012 = vpop.f32.mrb[0].mxu0
        %v4013 = vadd.f32 %v3940, %v4012
        %v4014 = vpop.f32.mrb[0].mxu0
        %v4015 = vadd.f32 %v3942, %v4014
        %v4016 = vpop.f32.mrb[0].mxu0
        %v4017 = vadd.f32 %v3944, %v4016
        %v4018 = vpop.f32.mrb[0].mxu0
        %v4019 = vadd.f32 %v3946, %v4018
        %4020 = vmatprep.mubr.bf16.mxu0 %v3104
        %4021 = vmatmul.mubr.bf16.gmra.mrb[0].mxu0 %v3103
        %v4022 = vpop.f32.mrb[0].mxu0
        %v4023 = vadd.f32 %v3950, %v4022
        %v4024 = vpop.f32.mrb[0].mxu0
        %v4025 = vadd.f32 %v3952, %v4024
        %v4026 = vpop.f32.mrb[0].mxu0
        %v4027 = vadd.f32 %v3954, %v4026
        %v4028 = vpop.f32.mrb[0].mxu0
        %v4029 = vadd.f32 %v3956, %v4028
        %4030 = vmatprep.mubr.bf16.mxu0 %v3112
        %4031 = vmatmul.mubr.bf16.gmra.mrb[0].mxu0 %v3111
        %v4032 = vpop.f32.mrb[0].mxu0
        %v4033 = vadd.f32 %v3960, %v4032
        %v4034 = vpop.f32.mrb[0].mxu0
        %v4035 = vadd.f32 %v3962, %v4034
        %v4036 = vpop.f32.mrb[0].mxu0
        %v4037 = vadd.f32 %v3964, %v4036
        %v4038 = vpop.f32.mrb[0].mxu0
        %v4039 = vadd.f32 %v3966, %v4038
        %4040 = vmatprep.mubr.bf16.mxu0 %v3120
        %4041 = vmatmul.mubr.bf16.gmra.mrb[0].mxu0 %v3119
        %v4042 = vpop.f32.mrb[0].mxu0
        %v4043 = vadd.f32 %v3970, %v4042
        %v4044 = vpop.f32.mrb[0].mxu0
        %v4045 = vadd.f32 %v3972, %v4044
        %v4046 = vpop.f32.mrb[0].mxu0
        %v4047 = vadd.f32 %v3974, %v4046
        %v4048 = vpop.f32.mrb[0].mxu0
        %v4049 = vadd.f32 %v3976, %v4048
        %4050 = vdwg.mxu0
        %4051 = vmatprep.subr.bf16.mxu0 %v3714
        %4052 = vmatpush1.bf16.msra.mxu0 %v3713
        %4053 = vmatprep.subr.bf16.mxu0 %v3716
        %4054 = vmatpush1.bf16.msra.mxu0 %v3715
        %4055 = vmatprep.subr.bf16.mxu0 %v3718
        %4056 = vmatpush1.bf16.msra.mxu0 %v3717
        %4057 = vmatprep.subr.bf16.mxu0 %v3720
        %4058 = vmatpush1.bf16.msra.mxu0 %v3719
        %4059 = vmatprep.subr.bf16.mxu0 %v3722
        %4060 = vmatpush1.bf16.msra.mxu0 %v3721
        %4061 = vmatprep.subr.bf16.mxu0 %v3724
        %4062 = vmatpush1.bf16.msra.mxu0 %v3723
        %4063 = vmatprep.subr.bf16.mxu0 %v3726
        %4064 = vmatpush1.bf16.msra.mxu0 %v3725
        %4065 = vmatprep.subr.bf16.mxu0 %v3728
        %4066 = vmatpush1.bf16.msra.mxu0 %v3727
        %4067 = vmatprep.subr.bf16.mxu0 %v3730
        %4068 = vmatpush1.bf16.msra.mxu0 %v3729
        %4069 = vmatprep.subr.bf16.mxu0 %v3732
        %4070 = vmatpush1.bf16.msra.mxu0 %v3731
        %4071 = vmatprep.subr.bf16.mxu0 %v3734
        %4072 = vmatpush1.bf16.msra.mxu0 %v3733
        %4073 = vmatprep.subr.bf16.mxu0 %v3736
        %4074 = vmatpush1.bf16.msra.mxu0 %v3735
        %4075 = vmatprep.subr.bf16.mxu0 %v3738
        %4076 = vmatpush1.bf16.msra.mxu0 %v3737
        %4077 = vmatprep.subr.bf16.mxu0 %v3740
        %4078 = vmatpush1.bf16.msra.mxu0 %v3739
        %4079 = vmatprep.subr.bf16.mxu0 %v3742
        %4080 = vmatpush1.bf16.msra.mxu0 %v3741
        %4081 = vmatprep.subr.bf16.mxu0 %v3744
        %4082 = vmatpush1.bf16.msra.mxu0 %v3743
        %4083 = vmatprep.mubr.bf16.mxu0 %v3098
        %4084 = vmatmul.mubr.bf16.gmra.mrb[0].mxu0 %v3097
        %v4085 = vpop.f32.mrb[0].mxu0
        %v4086 = vadd.f32 %v4013, %v4085
        %v4087 = vpop.f32.mrb[0].mxu0
        %v4088 = vadd.f32 %v4015, %v4087
        %v4089 = vpop.f32.mrb[0].mxu0
        %v4090 = vadd.f32 %v4017, %v4089
        %v4091 = vpop.f32.mrb[0].mxu0
        %v4092 = vadd.f32 %v4019, %v4091
        %4093 = vmatprep.mubr.bf16.mxu0 %v3106
        %4094 = vmatmul.mubr.bf16.gmra.mrb[0].mxu0 %v3105
        %v4095 = vpop.f32.mrb[0].mxu0
        %v4096 = vadd.f32 %v4023, %v4095
        %v4097 = vpop.f32.mrb[0].mxu0
        %v4098 = vadd.f32 %v4025, %v4097
        %v4099 = vpop.f32.mrb[0].mxu0
        %v4100 = vadd.f32 %v4027, %v4099
        %v4101 = vpop.f32.mrb[0].mxu0
        %v4102 = vadd.f32 %v4029, %v4101
        %4103 = vmatprep.mubr.bf16.mxu0 %v3114
        %4104 = vmatmul.mubr.bf16.gmra.mrb[0].mxu0 %v3113
        %v4105 = vpop.f32.mrb[0].mxu0
        %v4106 = vadd.f32 %v4033, %v4105
        %v4107 = vpop.f32.mrb[0].mxu0
        %v4108 = vadd.f32 %v4035, %v4107
        %v4109 = vpop.f32.mrb[0].mxu0
        %v4110 = vadd.f32 %v4037, %v4109
        %v4111 = vpop.f32.mrb[0].mxu0
        %v4112 = vadd.f32 %v4039, %v4111
        %4113 = vmatprep.mubr.bf16.mxu0 %v3122
        %4114 = vmatmul.mubr.bf16.gmra.mrb[0].mxu0 %v3121
        %v4115 = vpop.f32.mrb[0].mxu0
        %v4116 = vadd.f32 %v4043, %v4115
        %v4117 = vpop.f32.mrb[0].mxu0
        %v4118 = vadd.f32 %v4045, %v4117
        %v4119 = vpop.f32.mrb[0].mxu0
        %v4120 = vadd.f32 %v4047, %v4119
        %v4121 = vpop.f32.mrb[0].mxu0
        %v4122 = vadd.f32 %v4049, %v4121
        %4123 = vdwg.mxu0
        %4124 = vmatprep.subr.bf16.mxu0 %v3746
        %4125 = vmatpush1.bf16.msra.mxu0 %v3745
        %4126 = vmatprep.subr.bf16.mxu0 %v3748
        %4127 = vmatpush1.bf16.msra.mxu0 %v3747
        %4128 = vmatprep.subr.bf16.mxu0 %v3750
        %4129 = vmatpush1.bf16.msra.mxu0 %v3749
        %4130 = vmatprep.subr.bf16.mxu0 %v3752
        %4131 = vmatpush1.bf16.msra.mxu0 %v3751
        %4132 = vmatprep.subr.bf16.mxu0 %v3754
        %4133 = vmatpush1.bf16.msra.mxu0 %v3753
        %4134 = vmatprep.subr.bf16.mxu0 %v3756
        %4135 = vmatpush1.bf16.msra.mxu0 %v3755
        %4136 = vmatprep.subr.bf16.mxu0 %v3758
        %4137 = vmatpush1.bf16.msra.mxu0 %v3757
        %4138 = vmatprep.subr.bf16.mxu0 %v3760
        %4139 = vmatpush1.bf16.msra.mxu0 %v3759
        %4140 = vmatprep.subr.bf16.mxu0 %v3762
        %4141 = vmatpush1.bf16.msra.mxu0 %v3761
        %4142 = vmatprep.subr.bf16.mxu0 %v3764
        %4143 = vmatpush1.bf16.msra.mxu0 %v3763
        %4144 = vmatprep.subr.bf16.mxu0 %v3766
        %4145 = vmatpush1.bf16.msra.mxu0 %v3765
        %4146 = vmatprep.subr.bf16.mxu0 %v3768
        %4147 = vmatpush1.bf16.msra.mxu0 %v3767
        %4148 = vmatprep.subr.bf16.mxu0 %v3770
        %4149 = vmatpush1.bf16.msra.mxu0 %v3769
        %4150 = vmatprep.subr.bf16.mxu0 %v3772
        %4151 = vmatpush1.bf16.msra.mxu0 %v3771
        %4152 = vmatprep.subr.bf16.mxu0 %v3774
        %4153 = vmatpush1.bf16.msra.mxu0 %v3773
        %4154 = vmatprep.subr.bf16.mxu0 %v3776
        %4155 = vmatpush1.bf16.msra.mxu0 %v3775
        %4156 = vmatprep.mubr.bf16.mxu0 %v3100
        %4157 = vmatmul.mubr.bf16.gmra.mrb[0].mxu0 %v3099
        %v4158 = vpop.f32.mrb[0].mxu0
        %v4159 = vadd.f32 %v4086, %v4158
        %v4160 = vpop.f32.mrb[0].mxu0
        %v4161 = vadd.f32 %v4088, %v4160
        %v4162 = vpop.f32.mrb[0].mxu0
        %v4163 = vadd.f32 %v4090, %v4162
        %v4164 = vpop.f32.mrb[0].mxu0
        %v4165 = vadd.f32 %v4092, %v4164
        %4166 = vmatprep.mubr.bf16.mxu0 %v3108
        %4167 = vmatmul.mubr.bf16.gmra.mrb[0].mxu0 %v3107
        %v4168 = vpop.f32.mrb[0].mxu0
        %v4169 = vadd.f32 %v4096, %v4168
        %v4170 = vpop.f32.mrb[0].mxu0
        %v4171 = vadd.f32 %v4098, %v4170
        %v4172 = vpop.f32.mrb[0].mxu0
        %v4173 = vadd.f32 %v4100, %v4172
        %v4174 = vpop.f32.mrb[0].mxu0
        %v4175 = vadd.f32 %v4102, %v4174
        %4176 = vmatprep.mubr.bf16.mxu0 %v3116
        %4177 = vmatmul.mubr.bf16.gmra.mrb[0].mxu0 %v3115
        %v4178 = vpop.f32.mrb[0].mxu0
        %v4179 = vadd.f32 %v4106, %v4178
        %v4180 = vpop.f32.mrb[0].mxu0
        %v4181 = vadd.f32 %v4108, %v4180
        %v4182 = vpop.f32.mrb[0].mxu0
        %v4183 = vadd.f32 %v4110, %v4182
        %v4184 = vpop.f32.mrb[0].mxu0
        %v4185 = vadd.f32 %v4112, %v4184
        %4186 = vmatprep.mubr.bf16.mxu0 %v3124
        %4187 = vmatmul.mubr.bf16.gmra.mrb[0].mxu0 %v3123
        %v4188 = vpop.f32.mrb[0].mxu0
        %v4189 = vadd.f32 %v4116, %v4188
        %v4190 = vpop.f32.mrb[0].mxu0
        %v4191 = vadd.f32 %v4118, %v4190
        %v4192 = vpop.f32.mrb[0].mxu0
        %v4193 = vadd.f32 %v4120, %v4192
        %v4194 = vpop.f32.mrb[0].mxu0
        %v4195 = vadd.f32 %v4122, %v4194
        %4196 = vdwg.mxu0
        %v4197 = vadd.f32 %v545, %v4159
        %v4198 = vadd.f32 %v546, %v4161
        %v4199 = vadd.f32 %v547, %v4163
        %v4200 = vadd.f32 %v548, %v4165
        %v4201 = vadd.f32 %v549, %v4169
        %v4202 = vadd.f32 %v550, %v4171
        %v4203 = vadd.f32 %v551, %v4173
        %v4204 = vadd.f32 %v552, %v4175
        %v4205 = vadd.f32 %v553, %v4179
        %v4206 = vadd.f32 %v554, %v4181
        %v4207 = vadd.f32 %v555, %v4183
        %v4208 = vadd.f32 %v556, %v4185
        %v4209 = vadd.f32 %v557, %v4189
        %v4210 = vadd.f32 %v558, %v4191
        %v4211 = vadd.f32 %v559, %v4193
        %v4212 = vadd.f32 %v560, %v4195
        %4213 = vst [vmem:[%s543] sm:$0xff] %v4197
        %4214 = vst [vmem:[%s543 + $0x8] sm:$0xff] %v4198
        %4215 = vst [vmem:[%s543 + $0x10] sm:$0xff] %v4199
        %4216 = vst [vmem:[%s543 + $0x18] sm:$0xff] %v4200
        %4217 = vst [vmem:[%s543 + $0x20] sm:$0xff] %v4201
        %4218 = vst [vmem:[%s543 + $0x28] sm:$0xff] %v4202
        %4219 = vst [vmem:[%s543 + $0x30] sm:$0xff] %v4203
        %4220 = vst [vmem:[%s543 + $0x38] sm:$0xff] %v4204
        %4221 = vst [vmem:[%s543 + $0x40] sm:$0xff] %v4205
        %4222 = vst [vmem:[%s543 + $0x48] sm:$0xff] %v4206
        %4223 = vst [vmem:[%s543 + $0x50] sm:$0xff] %v4207
        %4224 = vst [vmem:[%s543 + $0x58] sm:$0xff] %v4208
        %4225 = vst [vmem:[%s543 + $0x60] sm:$0xff] %v4209
        %4226 = vst [vmem:[%s543 + $0x68] sm:$0xff] %v4210
        %4227 = vst [vmem:[%s543 + $0x70] sm:$0xff] %v4211
        %4228 = vst [vmem:[%s543 + $0x78] sm:$0xff] %v4212
        %s4229 = sand.u32 %s340, 1
        %s4230 = scalar_lea.sflag [#allocation4], %s4229
        %s4231 = sand.u32 %s340, 1
        %s4232 = smul.addr %s4231, 128
        %s4233 = scalar_lea.vmem [#allocation11], %s4232
        // Predicated region
        $region97: #{tpu_custom_call.1} parent=75 // pred_check
          %p4234 = pneg %p350
        $region98: #{tpu_custom_call.1} parent=75 // pred_check_branch
          %4236 = sbr.rel (%p4234) target = $region100
        $region99: #{tpu_custom_call.1} parent=75 // pred_region
          %s4238 = ssub.s32 2048, 2048
          %4239 = vsyncadd %s4230, %s4238
          %s4240 = smul.addr %s33, 16
          %s4241 = smul.addr %s4240, 128
          %s4242 = scalar_lea.hbm %s14, %s4241
          %s4243 = sshll.u32 %s4233, 4
          %s4244 = int_to_ptr.vmem [resolvable:$true] %s4243
          %4249 = dma.vmem_to_hbm [thread:$0]  %s4244, 2048, %s4242, %s4230, 256, 256, 16
        $region100: #{tpu_custom_call.1} parent=75 // pred_fallthru
          _
      $region76: #{tpu_custom_call.1} parent=5 // pred_fallthru
        _
      %p4250 = scmp.le.s32.totalorder 2, %s28
      // Predicated region
      $region101: #{tpu_custom_call.1} parent=5 // pred_check
        %p4251 = pneg %p4250
      $region102: #{tpu_custom_call.1} parent=5 // pred_check_branch
        %4253 = sbr.rel (%p4251) target = $region104
      $region103: #{tpu_custom_call.1} parent=5 // pred_region
        %s4254 = ssub.s32 %s28, 2
        // Predicated region
        $region105: #{tpu_custom_call.1} parent=103 // pred_check
          %p4255 = pneg %p356
        $region106: #{tpu_custom_call.1} parent=103 // pred_check_branch
          %4257 = sbr.rel (%p4255) target = $region108
        $region107: #{tpu_custom_call.1} parent=103 // pred_region
          %s4258 = sand.u32 %s341, 1
          %s4259 = scalar_lea.sflag [#allocation4], %s4258
          %s4260 = sand.u32 %s341, 1
          %s4261 = smul.addr %s4260, 128
          %s4262 = scalar_lea.vmem [#allocation11], %s4261
          %4263 = dma.done %s4259, 2048
        $region108: #{tpu_custom_call.1} parent=103 // pred_fallthru
          _
      $region104: #{tpu_custom_call.1} parent=5 // pred_fallthru
        _
    $region6: #{tpu_custom_call.1} parent=1 // loop_footer
      %s32 = sadd.s32 1, %s28
    $region7: #{tpu_custom_call.1} parent=1 // loop_footer_branch
      %27 = sbr.rel target = $region3
    $region8: #{tpu_custom_call.1} parent=1 // loop_exit
      _
    %4264 = vsyncpa [#allocation3], 1
    %s4265 = scalar_lea.sflag [#allocation3], 1
    %4266 = vsyncpa %s4265, 1
    %4267 = vsyncpa [#allocation6], 1
    %4268 = vsyncpa [#allocation9], 1
    %4269 = vsyncpa [#allocation4], 1
    %s4270 = scalar_lea.sflag [#allocation4], 1
    %4271 = vsyncpa %s4270, 1

</llo_original>
